<compile_context>
chip_gen: v5e
topology: v5e:2x2
jax: 0.10.0
libtpu: 0.0.40
codegen_flags: <defaults>
</compile_context>

<pallas_src>
import functools
import math

import jax
import jax.numpy as jnp
from jax import lax
from jax.experimental import pallas as pl
from jax.experimental.pallas import tpu as pltpu


_PAD = 16  # zero-pad rows around the token axis for the dwconv (needs >= W+1)


def _erf(x):
    # Abramowitz & Stegun 7.1.26 polynomial approximation (|err| < 1.5e-7),
    # built only from exp/abs/where so it lowers cleanly in Mosaic.
    # TODO(synk): switch to lax.erf if/when Mosaic lowers it natively.
    a1, a2, a3, a4, a5 = (0.254829592, -0.284496736, 1.421413741,
                          -1.453152027, 1.061405429)
    p = 0.3275911
    s = jnp.where(x >= 0, 1.0, -1.0)
    ax = jnp.abs(x)
    # Full-precision reciprocal kept: the GELU feeds the K=256 fc2, where the
    # approx-reciprocal error is the dominant term against the 2e-3 abs tol.
    t = 1.0 / (1.0 + p * ax)
    poly = ((((a5 * t + a4) * t + a3) * t + a2) * t + a1) * t
    return s * (1.0 - poly * jnp.exp(-ax * ax))


def _gelu_exact(x):
    # nn.GELU default is the exact (erf-based) GELU.
    return 0.5 * x * (1.0 + _erf(x * (1.0 / math.sqrt(2.0))))


def _layernorm(x, w, b, eps=1e-5):
    mu = jnp.mean(x, axis=-1, keepdims=True)
    xc = x - mu
    var = jnp.mean(xc * xc, axis=-1, keepdims=True)
    return xc * lax.rsqrt(var + eps) * w + b


def block_kernel(x_ref, qw_ref, kw_ref, vw_ref, pw_ref, f1w_ref, f2w_ref,
                 dww_ref, vc_ref, vh_ref, o_ref, pad_ref, *, num_heads, H, W):
    f32 = jnp.float32
    bf16 = jnp.bfloat16

    x = x_ref[0]                                      # (N, C) f32
    N, C = x.shape

    # packed small vectors
    n1w, n1b = vc_ref[0:1, :], vc_ref[1:2, :]
    n2w, n2b = vc_ref[2:3, :], vc_ref[3:4, :]
    proj_b, f2b = vc_ref[4:5, :], vc_ref[5:6, :]
    f1b, dwb = vh_ref[0:1, :], vh_ref[1:2, :]

    # ----- attention branch: x + proj(softmax(q k^T / sqrt(d)) v) -----------
    y = _layernorm(x, n1w, n1b)                       # f32
    y_bf = y.astype(bf16)

    attn = jnp.zeros((N, C), f32)
    for h in range(num_heads):
        # qw already carries the 1/sqrt(hd) softmax scale (folded in wrapper).
        qh = jnp.dot(y_bf, qw_ref[h], preferred_element_type=f32)   # (N, hd)
        kh = jnp.dot(y_bf, kw_ref[h], preferred_element_type=f32)
        vh = jnp.dot(y_bf, vw_ref[h], preferred_element_type=f32)
        # q_h @ k_h^T without an explicit transpose
        s = lax.dot_general(qh.astype(bf16), kh.astype(bf16),
                            (((1,), (1,)), ((), ())),
                            preferred_element_type=f32)             # (N, N)
        s = s - jnp.max(s, axis=-1, keepdims=True)
        p = jnp.exp(s)
        p = p * pl.reciprocal(jnp.sum(p, axis=-1, keepdims=True), approx=True)
        oh = jnp.dot(p.astype(bf16), vh.astype(bf16),
                     preferred_element_type=f32)                    # (N, hd)
        # fused output projection: acc += o_h @ proj_w[h*hd:(h+1)*hd, :]
        attn = attn + jnp.dot(oh.astype(bf16), pw_ref[h],
                              preferred_element_type=f32)           # (N, C)
    x1 = x + attn + proj_b

    # ----- mlp branch: x1 + fc2(gelu(dwconv3x3(fc1(norm2(x1))))) ------------
    y2 = _layernorm(x1, n2w, n2b)
    hdn = jnp.dot(y2.astype(bf16), f1w_ref[...],
                  preferred_element_type=f32) + f1b                 # (N, hid)
    hid = hdn.shape[1]

    # depthwise 3x3 conv with padding=1 on the H x W token grid:
    # write hdn once into a zero-padded scratch, read 9 static row views.
    # Pads are re-zeroed each grid step (scratch may be per-core on megacore).
    pad_ref[0:_PAD, :] = jnp.zeros((_PAD, hid), f32)
    pad_ref[_PAD + N:_PAD + N + _PAD, :] = jnp.zeros((_PAD, hid), f32)
    pad_ref[_PAD:_PAD + N, :] = hdn

    col = lax.broadcasted_iota(jnp.int32, (N, 1), 0) % W
    mask_l = (col >= 1).astype(f32)           # dj == -1: source col >= 0
    mask_r = (col <= W - 2).astype(f32)       # dj == +1: source col <  W

    dww = dww_ref[...]                        # (9, hid), kidx = (di+1)*3+(dj+1)
    acc = jnp.zeros((N, hid), f32)
    for di in (-1, 0, 1):
        for dj in (-1, 0, 1):
            kidx = (di + 1) * 3 + (dj + 1)
            start = _PAD + di * W + dj
            shifted = pad_ref[start:start + N, :]      # (N, hid) static view
            wrow = dww[kidx:kidx + 1, :]               # (1, hid)
            if dj == -1:
                wrow = mask_l * wrow                   # (N, hid)
            elif dj == 1:
                wrow = mask_r * wrow
            acc = acc + shifted * wrow
    conv = acc + dwb

    act = _gelu_exact(conv)
    out = jnp.dot(act.astype(bf16), f2w_ref[...],
                  preferred_element_type=f32) + f2b
    o_ref[0] = x1 + out


@functools.partial(jax.jit, static_argnames=("H", "W", "num_heads"))
def block_forward(x, params, H, W, num_heads):
    B, N, C = x.shape
    hd = C // num_heads
    hid = params["fc1_w"].shape[1]
    scale = hd ** -0.5
    bf16 = jnp.bfloat16

    # Free JAX-side layout plumbing (under jit): split kv, build per-head
    # weight tiles, fold the softmax scale into q, cast matmul weights to
    # bf16, pack the tiny bias / norm vectors.
    qw = (params["q_w"] * scale).reshape(C, num_heads, hd)
    qw = qw.transpose(1, 0, 2).astype(bf16)
    k_w = params["kv_w"][:, :C]
    v_w = params["kv_w"][:, C:]
    kw = k_w.reshape(C, num_heads, hd).transpose(1, 0, 2).astype(bf16)
    vw = v_w.reshape(C, num_heads, hd).transpose(1, 0, 2).astype(bf16)
    pw = params["proj_w"].reshape(num_heads, hd, C).astype(bf16)
    f1w = params["fc1_w"].astype(bf16)
    f2w = params["fc2_w"].astype(bf16)
    dww = params["dw_w9"].astype(jnp.float32)

    vec_c = jnp.concatenate([params["n1_w"], params["n1_b"],
                             params["n2_w"], params["n2_b"],
                             params["proj_b"], params["fc2_b"]],
                            axis=0).astype(jnp.float32)             # (6, C)
    vec_h = jnp.concatenate([params["fc1_b"], params["dw_b"]],
                            axis=0).astype(jnp.float32)             # (2, hid)

    def full(shape):
        nd = len(shape)
        return pl.BlockSpec(shape, lambda *_, nd=nd: (0,) * nd)

    kernel = functools.partial(block_kernel, num_heads=num_heads, H=H, W=W)
    return pl.pallas_call(
        kernel,
        out_shape=jax.ShapeDtypeStruct((B, N, C), x.dtype),
        grid=(B,),
        in_specs=[
            pl.BlockSpec((1, N, C), lambda b: (b, 0, 0)),   # x
            full(qw.shape), full(kw.shape), full(vw.shape), full(pw.shape),
            full(f1w.shape), full(f2w.shape), full(dww.shape),
            full(vec_c.shape), full(vec_h.shape),
        ],
        out_specs=pl.BlockSpec((1, N, C), lambda b: (b, 0, 0)),
        scratch_shapes=[pltpu.VMEM((N + 2 * _PAD, hid), jnp.float32)],
        compiler_params=pltpu.CompilerParams(
            dimension_semantics=("parallel",)),
    )(x, qw, kw, vw, pw, f1w, f2w, dww, vec_c, vec_h)


def block_ref(x, params, H, W, num_heads):
    # Pure-JAX reference (same math as the PyTorch module in eval mode, f32).
    B, N, C = x.shape
    hd = C // num_heads
    scale = hd ** -0.5

    def ln(z, w, b):
        mu = z.mean(-1, keepdims=True)
        var = ((z - mu) ** 2).mean(-1, keepdims=True)
        return (z - mu) / jnp.sqrt(var + 1e-5) * w + b

    y = ln(x, params["n1_w"][0], params["n1_b"][0])
    q = (y @ params["q_w"]).reshape(B, N, num_heads, hd).transpose(0, 2, 1, 3)
    kv = y @ params["kv_w"]
    k = kv[..., :C].reshape(B, N, num_heads, hd).transpose(0, 2, 1, 3)
    v = kv[..., C:].reshape(B, N, num_heads, hd).transpose(0, 2, 1, 3)
    attn = jnp.einsum("bhqd,bhkd->bhqk", q, k) * scale
    attn = jax.nn.softmax(attn, axis=-1)
    o = jnp.einsum("bhqk,bhkd->bhqd", attn, v).transpose(0, 2, 1, 3).reshape(B, N, C)
    o = o @ params["proj_w"] + params["proj_b"][0]
    x1 = x + o

    y2 = ln(x1, params["n2_w"][0], params["n2_b"][0])
    hdn = y2 @ params["fc1_w"] + params["fc1_b"][0]
    hid = hdn.shape[-1]
    img = hdn.reshape(B, H, W, hid)
    imgp = jnp.pad(img, ((0, 0), (1, 1), (1, 1), (0, 0)))
    w33 = params["dw_w9"].reshape(3, 3, hid)
    conv = jnp.zeros_like(img)
    for di in range(3):
        for dj in range(3):
            conv = conv + imgp[:, di:di + H, dj:dj + W, :] * w33[di, dj]
    conv = conv + params["dw_b"][0]
    act = jax.nn.gelu(conv, approximate=False)
    out = act.reshape(B, N, hid) @ params["fc2_w"] + params["fc2_b"][0]
    return x1 + out


if __name__ == "__main__":
    # Block(dim=64, num_heads=4, mlp_ratio=4.0, qkv_bias=False, sr_ratio=1,
    #       linear=False), eval mode.  Input tokens: H = W = 8 -> N = 64.
    B, H, W = 2, 8, 8
    N = H * W
    C = 64
    num_heads = 4
    hid = int(C * 4.0)

    f32 = jnp.float32
    key = jax.random.PRNGKey(0)
    ks = jax.random.split(key, 12)
    params = dict(
        n1_w=jnp.ones((1, C), f32),
        n1_b=jnp.zeros((1, C), f32),
        q_w=0.02 * jax.random.normal(ks[0], (C, C), f32),        # (in, out)
        kv_w=0.02 * jax.random.normal(ks[1], (C, 2 * C), f32),   # [k | v]
        proj_w=0.02 * jax.random.normal(ks[2], (C, C), f32),
        proj_b=0.01 * jax.random.normal(ks[3], (1, C), f32),
        n2_w=jnp.ones((1, C), f32),
        n2_b=jnp.zeros((1, C), f32),
        fc1_w=0.02 * jax.random.normal(ks[4], (C, hid), f32),
        fc1_b=0.01 * jax.random.normal(ks[5], (1, hid), f32),
        dw_w9=math.sqrt(2.0 / 9.0) * jax.random.normal(ks[6], (9, hid), f32),
        dw_b=0.01 * jax.random.normal(ks[7], (1, hid), f32),
        fc2_w=0.02 * jax.random.normal(ks[8], (hid, C), f32),
        fc2_b=0.01 * jax.random.normal(ks[9], (1, C), f32),
    )
    x = jax.random.normal(ks[10], (B, N, C), f32)

    out = block_forward(x, params, H, W, num_heads)
    out = jax.block_until_ready(out)

    ref = block_ref(x, params, H, W, num_heads)
    assert out.shape == (B, N, C)
    assert jnp.allclose(out, ref, atol=2e-3, rtol=2e-2), (
        "max abs err = %g" % float(jnp.max(jnp.abs(out - ref))))
    print("KERNEL_OK")
</pallas_src>

<mosaic_0001>
module attributes {stable_mosaic.version = 11 : i64} {
  func.func @block_kernel(%arg0: i32, %arg1: memref<1x64x64xf32, #tpu.memory_space<vmem>>, %arg2: memref<4x64x16xbf16, #tpu.memory_space<vmem>>, %arg3: memref<4x64x16xbf16, #tpu.memory_space<vmem>>, %arg4: memref<4x64x16xbf16, #tpu.memory_space<vmem>>, %arg5: memref<4x16x64xbf16, #tpu.memory_space<vmem>>, %arg6: memref<64x256xbf16, #tpu.memory_space<vmem>>, %arg7: memref<256x64xbf16, #tpu.memory_space<vmem>>, %arg8: memref<9x256xf32, #tpu.memory_space<vmem>>, %arg9: memref<6x64xf32, #tpu.memory_space<vmem>>, %arg10: memref<2x256xf32, #tpu.memory_space<vmem>>, %arg11: memref<1x64x64xf32, #tpu.memory_space<vmem>>, %arg12: memref<96x256xf32, #tpu.memory_space<vmem>>) attributes {dimension_semantics = [#tpu.dimension_semantics<parallel>], iteration_bounds = array<i64: 2>, scalar_prefetch = 0 : i64, scratch_operands = 1 : i64, tpu.core_type = #tpu.core_type<tc>, window_params = [{transform_indices = @transform_0, window_bounds = array<i64: 1, 64, 64>}, {pipeline_mode = #tpu.pipeline_mode<synchronous>, transform_indices = @transform_1, window_bounds = array<i64: 4, 64, 16>}, {pipeline_mode = #tpu.pipeline_mode<synchronous>, transform_indices = @transform_2, window_bounds = array<i64: 4, 64, 16>}, {pipeline_mode = #tpu.pipeline_mode<synchronous>, transform_indices = @transform_3, window_bounds = array<i64: 4, 64, 16>}, {pipeline_mode = #tpu.pipeline_mode<synchronous>, transform_indices = @transform_4, window_bounds = array<i64: 4, 16, 64>}, {pipeline_mode = #tpu.pipeline_mode<synchronous>, transform_indices = @transform_5, window_bounds = array<i64: 64, 256>}, {pipeline_mode = #tpu.pipeline_mode<synchronous>, transform_indices = @transform_6, window_bounds = array<i64: 256, 64>}, {pipeline_mode = #tpu.pipeline_mode<synchronous>, transform_indices = @transform_7, window_bounds = array<i64: 9, 256>}, {pipeline_mode = #tpu.pipeline_mode<synchronous>, transform_indices = @transform_8, window_bounds = array<i64: 6, 64>}, {pipeline_mode = #tpu.pipeline_mode<synchronous>, transform_indices = @transform_9, window_bounds = array<i64: 2, 256>}, {transform_indices = @transform_10, window_bounds = array<i64: 1, 64, 64>}]} {
    %c0 = arith.constant 0 : index
    %c0_0 = arith.constant 0 : index
    %c0_1 = arith.constant 0 : index
    %0 = vector.load %arg1[%c0, %c0_0, %c0_1] : memref<1x64x64xf32, #tpu.memory_space<vmem>>, vector<1x64x64xf32>
    %1 = vector.shape_cast %0 : vector<1x64x64xf32> to vector<64x64xf32>
    %c0_2 = arith.constant 0 : index
    %c0_3 = arith.constant 0 : index
    %2 = vector.load %arg9[%c0_2, %c0_3] : memref<6x64xf32, #tpu.memory_space<vmem>>, vector<1x64xf32>
    %c1 = arith.constant 1 : index
    %c0_4 = arith.constant 0 : index
    %3 = vector.load %arg9[%c1, %c0_4] : memref<6x64xf32, #tpu.memory_space<vmem>>, vector<1x64xf32>
    %c2 = arith.constant 2 : index
    %c0_5 = arith.constant 0 : index
    %4 = vector.load %arg9[%c2, %c0_5] : memref<6x64xf32, #tpu.memory_space<vmem>>, vector<1x64xf32>
    %c3 = arith.constant 3 : index
    %c0_6 = arith.constant 0 : index
    %5 = vector.load %arg9[%c3, %c0_6] : memref<6x64xf32, #tpu.memory_space<vmem>>, vector<1x64xf32>
    %c4 = arith.constant 4 : index
    %c0_7 = arith.constant 0 : index
    %6 = vector.load %arg9[%c4, %c0_7] : memref<6x64xf32, #tpu.memory_space<vmem>>, vector<1x64xf32>
    %c5 = arith.constant 5 : index
    %c0_8 = arith.constant 0 : index
    %7 = vector.load %arg9[%c5, %c0_8] : memref<6x64xf32, #tpu.memory_space<vmem>>, vector<1x64xf32>
    %c0_9 = arith.constant 0 : index
    %c0_10 = arith.constant 0 : index
    %8 = vector.load %arg10[%c0_9, %c0_10] : memref<2x256xf32, #tpu.memory_space<vmem>>, vector<1x256xf32>
    %c1_11 = arith.constant 1 : index
    %c0_12 = arith.constant 0 : index
    %9 = vector.load %arg10[%c1_11, %c0_12] : memref<2x256xf32, #tpu.memory_space<vmem>>, vector<1x256xf32>
    %cst = arith.constant dense<0.000000e+00> : vector<64xf32>
    %10 = vector.multi_reduction <add>, %1, %cst [1] : vector<64x64xf32> to vector<64xf32>
    %11 = vector.shape_cast %10 : vector<64xf32> to vector<64x1xf32>
    %cst_13 = arith.constant 6.400000e+01 : f32
    %12 = vector.broadcast %cst_13 : f32 to vector<64x1xf32>
    %13 = arith.divf %11, %12 : vector<64x1xf32>
    %14 = vector.broadcast %13 : vector<64x1xf32> to vector<64x64xf32>
    %15 = arith.subf %1, %14 : vector<64x64xf32>
    %16 = arith.mulf %15, %15 : vector<64x64xf32>
    %cst_14 = arith.constant dense<0.000000e+00> : vector<64xf32>
    %17 = vector.multi_reduction <add>, %16, %cst_14 [1] : vector<64x64xf32> to vector<64xf32>
    %18 = vector.shape_cast %17 : vector<64xf32> to vector<64x1xf32>
    %cst_15 = arith.constant 6.400000e+01 : f32
    %19 = vector.broadcast %cst_15 : f32 to vector<64x1xf32>
    %20 = arith.divf %18, %19 : vector<64x1xf32>
    %cst_16 = arith.constant 9.99999974E-6 : f32
    %21 = vector.broadcast %cst_16 : f32 to vector<64x1xf32>
    %22 = arith.addf %20, %21 : vector<64x1xf32>
    %23 = math.rsqrt %22 : vector<64x1xf32>
    %24 = vector.broadcast %23 : vector<64x1xf32> to vector<64x64xf32>
    %25 = arith.mulf %15, %24 : vector<64x64xf32>
    %26 = vector.broadcast %2 : vector<1x64xf32> to vector<64x64xf32>
    %27 = arith.mulf %25, %26 : vector<64x64xf32>
    %28 = vector.broadcast %3 : vector<1x64xf32> to vector<64x64xf32>
    %29 = arith.addf %27, %28 : vector<64x64xf32>
    %30 = arith.truncf %29 : vector<64x64xf32> to vector<64x64xbf16>
    %cst_17 = arith.constant 0.000000e+00 : f32
    %31 = vector.broadcast %cst_17 : f32 to vector<64x64xf32>
    %c0_18 = arith.constant 0 : index
    %c0_19 = arith.constant 0 : index
    %c0_20 = arith.constant 0 : index
    %32 = vector.load %arg2[%c0_18, %c0_19, %c0_20] : memref<4x64x16xbf16, #tpu.memory_space<vmem>>, vector<1x64x16xbf16>
    %33 = vector.shape_cast %32 : vector<1x64x16xbf16> to vector<64x16xbf16>
    %cst_21 = arith.constant dense<0.000000e+00> : vector<64x16xf32>
    %34 = tpu.matmul %30, %33, %cst_21 {dimension_numbers = #tpu.dot_dimension_numbers<[1], [0], [0], [1], [0, 0, 1, 1], [], []>} : vector<64x64xbf16>, vector<64x16xbf16>, vector<64x16xf32> -> vector<64x16xf32>
    %c0_22 = arith.constant 0 : index
    %c0_23 = arith.constant 0 : index
    %c0_24 = arith.constant 0 : index
    %35 = vector.load %arg3[%c0_22, %c0_23, %c0_24] : memref<4x64x16xbf16, #tpu.memory_space<vmem>>, vector<1x64x16xbf16>
    %36 = vector.shape_cast %35 : vector<1x64x16xbf16> to vector<64x16xbf16>
    %cst_25 = arith.constant dense<0.000000e+00> : vector<64x16xf32>
    %37 = tpu.matmul %30, %36, %cst_25 {dimension_numbers = #tpu.dot_dimension_numbers<[1], [0], [0], [1], [0, 0, 1, 1], [], []>} : vector<64x64xbf16>, vector<64x16xbf16>, vector<64x16xf32> -> vector<64x16xf32>
    %c0_26 = arith.constant 0 : index
    %c0_27 = arith.constant 0 : index
    %c0_28 = arith.constant 0 : index
    %38 = vector.load %arg4[%c0_26, %c0_27, %c0_28] : memref<4x64x16xbf16, #tpu.memory_space<vmem>>, vector<1x64x16xbf16>
    %39 = vector.shape_cast %38 : vector<1x64x16xbf16> to vector<64x16xbf16>
    %cst_29 = arith.constant dense<0.000000e+00> : vector<64x16xf32>
    %40 = tpu.matmul %30, %39, %cst_29 {dimension_numbers = #tpu.dot_dimension_numbers<[1], [0], [0], [1], [0, 0, 1, 1], [], []>} : vector<64x64xbf16>, vector<64x16xbf16>, vector<64x16xf32> -> vector<64x16xf32>
    %41 = arith.truncf %34 : vector<64x16xf32> to vector<64x16xbf16>
    %42 = arith.truncf %37 : vector<64x16xf32> to vector<64x16xbf16>
    %cst_30 = arith.constant dense<0.000000e+00> : vector<64x64xf32>
    %43 = tpu.matmul %41, %42, %cst_30 {dimension_numbers = #tpu.dot_dimension_numbers<[1], [1], [0], [0], [0, 0, 1, 0], [], []>} : vector<64x16xbf16>, vector<64x16xbf16>, vector<64x64xf32> -> vector<64x64xf32>
    %cst_31 = arith.constant dense<0xFF800000> : vector<64xf32>
    %44 = vector.multi_reduction <maximumf>, %43, %cst_31 [1] : vector<64x64xf32> to vector<64xf32>
    %45 = vector.shape_cast %44 : vector<64xf32> to vector<64x1xf32>
    %46 = vector.broadcast %45 : vector<64x1xf32> to vector<64x64xf32>
    %47 = arith.subf %43, %46 : vector<64x64xf32>
    %48 = math.exp %47 : vector<64x64xf32>
    %cst_32 = arith.constant dense<0.000000e+00> : vector<64xf32>
    %49 = vector.multi_reduction <add>, %48, %cst_32 [1] : vector<64x64xf32> to vector<64xf32>
    %50 = vector.shape_cast %49 : vector<64xf32> to vector<64x1xf32>
    %51 = tpu.reciprocal %50 {approx = true} : vector<64x1xf32> -> vector<64x1xf32>
    %52 = vector.broadcast %51 : vector<64x1xf32> to vector<64x64xf32>
    %53 = arith.mulf %48, %52 : vector<64x64xf32>
    %54 = arith.truncf %53 : vector<64x64xf32> to vector<64x64xbf16>
    %55 = arith.truncf %40 : vector<64x16xf32> to vector<64x16xbf16>
    %cst_33 = arith.constant dense<0.000000e+00> : vector<64x16xf32>
    %56 = tpu.matmul %54, %55, %cst_33 {dimension_numbers = #tpu.dot_dimension_numbers<[1], [0], [0], [1], [0, 0, 1, 1], [], []>} : vector<64x64xbf16>, vector<64x16xbf16>, vector<64x16xf32> -> vector<64x16xf32>
    %57 = arith.truncf %56 : vector<64x16xf32> to vector<64x16xbf16>
    %c0_34 = arith.constant 0 : index
    %c0_35 = arith.constant 0 : index
    %c0_36 = arith.constant 0 : index
    %58 = vector.load %arg5[%c0_34, %c0_35, %c0_36] : memref<4x16x64xbf16, #tpu.memory_space<vmem>>, vector<1x16x64xbf16>
    %59 = vector.shape_cast %58 : vector<1x16x64xbf16> to vector<16x64xbf16>
    %cst_37 = arith.constant dense<0.000000e+00> : vector<64x64xf32>
    %60 = tpu.matmul %57, %59, %cst_37 {dimension_numbers = #tpu.dot_dimension_numbers<[1], [0], [0], [1], [0, 0, 1, 1], [], []>} : vector<64x16xbf16>, vector<16x64xbf16>, vector<64x64xf32> -> vector<64x64xf32>
    %61 = arith.addf %31, %60 : vector<64x64xf32>
    %c1_38 = arith.constant 1 : index
    %c0_39 = arith.constant 0 : index
    %c0_40 = arith.constant 0 : index
    %62 = vector.load %arg2[%c1_38, %c0_39, %c0_40] : memref<4x64x16xbf16, #tpu.memory_space<vmem>>, vector<1x64x16xbf16>
    %63 = vector.shape_cast %62 : vector<1x64x16xbf16> to vector<64x16xbf16>
    %cst_41 = arith.constant dense<0.000000e+00> : vector<64x16xf32>
    %64 = tpu.matmul %30, %63, %cst_41 {dimension_numbers = #tpu.dot_dimension_numbers<[1], [0], [0], [1], [0, 0, 1, 1], [], []>} : vector<64x64xbf16>, vector<64x16xbf16>, vector<64x16xf32> -> vector<64x16xf32>
    %c1_42 = arith.constant 1 : index
    %c0_43 = arith.constant 0 : index
    %c0_44 = arith.constant 0 : index
    %65 = vector.load %arg3[%c1_42, %c0_43, %c0_44] : memref<4x64x16xbf16, #tpu.memory_space<vmem>>, vector<1x64x16xbf16>
    %66 = vector.shape_cast %65 : vector<1x64x16xbf16> to vector<64x16xbf16>
    %cst_45 = arith.constant dense<0.000000e+00> : vector<64x16xf32>
    %67 = tpu.matmul %30, %66, %cst_45 {dimension_numbers = #tpu.dot_dimension_numbers<[1], [0], [0], [1], [0, 0, 1, 1], [], []>} : vector<64x64xbf16>, vector<64x16xbf16>, vector<64x16xf32> -> vector<64x16xf32>
    %c1_46 = arith.constant 1 : index
    %c0_47 = arith.constant 0 : index
    %c0_48 = arith.constant 0 : index
    %68 = vector.load %arg4[%c1_46, %c0_47, %c0_48] : memref<4x64x16xbf16, #tpu.memory_space<vmem>>, vector<1x64x16xbf16>
    %69 = vector.shape_cast %68 : vector<1x64x16xbf16> to vector<64x16xbf16>
    %cst_49 = arith.constant dense<0.000000e+00> : vector<64x16xf32>
    %70 = tpu.matmul %30, %69, %cst_49 {dimension_numbers = #tpu.dot_dimension_numbers<[1], [0], [0], [1], [0, 0, 1, 1], [], []>} : vector<64x64xbf16>, vector<64x16xbf16>, vector<64x16xf32> -> vector<64x16xf32>
    %71 = arith.truncf %64 : vector<64x16xf32> to vector<64x16xbf16>
    %72 = arith.truncf %67 : vector<64x16xf32> to vector<64x16xbf16>
    %cst_50 = arith.constant dense<0.000000e+00> : vector<64x64xf32>
    %73 = tpu.matmul %71, %72, %cst_50 {dimension_numbers = #tpu.dot_dimension_numbers<[1], [1], [0], [0], [0, 0, 1, 0], [], []>} : vector<64x16xbf16>, vector<64x16xbf16>, vector<64x64xf32> -> vector<64x64xf32>
    %cst_51 = arith.constant dense<0xFF800000> : vector<64xf32>
    %74 = vector.multi_reduction <maximumf>, %73, %cst_51 [1] : vector<64x64xf32> to vector<64xf32>
    %75 = vector.shape_cast %74 : vector<64xf32> to vector<64x1xf32>
    %76 = vector.broadcast %75 : vector<64x1xf32> to vector<64x64xf32>
    %77 = arith.subf %73, %76 : vector<64x64xf32>
    %78 = math.exp %77 : vector<64x64xf32>
    %cst_52 = arith.constant dense<0.000000e+00> : vector<64xf32>
    %79 = vector.multi_reduction <add>, %78, %cst_52 [1] : vector<64x64xf32> to vector<64xf32>
    %80 = vector.shape_cast %79 : vector<64xf32> to vector<64x1xf32>
    %81 = tpu.reciprocal %80 {approx = true} : vector<64x1xf32> -> vector<64x1xf32>
    %82 = vector.broadcast %81 : vector<64x1xf32> to vector<64x64xf32>
    %83 = arith.mulf %78, %82 : vector<64x64xf32>
    %84 = arith.truncf %83 : vector<64x64xf32> to vector<64x64xbf16>
    %85 = arith.truncf %70 : vector<64x16xf32> to vector<64x16xbf16>
    %cst_53 = arith.constant dense<0.000000e+00> : vector<64x16xf32>
    %86 = tpu.matmul %84, %85, %cst_53 {dimension_numbers = #tpu.dot_dimension_numbers<[1], [0], [0], [1], [0, 0, 1, 1], [], []>} : vector<64x64xbf16>, vector<64x16xbf16>, vector<64x16xf32> -> vector<64x16xf32>
    %87 = arith.truncf %86 : vector<64x16xf32> to vector<64x16xbf16>
    %c1_54 = arith.constant 1 : index
    %c0_55 = arith.constant 0 : index
    %c0_56 = arith.constant 0 : index
    %88 = vector.load %arg5[%c1_54, %c0_55, %c0_56] : memref<4x16x64xbf16, #tpu.memory_space<vmem>>, vector<1x16x64xbf16>
    %89 = vector.shape_cast %88 : vector<1x16x64xbf16> to vector<16x64xbf16>
    %cst_57 = arith.constant dense<0.000000e+00> : vector<64x64xf32>
    %90 = tpu.matmul %87, %89, %cst_57 {dimension_numbers = #tpu.dot_dimension_numbers<[1], [0], [0], [1], [0, 0, 1, 1], [], []>} : vector<64x16xbf16>, vector<16x64xbf16>, vector<64x64xf32> -> vector<64x64xf32>
    %91 = arith.addf %61, %90 : vector<64x64xf32>
    %c2_58 = arith.constant 2 : index
    %c0_59 = arith.constant 0 : index
    %c0_60 = arith.constant 0 : index
    %92 = vector.load %arg2[%c2_58, %c0_59, %c0_60] : memref<4x64x16xbf16, #tpu.memory_space<vmem>>, vector<1x64x16xbf16>
    %93 = vector.shape_cast %92 : vector<1x64x16xbf16> to vector<64x16xbf16>
    %cst_61 = arith.constant dense<0.000000e+00> : vector<64x16xf32>
    %94 = tpu.matmul %30, %93, %cst_61 {dimension_numbers = #tpu.dot_dimension_numbers<[1], [0], [0], [1], [0, 0, 1, 1], [], []>} : vector<64x64xbf16>, vector<64x16xbf16>, vector<64x16xf32> -> vector<64x16xf32>
    %c2_62 = arith.constant 2 : index
    %c0_63 = arith.constant 0 : index
    %c0_64 = arith.constant 0 : index
    %95 = vector.load %arg3[%c2_62, %c0_63, %c0_64] : memref<4x64x16xbf16, #tpu.memory_space<vmem>>, vector<1x64x16xbf16>
    %96 = vector.shape_cast %95 : vector<1x64x16xbf16> to vector<64x16xbf16>
    %cst_65 = arith.constant dense<0.000000e+00> : vector<64x16xf32>
    %97 = tpu.matmul %30, %96, %cst_65 {dimension_numbers = #tpu.dot_dimension_numbers<[1], [0], [0], [1], [0, 0, 1, 1], [], []>} : vector<64x64xbf16>, vector<64x16xbf16>, vector<64x16xf32> -> vector<64x16xf32>
    %c2_66 = arith.constant 2 : index
    %c0_67 = arith.constant 0 : index
    %c0_68 = arith.constant 0 : index
    %98 = vector.load %arg4[%c2_66, %c0_67, %c0_68] : memref<4x64x16xbf16, #tpu.memory_space<vmem>>, vector<1x64x16xbf16>
    %99 = vector.shape_cast %98 : vector<1x64x16xbf16> to vector<64x16xbf16>
    %cst_69 = arith.constant dense<0.000000e+00> : vector<64x16xf32>
    %100 = tpu.matmul %30, %99, %cst_69 {dimension_numbers = #tpu.dot_dimension_numbers<[1], [0], [0], [1], [0, 0, 1, 1], [], []>} : vector<64x64xbf16>, vector<64x16xbf16>, vector<64x16xf32> -> vector<64x16xf32>
    %101 = arith.truncf %94 : vector<64x16xf32> to vector<64x16xbf16>
    %102 = arith.truncf %97 : vector<64x16xf32> to vector<64x16xbf16>
    %cst_70 = arith.constant dense<0.000000e+00> : vector<64x64xf32>
    %103 = tpu.matmul %101, %102, %cst_70 {dimension_numbers = #tpu.dot_dimension_numbers<[1], [1], [0], [0], [0, 0, 1, 0], [], []>} : vector<64x16xbf16>, vector<64x16xbf16>, vector<64x64xf32> -> vector<64x64xf32>
    %cst_71 = arith.constant dense<0xFF800000> : vector<64xf32>
    %104 = vector.multi_reduction <maximumf>, %103, %cst_71 [1] : vector<64x64xf32> to vector<64xf32>
    %105 = vector.shape_cast %104 : vector<64xf32> to vector<64x1xf32>
    %106 = vector.broadcast %105 : vector<64x1xf32> to vector<64x64xf32>
    %107 = arith.subf %103, %106 : vector<64x64xf32>
    %108 = math.exp %107 : vector<64x64xf32>
    %cst_72 = arith.constant dense<0.000000e+00> : vector<64xf32>
    %109 = vector.multi_reduction <add>, %108, %cst_72 [1] : vector<64x64xf32> to vector<64xf32>
    %110 = vector.shape_cast %109 : vector<64xf32> to vector<64x1xf32>
    %111 = tpu.reciprocal %110 {approx = true} : vector<64x1xf32> -> vector<64x1xf32>
    %112 = vector.broadcast %111 : vector<64x1xf32> to vector<64x64xf32>
    %113 = arith.mulf %108, %112 : vector<64x64xf32>
    %114 = arith.truncf %113 : vector<64x64xf32> to vector<64x64xbf16>
    %115 = arith.truncf %100 : vector<64x16xf32> to vector<64x16xbf16>
    %cst_73 = arith.constant dense<0.000000e+00> : vector<64x16xf32>
    %116 = tpu.matmul %114, %115, %cst_73 {dimension_numbers = #tpu.dot_dimension_numbers<[1], [0], [0], [1], [0, 0, 1, 1], [], []>} : vector<64x64xbf16>, vector<64x16xbf16>, vector<64x16xf32> -> vector<64x16xf32>
    %117 = arith.truncf %116 : vector<64x16xf32> to vector<64x16xbf16>
    %c2_74 = arith.constant 2 : index
    %c0_75 = arith.constant 0 : index
    %c0_76 = arith.constant 0 : index
    %118 = vector.load %arg5[%c2_74, %c0_75, %c0_76] : memref<4x16x64xbf16, #tpu.memory_space<vmem>>, vector<1x16x64xbf16>
    %119 = vector.shape_cast %118 : vector<1x16x64xbf16> to vector<16x64xbf16>
    %cst_77 = arith.constant dense<0.000000e+00> : vector<64x64xf32>
    %120 = tpu.matmul %117, %119, %cst_77 {dimension_numbers = #tpu.dot_dimension_numbers<[1], [0], [0], [1], [0, 0, 1, 1], [], []>} : vector<64x16xbf16>, vector<16x64xbf16>, vector<64x64xf32> -> vector<64x64xf32>
    %121 = arith.addf %91, %120 : vector<64x64xf32>
    %c3_78 = arith.constant 3 : index
    %c0_79 = arith.constant 0 : index
    %c0_80 = arith.constant 0 : index
    %122 = vector.load %arg2[%c3_78, %c0_79, %c0_80] : memref<4x64x16xbf16, #tpu.memory_space<vmem>>, vector<1x64x16xbf16>
    %123 = vector.shape_cast %122 : vector<1x64x16xbf16> to vector<64x16xbf16>
    %cst_81 = arith.constant dense<0.000000e+00> : vector<64x16xf32>
    %124 = tpu.matmul %30, %123, %cst_81 {dimension_numbers = #tpu.dot_dimension_numbers<[1], [0], [0], [1], [0, 0, 1, 1], [], []>} : vector<64x64xbf16>, vector<64x16xbf16>, vector<64x16xf32> -> vector<64x16xf32>
    %c3_82 = arith.constant 3 : index
    %c0_83 = arith.constant 0 : index
    %c0_84 = arith.constant 0 : index
    %125 = vector.load %arg3[%c3_82, %c0_83, %c0_84] : memref<4x64x16xbf16, #tpu.memory_space<vmem>>, vector<1x64x16xbf16>
    %126 = vector.shape_cast %125 : vector<1x64x16xbf16> to vector<64x16xbf16>
    %cst_85 = arith.constant dense<0.000000e+00> : vector<64x16xf32>
    %127 = tpu.matmul %30, %126, %cst_85 {dimension_numbers = #tpu.dot_dimension_numbers<[1], [0], [0], [1], [0, 0, 1, 1], [], []>} : vector<64x64xbf16>, vector<64x16xbf16>, vector<64x16xf32> -> vector<64x16xf32>
    %c3_86 = arith.constant 3 : index
    %c0_87 = arith.constant 0 : index
    %c0_88 = arith.constant 0 : index
    %128 = vector.load %arg4[%c3_86, %c0_87, %c0_88] : memref<4x64x16xbf16, #tpu.memory_space<vmem>>, vector<1x64x16xbf16>
    %129 = vector.shape_cast %128 : vector<1x64x16xbf16> to vector<64x16xbf16>
    %cst_89 = arith.constant dense<0.000000e+00> : vector<64x16xf32>
    %130 = tpu.matmul %30, %129, %cst_89 {dimension_numbers = #tpu.dot_dimension_numbers<[1], [0], [0], [1], [0, 0, 1, 1], [], []>} : vector<64x64xbf16>, vector<64x16xbf16>, vector<64x16xf32> -> vector<64x16xf32>
    %131 = arith.truncf %124 : vector<64x16xf32> to vector<64x16xbf16>
    %132 = arith.truncf %127 : vector<64x16xf32> to vector<64x16xbf16>
    %cst_90 = arith.constant dense<0.000000e+00> : vector<64x64xf32>
    %133 = tpu.matmul %131, %132, %cst_90 {dimension_numbers = #tpu.dot_dimension_numbers<[1], [1], [0], [0], [0, 0, 1, 0], [], []>} : vector<64x16xbf16>, vector<64x16xbf16>, vector<64x64xf32> -> vector<64x64xf32>
    %cst_91 = arith.constant dense<0xFF800000> : vector<64xf32>
    %134 = vector.multi_reduction <maximumf>, %133, %cst_91 [1] : vector<64x64xf32> to vector<64xf32>
    %135 = vector.shape_cast %134 : vector<64xf32> to vector<64x1xf32>
    %136 = vector.broadcast %135 : vector<64x1xf32> to vector<64x64xf32>
    %137 = arith.subf %133, %136 : vector<64x64xf32>
    %138 = math.exp %137 : vector<64x64xf32>
    %cst_92 = arith.constant dense<0.000000e+00> : vector<64xf32>
    %139 = vector.multi_reduction <add>, %138, %cst_92 [1] : vector<64x64xf32> to vector<64xf32>
    %140 = vector.shape_cast %139 : vector<64xf32> to vector<64x1xf32>
    %141 = tpu.reciprocal %140 {approx = true} : vector<64x1xf32> -> vector<64x1xf32>
    %142 = vector.broadcast %141 : vector<64x1xf32> to vector<64x64xf32>
    %143 = arith.mulf %138, %142 : vector<64x64xf32>
    %144 = arith.truncf %143 : vector<64x64xf32> to vector<64x64xbf16>
    %145 = arith.truncf %130 : vector<64x16xf32> to vector<64x16xbf16>
    %cst_93 = arith.constant dense<0.000000e+00> : vector<64x16xf32>
    %146 = tpu.matmul %144, %145, %cst_93 {dimension_numbers = #tpu.dot_dimension_numbers<[1], [0], [0], [1], [0, 0, 1, 1], [], []>} : vector<64x64xbf16>, vector<64x16xbf16>, vector<64x16xf32> -> vector<64x16xf32>
    %147 = arith.truncf %146 : vector<64x16xf32> to vector<64x16xbf16>
    %c3_94 = arith.constant 3 : index
    %c0_95 = arith.constant 0 : index
    %c0_96 = arith.constant 0 : index
    %148 = vector.load %arg5[%c3_94, %c0_95, %c0_96] : memref<4x16x64xbf16, #tpu.memory_space<vmem>>, vector<1x16x64xbf16>
    %149 = vector.shape_cast %148 : vector<1x16x64xbf16> to vector<16x64xbf16>
    %cst_97 = arith.constant dense<0.000000e+00> : vector<64x64xf32>
    %150 = tpu.matmul %147, %149, %cst_97 {dimension_numbers = #tpu.dot_dimension_numbers<[1], [0], [0], [1], [0, 0, 1, 1], [], []>} : vector<64x16xbf16>, vector<16x64xbf16>, vector<64x64xf32> -> vector<64x64xf32>
    %151 = arith.addf %121, %150 : vector<64x64xf32>
    %152 = arith.addf %1, %151 : vector<64x64xf32>
    %153 = vector.broadcast %6 : vector<1x64xf32> to vector<64x64xf32>
    %154 = arith.addf %152, %153 : vector<64x64xf32>
    %cst_98 = arith.constant dense<0.000000e+00> : vector<64xf32>
    %155 = vector.multi_reduction <add>, %154, %cst_98 [1] : vector<64x64xf32> to vector<64xf32>
    %156 = vector.shape_cast %155 : vector<64xf32> to vector<64x1xf32>
    %cst_99 = arith.constant 6.400000e+01 : f32
    %157 = vector.broadcast %cst_99 : f32 to vector<64x1xf32>
    %158 = arith.divf %156, %157 : vector<64x1xf32>
    %159 = vector.broadcast %158 : vector<64x1xf32> to vector<64x64xf32>
    %160 = arith.subf %154, %159 : vector<64x64xf32>
    %161 = arith.mulf %160, %160 : vector<64x64xf32>
    %cst_100 = arith.constant dense<0.000000e+00> : vector<64xf32>
    %162 = vector.multi_reduction <add>, %161, %cst_100 [1] : vector<64x64xf32> to vector<64xf32>
    %163 = vector.shape_cast %162 : vector<64xf32> to vector<64x1xf32>
    %cst_101 = arith.constant 6.400000e+01 : f32
    %164 = vector.broadcast %cst_101 : f32 to vector<64x1xf32>
    %165 = arith.divf %163, %164 : vector<64x1xf32>
    %cst_102 = arith.constant 9.99999974E-6 : f32
    %166 = vector.broadcast %cst_102 : f32 to vector<64x1xf32>
    %167 = arith.addf %165, %166 : vector<64x1xf32>
    %168 = math.rsqrt %167 : vector<64x1xf32>
    %169 = vector.broadcast %168 : vector<64x1xf32> to vector<64x64xf32>
    %170 = arith.mulf %160, %169 : vector<64x64xf32>
    %171 = vector.broadcast %4 : vector<1x64xf32> to vector<64x64xf32>
    %172 = arith.mulf %170, %171 : vector<64x64xf32>
    %173 = vector.broadcast %5 : vector<1x64xf32> to vector<64x64xf32>
    %174 = arith.addf %172, %173 : vector<64x64xf32>
    %175 = arith.truncf %174 : vector<64x64xf32> to vector<64x64xbf16>
    %c0_103 = arith.constant 0 : index
    %c0_104 = arith.constant 0 : index
    %176 = vector.load %arg6[%c0_103, %c0_104] : memref<64x256xbf16, #tpu.memory_space<vmem>>, vector<64x256xbf16>
    %cst_105 = arith.constant dense<0.000000e+00> : vector<64x256xf32>
    %177 = tpu.matmul %175, %176, %cst_105 {dimension_numbers = #tpu.dot_dimension_numbers<[1], [0], [0], [1], [0, 0, 1, 1], [], []>} : vector<64x64xbf16>, vector<64x256xbf16>, vector<64x256xf32> -> vector<64x256xf32>
    %178 = vector.broadcast %8 : vector<1x256xf32> to vector<64x256xf32>
    %179 = arith.addf %177, %178 : vector<64x256xf32>
    %cst_106 = arith.constant 0.000000e+00 : f32
    %180 = vector.broadcast %cst_106 : f32 to vector<16x256xf32>
    %c0_107 = arith.constant 0 : index
    %c0_108 = arith.constant 0 : index
    %181 = vector.load %arg12[%c0_107, %c0_108] : memref<96x256xf32, #tpu.memory_space<vmem>>, vector<16x256xf32>
    tpu.vector_store %arg12[%c0_107, %c0_108], %180 {strides = array<i32>} : memref<96x256xf32, #tpu.memory_space<vmem>>, vector<16x256xf32>,
    %cst_109 = arith.constant 0.000000e+00 : f32
    %182 = vector.broadcast %cst_109 : f32 to vector<16x256xf32>
    %c80 = arith.constant 80 : index
    %c0_110 = arith.constant 0 : index
    %183 = vector.load %arg12[%c80, %c0_110] : memref<96x256xf32, #tpu.memory_space<vmem>>, vector<16x256xf32>
    tpu.vector_store %arg12[%c80, %c0_110], %182 {strides = array<i32>} : memref<96x256xf32, #tpu.memory_space<vmem>>, vector<16x256xf32>,
    %c16 = arith.constant 16 : index
    %c0_111 = arith.constant 0 : index
    %184 = vector.load %arg12[%c16, %c0_111] : memref<96x256xf32, #tpu.memory_space<vmem>>, vector<64x256xf32>
    tpu.vector_store %arg12[%c16, %c0_111], %179 {strides = array<i32>} : memref<96x256xf32, #tpu.memory_space<vmem>>, vector<64x256xf32>,
    %185 = tpu.iota {dimensions = array<i32: 0>} : vector<64x1xi32>
    %c8_i32 = arith.constant 8 : i32
    %c0_i32 = arith.constant 0 : i32
    %186 = arith.cmpi eq, %c8_i32, %c0_i32 : i32
    %c1_i32 = arith.constant 1 : i32
    %187 = arith.select %186, %c1_i32, %c8_i32 : i32
    %188 = vector.broadcast %187 : i32 to vector<64x1xi32>
    %189 = arith.remsi %185, %188 : vector<64x1xi32>
    %c0_i32_112 = arith.constant 0 : i32
    %190 = vector.broadcast %c0_i32_112 : i32 to vector<64x1xi32>
    %191 = arith.cmpi ne, %189, %190 : vector<64x1xi32>
    %c0_i32_113 = arith.constant 0 : i32
    %192 = vector.broadcast %c0_i32_113 : i32 to vector<64x1xi32>
    %193 = arith.cmpi slt, %189, %192 : vector<64x1xi32>
    %c0_i32_114 = arith.constant 0 : i32
    %194 = arith.cmpi slt, %187, %c0_i32_114 : i32
    %195 = vector.broadcast %194 : i1 to vector<64x1xi1>
    %196 = vector.broadcast %195 : vector<64x1xi1> to vector<64x1xi1>
    %197 = arith.xori %193, %196 : vector<64x1xi1>
    %198 = arith.andi %197, %191 : vector<64x1xi1>
    %199 = vector.broadcast %187 : i32 to vector<64x1xi32>
    %200 = arith.addi %189, %199 : vector<64x1xi32>
    %201 = arith.select %198, %200, %189 : vector<64x1xi1>, vector<64x1xi32>
    %c1_i32_115 = arith.constant 1 : i32
    %202 = vector.broadcast %c1_i32_115 : i32 to vector<64x1xi32>
    %203 = arith.cmpi sge, %201, %202 : vector<64x1xi32>
    %204 = arith.extui %203 : vector<64x1xi1> to vector<64x1xi32>
    %205 = arith.sitofp %204 : vector<64x1xi32> to vector<64x1xf32>
    %c6_i32 = arith.constant 6 : i32
    %206 = vector.broadcast %c6_i32 : i32 to vector<64x1xi32>
    %207 = arith.cmpi sle, %201, %206 : vector<64x1xi32>
    %208 = arith.extui %207 : vector<64x1xi1> to vector<64x1xi32>
    %209 = arith.sitofp %208 : vector<64x1xi32> to vector<64x1xf32>
    %c0_116 = arith.constant 0 : index
    %c0_117 = arith.constant 0 : index
    %210 = vector.load %arg8[%c0_116, %c0_117] : memref<9x256xf32, #tpu.memory_space<vmem>>, vector<9x256xf32>
    %cst_118 = arith.constant 0.000000e+00 : f32
    %211 = vector.broadcast %cst_118 : f32 to vector<64x256xf32>
    %c7 = arith.constant 7 : index
    %c0_119 = arith.constant 0 : index
    %212 = vector.load %arg12[%c7, %c0_119] : memref<96x256xf32, #tpu.memory_space<vmem>>, vector<64x256xf32>
    %213 = vector.extract_strided_slice %210 {offsets = [0, 0], sizes = [1, 256], strides = [1, 1]} : vector<9x256xf32> to vector<1x256xf32>
    %214 = vector.broadcast %205 : vector<64x1xf32> to vector<64x256xf32>
    %215 = vector.broadcast %213 : vector<1x256xf32> to vector<64x256xf32>
    %216 = arith.mulf %214, %215 : vector<64x256xf32>
    %217 = arith.mulf %212, %216 : vector<64x256xf32>
    %218 = arith.addf %211, %217 : vector<64x256xf32>
    %c8 = arith.constant 8 : index
    %c0_120 = arith.constant 0 : index
    %219 = vector.load %arg12[%c8, %c0_120] : memref<96x256xf32, #tpu.memory_space<vmem>>, vector<64x256xf32>
    %220 = vector.extract_strided_slice %210 {offsets = [1, 0], sizes = [1, 256], strides = [1, 1]} : vector<9x256xf32> to vector<1x256xf32>
    %221 = vector.broadcast %220 : vector<1x256xf32> to vector<64x256xf32>
    %222 = arith.mulf %219, %221 : vector<64x256xf32>
    %223 = arith.addf %218, %222 : vector<64x256xf32>
    %c9 = arith.constant 9 : index
    %c0_121 = arith.constant 0 : index
    %224 = vector.load %arg12[%c9, %c0_121] : memref<96x256xf32, #tpu.memory_space<vmem>>, vector<64x256xf32>
    %225 = vector.extract_strided_slice %210 {offsets = [2, 0], sizes = [1, 256], strides = [1, 1]} : vector<9x256xf32> to vector<1x256xf32>
    %226 = vector.broadcast %209 : vector<64x1xf32> to vector<64x256xf32>
    %227 = vector.broadcast %225 : vector<1x256xf32> to vector<64x256xf32>
    %228 = arith.mulf %226, %227 : vector<64x256xf32>
    %229 = arith.mulf %224, %228 : vector<64x256xf32>
    %230 = arith.addf %223, %229 : vector<64x256xf32>
    %c15 = arith.constant 15 : index
    %c0_122 = arith.constant 0 : index
    %231 = vector.load %arg12[%c15, %c0_122] : memref<96x256xf32, #tpu.memory_space<vmem>>, vector<64x256xf32>
    %232 = vector.extract_strided_slice %210 {offsets = [3, 0], sizes = [1, 256], strides = [1, 1]} : vector<9x256xf32> to vector<1x256xf32>
    %233 = vector.broadcast %205 : vector<64x1xf32> to vector<64x256xf32>
    %234 = vector.broadcast %232 : vector<1x256xf32> to vector<64x256xf32>
    %235 = arith.mulf %233, %234 : vector<64x256xf32>
    %236 = arith.mulf %231, %235 : vector<64x256xf32>
    %237 = arith.addf %230, %236 : vector<64x256xf32>
    %c16_123 = arith.constant 16 : index
    %c0_124 = arith.constant 0 : index
    %238 = vector.load %arg12[%c16_123, %c0_124] : memref<96x256xf32, #tpu.memory_space<vmem>>, vector<64x256xf32>
    %239 = vector.extract_strided_slice %210 {offsets = [4, 0], sizes = [1, 256], strides = [1, 1]} : vector<9x256xf32> to vector<1x256xf32>
    %240 = vector.broadcast %239 : vector<1x256xf32> to vector<64x256xf32>
    %241 = arith.mulf %238, %240 : vector<64x256xf32>
    %242 = arith.addf %237, %241 : vector<64x256xf32>
    %c17 = arith.constant 17 : index
    %c0_125 = arith.constant 0 : index
    %243 = vector.load %arg12[%c17, %c0_125] : memref<96x256xf32, #tpu.memory_space<vmem>>, vector<64x256xf32>
    %244 = vector.extract_strided_slice %210 {offsets = [5, 0], sizes = [1, 256], strides = [1, 1]} : vector<9x256xf32> to vector<1x256xf32>
    %245 = vector.broadcast %209 : vector<64x1xf32> to vector<64x256xf32>
    %246 = vector.broadcast %244 : vector<1x256xf32> to vector<64x256xf32>
    %247 = arith.mulf %245, %246 : vector<64x256xf32>
    %248 = arith.mulf %243, %247 : vector<64x256xf32>
    %249 = arith.addf %242, %248 : vector<64x256xf32>
    %c23 = arith.constant 23 : index
    %c0_126 = arith.constant 0 : index
    %250 = vector.load %arg12[%c23, %c0_126] : memref<96x256xf32, #tpu.memory_space<vmem>>, vector<64x256xf32>
    %251 = vector.extract_strided_slice %210 {offsets = [6, 0], sizes = [1, 256], strides = [1, 1]} : vector<9x256xf32> to vector<1x256xf32>
    %252 = vector.broadcast %205 : vector<64x1xf32> to vector<64x256xf32>
    %253 = vector.broadcast %251 : vector<1x256xf32> to vector<64x256xf32>
    %254 = arith.mulf %252, %253 : vector<64x256xf32>
    %255 = arith.mulf %250, %254 : vector<64x256xf32>
    %256 = arith.addf %249, %255 : vector<64x256xf32>
    %c24 = arith.constant 24 : index
    %c0_127 = arith.constant 0 : index
    %257 = vector.load %arg12[%c24, %c0_127] : memref<96x256xf32, #tpu.memory_space<vmem>>, vector<64x256xf32>
    %258 = vector.extract_strided_slice %210 {offsets = [7, 0], sizes = [1, 256], strides = [1, 1]} : vector<9x256xf32> to vector<1x256xf32>
    %259 = vector.broadcast %258 : vector<1x256xf32> to vector<64x256xf32>
    %260 = arith.mulf %257, %259 : vector<64x256xf32>
    %261 = arith.addf %256, %260 : vector<64x256xf32>
    %c25 = arith.constant 25 : index
    %c0_128 = arith.constant 0 : index
    %262 = vector.load %arg12[%c25, %c0_128] : memref<96x256xf32, #tpu.memory_space<vmem>>, vector<64x256xf32>
    %263 = vector.extract_strided_slice %210 {offsets = [8, 0], sizes = [1, 256], strides = [1, 1]} : vector<9x256xf32> to vector<1x256xf32>
    %264 = vector.broadcast %209 : vector<64x1xf32> to vector<64x256xf32>
    %265 = vector.broadcast %263 : vector<1x256xf32> to vector<64x256xf32>
    %266 = arith.mulf %264, %265 : vector<64x256xf32>
    %267 = arith.mulf %262, %266 : vector<64x256xf32>
    %268 = arith.addf %261, %267 : vector<64x256xf32>
    %269 = vector.broadcast %9 : vector<1x256xf32> to vector<64x256xf32>
    %270 = arith.addf %268, %269 : vector<64x256xf32>
    %cst_129 = arith.constant 5.000000e-01 : f32
    %271 = vector.broadcast %cst_129 : f32 to vector<64x256xf32>
    %272 = arith.mulf %271, %270 : vector<64x256xf32>
    %cst_130 = arith.constant 0.707106769 : f32
    %273 = vector.broadcast %cst_130 : f32 to vector<64x256xf32>
    %274 = arith.mulf %270, %273 : vector<64x256xf32>
    %cst_131 = arith.constant 0.000000e+00 : f32
    %275 = vector.broadcast %cst_131 : f32 to vector<64x256xf32>
    %276 = arith.cmpf oge, %274, %275 : vector<64x256xf32>
    %cst_132 = arith.constant 1.000000e+00 : f32
    %cst_133 = arith.constant -1.000000e+00 : f32
    %277 = vector.broadcast %cst_132 : f32 to vector<64x256xf32>
    %278 = vector.broadcast %cst_133 : f32 to vector<64x256xf32>
    %279 = arith.select %276, %277, %278 : vector<64x256xi1>, vector<64x256xf32>
    %280 = math.absf %274 : vector<64x256xf32>
    %cst_134 = arith.constant 0.327591091 : f32
    %281 = vector.broadcast %cst_134 : f32 to vector<64x256xf32>
    %282 = arith.mulf %281, %280 : vector<64x256xf32>
    %cst_135 = arith.constant 1.000000e+00 : f32
    %283 = vector.broadcast %cst_135 : f32 to vector<64x256xf32>
    %284 = arith.addf %283, %282 : vector<64x256xf32>
    %cst_136 = arith.constant 1.000000e+00 : f32
    %285 = vector.broadcast %cst_136 : f32 to vector<64x256xf32>
    %286 = arith.divf %285, %284 : vector<64x256xf32>
    %cst_137 = arith.constant 1.06140542 : f32
    %287 = vector.broadcast %cst_137 : f32 to vector<64x256xf32>
    %288 = arith.mulf %287, %286 : vector<64x256xf32>
    %cst_138 = arith.constant -1.45315206 : f32
    %289 = vector.broadcast %cst_138 : f32 to vector<64x256xf32>
    %290 = arith.addf %288, %289 : vector<64x256xf32>
    %291 = arith.mulf %290, %286 : vector<64x256xf32>
    %cst_139 = arith.constant 1.42141378 : f32
    %292 = vector.broadcast %cst_139 : f32 to vector<64x256xf32>
    %293 = arith.addf %291, %292 : vector<64x256xf32>
    %294 = arith.mulf %293, %286 : vector<64x256xf32>
    %cst_140 = arith.constant -0.284496725 : f32
    %295 = vector.broadcast %cst_140 : f32 to vector<64x256xf32>
    %296 = arith.addf %294, %295 : vector<64x256xf32>
    %297 = arith.mulf %296, %286 : vector<64x256xf32>
    %cst_141 = arith.constant 0.254829586 : f32
    %298 = vector.broadcast %cst_141 : f32 to vector<64x256xf32>
    %299 = arith.addf %297, %298 : vector<64x256xf32>
    %300 = arith.mulf %299, %286 : vector<64x256xf32>
    %cst_142 = arith.constant 0.000000e+00 : f32
    %301 = vector.broadcast %cst_142 : f32 to vector<64x256xf32>
    %302 = arith.subf %301, %280 : vector<64x256xf32>
    %303 = arith.mulf %302, %280 : vector<64x256xf32>
    %304 = math.exp %303 : vector<64x256xf32>
    %305 = arith.mulf %300, %304 : vector<64x256xf32>
    %cst_143 = arith.constant 1.000000e+00 : f32
    %306 = vector.broadcast %cst_143 : f32 to vector<64x256xf32>
    %307 = arith.subf %306, %305 : vector<64x256xf32>
    %308 = arith.mulf %279, %307 : vector<64x256xf32>
    %cst_144 = arith.constant 1.000000e+00 : f32
    %309 = vector.broadcast %cst_144 : f32 to vector<64x256xf32>
    %310 = arith.addf %309, %308 : vector<64x256xf32>
    %311 = arith.mulf %272, %310 : vector<64x256xf32>
    %312 = arith.truncf %311 : vector<64x256xf32> to vector<64x256xbf16>
    %c0_145 = arith.constant 0 : index
    %c0_146 = arith.constant 0 : index
    %313 = vector.load %arg7[%c0_145, %c0_146] : memref<256x64xbf16, #tpu.memory_space<vmem>>, vector<256x64xbf16>
    %cst_147 = arith.constant dense<0.000000e+00> : vector<64x64xf32>
    %314 = tpu.matmul %312, %313, %cst_147 {dimension_numbers = #tpu.dot_dimension_numbers<[1], [0], [0], [1], [0, 0, 1, 1], [], []>} : vector<64x256xbf16>, vector<256x64xbf16>, vector<64x64xf32> -> vector<64x64xf32>
    %315 = vector.broadcast %7 : vector<1x64xf32> to vector<64x64xf32>
    %316 = arith.addf %314, %315 : vector<64x64xf32>
    %317 = arith.addf %154, %316 : vector<64x64xf32>
    %c0_148 = arith.constant 0 : index
    %c0_149 = arith.constant 0 : index
    %c0_150 = arith.constant 0 : index
    %318 = vector.load %arg11[%c0_148, %c0_149, %c0_150] : memref<1x64x64xf32, #tpu.memory_space<vmem>>, vector<1x64x64xf32>
    %319 = vector.shape_cast %318 : vector<1x64x64xf32> to vector<64x64xf32>
    %320 = vector.shape_cast %317 : vector<64x64xf32> to vector<1x64x64xf32>
    tpu.vector_store %arg11[%c0_148, %c0_149, %c0_150], %320 {strides = array<i32>} : memref<1x64x64xf32, #tpu.memory_space<vmem>>, vector<1x64x64xf32>,
    return
  }
  func.func @transform_0(%arg0: i32) -> (i32, i32, i32) {
    %c0_i32 = arith.constant 0 : i32
    %c0_i32_0 = arith.constant 0 : i32
    %c0_i32_1 = arith.constant 0 : i32
    return %arg0, %c0_i32, %c0_i32_0 : i32, i32, i32
  }
  func.func @transform_1(%arg0: i32) -> (i32, i32, i32) {
    %c0_i32 = arith.constant 0 : i32
    %c0_i32_0 = arith.constant 0 : i32
    %c0_i32_1 = arith.constant 0 : i32
    %c0_i32_2 = arith.constant 0 : i32
    return %c0_i32, %c0_i32_0, %c0_i32_1 : i32, i32, i32
  }
  func.func @transform_2(%arg0: i32) -> (i32, i32, i32) {
    %c0_i32 = arith.constant 0 : i32
    %c0_i32_0 = arith.constant 0 : i32
    %c0_i32_1 = arith.constant 0 : i32
    %c0_i32_2 = arith.constant 0 : i32
    return %c0_i32, %c0_i32_0, %c0_i32_1 : i32, i32, i32
  }
  func.func @transform_3(%arg0: i32) -> (i32, i32, i32) {
    %c0_i32 = arith.constant 0 : i32
    %c0_i32_0 = arith.constant 0 : i32
    %c0_i32_1 = arith.constant 0 : i32
    %c0_i32_2 = arith.constant 0 : i32
    return %c0_i32, %c0_i32_0, %c0_i32_1 : i32, i32, i32
  }
  func.func @transform_4(%arg0: i32) -> (i32, i32, i32) {
    %c0_i32 = arith.constant 0 : i32
    %c0_i32_0 = arith.constant 0 : i32
    %c0_i32_1 = arith.constant 0 : i32
    %c0_i32_2 = arith.constant 0 : i32
    return %c0_i32, %c0_i32_0, %c0_i32_1 : i32, i32, i32
  }
  func.func @transform_5(%arg0: i32) -> (i32, i32) {
    %c0_i32 = arith.constant 0 : i32
    %c0_i32_0 = arith.constant 0 : i32
    %c0_i32_1 = arith.constant 0 : i32
    return %c0_i32, %c0_i32_0 : i32, i32
  }
  func.func @transform_6(%arg0: i32) -> (i32, i32) {
    %c0_i32 = arith.constant 0 : i32
    %c0_i32_0 = arith.constant 0 : i32
    %c0_i32_1 = arith.constant 0 : i32
    return %c0_i32, %c0_i32_0 : i32, i32
  }
  func.func @transform_7(%arg0: i32) -> (i32, i32) {
    %c0_i32 = arith.constant 0 : i32
    %c0_i32_0 = arith.constant 0 : i32
    %c0_i32_1 = arith.constant 0 : i32
    return %c0_i32, %c0_i32_0 : i32, i32
  }
  func.func @transform_8(%arg0: i32) -> (i32, i32) {
    %c0_i32 = arith.constant 0 : i32
    %c0_i32_0 = arith.constant 0 : i32
    %c0_i32_1 = arith.constant 0 : i32
    return %c0_i32, %c0_i32_0 : i32, i32
  }
  func.func @transform_9(%arg0: i32) -> (i32, i32) {
    %c0_i32 = arith.constant 0 : i32
    %c0_i32_0 = arith.constant 0 : i32
    %c0_i32_1 = arith.constant 0 : i32
    return %c0_i32, %c0_i32_0 : i32, i32
  }
  func.func @transform_10(%arg0: i32) -> (i32, i32, i32) {
    %c0_i32 = arith.constant 0 : i32
    %c0_i32_0 = arith.constant 0 : i32
    %c0_i32_1 = arith.constant 0 : i32
    return %arg0, %c0_i32, %c0_i32_0 : i32, i32, i32
  }
}

</mosaic_0001>

<llo_original>
// kernel: block_forward.1
$region0: #{block_forward.1}
  #allocation0 [shape = 'u32[]', space=smem, size = 0x4, offset = 0x4, fixed_abs, tag = 'smem constant byte address 0x4 - core index']
  #allocation1 [shape = 'u32[72,128]{1,0:T(1,128)}', space=vmem, size = 0x9000, scoped, tag = 'internal scratch']
  #allocation2 [shape = 'f32[96,256]{1,0:T(8,128)}', space=vmem, size = 0x18000, scoped, tag = 'scratch operand']
  %s0 = inlined_call_operand.vmem [shape: f32[2,64,64], index: 0, kind: input, shape index: {}]
  %s1 = inlined_call_operand.vmem [shape: bf16[4,64,16], index: 1, kind: input, shape index: {}]
  %s2 = inlined_call_operand.vmem [shape: bf16[4,64,16], index: 2, kind: input, shape index: {}]
  %s3 = inlined_call_operand.vmem [shape: bf16[4,64,16], index: 3, kind: input, shape index: {}]
  %s4 = inlined_call_operand.vmem [shape: bf16[4,16,64], index: 4, kind: input, shape index: {}]
  %s5 = inlined_call_operand.vmem [shape: bf16[64,256], index: 5, kind: input, shape index: {}]
  %s6 = inlined_call_operand.vmem [shape: bf16[256,64], index: 6, kind: input, shape index: {}]
  %s7 = inlined_call_operand.vmem [shape: f32[9,256], index: 7, kind: input, shape index: {}]
  %s8 = inlined_call_operand.vmem [shape: f32[6,64], index: 8, kind: input, shape index: {}]
  %s9 = inlined_call_operand.vmem [shape: f32[2,256], index: 9, kind: input, shape index: {}]
  %s10 = inlined_call_operand.hbm [shape: f32[2,64,64], index: 10, kind: output, shape index: {}]
  %s11 = sld [smem:[#allocation0]]
  $region73: #{block_forward.1} parent=0
    _
  %s13 = ssub.s32 1, %s11
  %s14 = scalar_select 0, %s13, %s11
  $region1: #{block_forward.1} parent=0
    #allocation3 [shape = 'u8[65536]{0}', space=vmem, size = 0x10000, scoped, tag = 'output window, operand 0']
    #allocation4 [shape = 's32[2]{0}', space=sflag, size = 0x8, scoped, tag = 'scoped memory for block_forward.1']
    %15 = vsyncpa [#allocation4], 0
    %s16 = scalar_lea.sflag [#allocation4], 1
    %17 = vsyncpa %s16, 0
    loop: start=0, step=1, limit=4
    $region2: #{block_forward.1} parent=1 // loop_pre_header
      _
    $region3: #{block_forward.1} parent=1 // loop_header
      %s19 = sphi 0, %s23
      %p20 = scmp.ge.s32.totalorder %s19, 4
      %s29 = sphi 0, %s31
      %s32 = sphi 0, %s29
      %s33 = sphi 0, %s32
      %s49 = sphi 0, %s33
      %s53 = sphi 0, %s53
      %s55 = sphi 0, %s53
      %s56 = sphi 0, %s55
      %s70 = sphi 0, %s56
      %s74 = sphi 0, %s74
      %s76 = sphi 0, %s74
      %s77 = sphi 0, %s76
      %s91 = sphi 0, %s77
      %s95 = sphi 0, %s95
      %s97 = sphi 0, %s95
      %s98 = sphi 0, %s97
      %s112 = sphi 0, %s98
      %s116 = sphi 0, %s116
      %s118 = sphi 0, %s116
      %s119 = sphi 0, %s118
      %s133 = sphi 0, %s119
      %s137 = sphi 0, %s137
      %s139 = sphi 0, %s137
      %s140 = sphi 0, %s139
      %s154 = sphi 0, %s140
      %s158 = sphi 0, %s158
      %s160 = sphi 0, %s158
      %s161 = sphi 0, %s160
      %s175 = sphi 0, %s161
      %s179 = sphi 0, %s179
      %s181 = sphi 0, %s179
      %s182 = sphi 0, %s181
      %s196 = sphi 0, %s182
      %s200 = sphi 0, %s200
      %s202 = sphi 0, %s200
      %s203 = sphi 0, %s202
      %s217 = sphi 0, %s203
      %s221 = sphi 0, %s221
      %s223 = sphi 0, %s221
      %s224 = sphi 0, %s223
      %s238 = sphi 0, %s224
      %s244 = sphi 0, %s246
      %s247 = sphi 0, %s244
      %s248 = sphi 0, %s247
      %s264 = sphi 0, %s248
    $region4: #{block_forward.1} parent=1 // loop_header_branch
      %22 = sbr.rel (%p20) target = $region8
    $region5: #{block_forward.1} parent=1 // loop_body
      %s24 = ssub.s32 %s19, 1
      %s25 = ssub.s32 %s19, 2
      %s26 = sadd.s32 %s19, 1
      %s27 = ssub.s32 %s19, %s26
      %p28 = scmp.eq.s32.totalorder %s27, 0
      %s30 = sadd.s32 %s29, 1
      %s31 = scalar_select %p28, %s29, %s30
      %p34 = pneg %p28
      %p35 = scmp.eq.s32.totalorder %s19, 1
      %p36 = por %p34, %p35
      %p37 = scmp.ne.s32.totalorder %s29, %s32
      %p38 = scmp.eq.s32.totalorder %s19, 0
      %p39 = por %p37, %p38
      %p40 = scmp.ne.s32.totalorder %s29, %s32
      %p41 = scmp.eq.s32.totalorder %s24, 1
      %p42 = por %p40, %p41
      %p43 = scmp.ne.s32.totalorder %s32, %s33
      %p44 = scmp.eq.s32.totalorder %s24, 0
      %p45 = por %p43, %p44
      %p46 = scmp.ne.s32.totalorder %s32, %s33
      %p47 = scmp.eq.s32.totalorder %s25, 1
      %p48 = por %p46, %p47
      %p50 = scmp.ne.s32.totalorder %s33, %s49
      %p51 = scmp.eq.s32.totalorder %s25, 0
      %p52 = por %p50, %p51
      %s54 = sadd.s32 %s53, 1
      %p57 = scmp.eq.s32.totalorder %s19, 1
      %p58 = scmp.ne.s32.totalorder %s53, %s55
      %p59 = scmp.eq.s32.totalorder %s19, 0
      %p60 = por %p58, %p59
      %p61 = scmp.ne.s32.totalorder %s53, %s55
      %p62 = scmp.eq.s32.totalorder %s24, 1
      %p63 = por %p61, %p62
      %p64 = scmp.ne.s32.totalorder %s55, %s56
      %p65 = scmp.eq.s32.totalorder %s24, 0
      %p66 = por %p64, %p65
      %p67 = scmp.ne.s32.totalorder %s55, %s56
      %p68 = scmp.eq.s32.totalorder %s25, 1
      %p69 = por %p67, %p68
      %p71 = scmp.ne.s32.totalorder %s56, %s70
      %p72 = scmp.eq.s32.totalorder %s25, 0
      %p73 = por %p71, %p72
      %s75 = sadd.s32 %s74, 1
      %p78 = scmp.eq.s32.totalorder %s19, 1
      %p79 = scmp.ne.s32.totalorder %s74, %s76
      %p80 = scmp.eq.s32.totalorder %s19, 0
      %p81 = por %p79, %p80
      %p82 = scmp.ne.s32.totalorder %s74, %s76
      %p83 = scmp.eq.s32.totalorder %s24, 1
      %p84 = por %p82, %p83
      %p85 = scmp.ne.s32.totalorder %s76, %s77
      %p86 = scmp.eq.s32.totalorder %s24, 0
      %p87 = por %p85, %p86
      %p88 = scmp.ne.s32.totalorder %s76, %s77
      %p89 = scmp.eq.s32.totalorder %s25, 1
      %p90 = por %p88, %p89
      %p92 = scmp.ne.s32.totalorder %s77, %s91
      %p93 = scmp.eq.s32.totalorder %s25, 0
      %p94 = por %p92, %p93
      %s96 = sadd.s32 %s95, 1
      %p99 = scmp.eq.s32.totalorder %s19, 1
      %p100 = scmp.ne.s32.totalorder %s95, %s97
      %p101 = scmp.eq.s32.totalorder %s19, 0
      %p102 = por %p100, %p101
      %p103 = scmp.ne.s32.totalorder %s95, %s97
      %p104 = scmp.eq.s32.totalorder %s24, 1
      %p105 = por %p103, %p104
      %p106 = scmp.ne.s32.totalorder %s97, %s98
      %p107 = scmp.eq.s32.totalorder %s24, 0
      %p108 = por %p106, %p107
      %p109 = scmp.ne.s32.totalorder %s97, %s98
      %p110 = scmp.eq.s32.totalorder %s25, 1
      %p111 = por %p109, %p110
      %p113 = scmp.ne.s32.totalorder %s98, %s112
      %p114 = scmp.eq.s32.totalorder %s25, 0
      %p115 = por %p113, %p114
      %s117 = sadd.s32 %s116, 1
      %p120 = scmp.eq.s32.totalorder %s19, 1
      %p121 = scmp.ne.s32.totalorder %s116, %s118
      %p122 = scmp.eq.s32.totalorder %s19, 0
      %p123 = por %p121, %p122
      %p124 = scmp.ne.s32.totalorder %s116, %s118
      %p125 = scmp.eq.s32.totalorder %s24, 1
      %p126 = por %p124, %p125
      %p127 = scmp.ne.s32.totalorder %s118, %s119
      %p128 = scmp.eq.s32.totalorder %s24, 0
      %p129 = por %p127, %p128
      %p130 = scmp.ne.s32.totalorder %s118, %s119
      %p131 = scmp.eq.s32.totalorder %s25, 1
      %p132 = por %p130, %p131
      %p134 = scmp.ne.s32.totalorder %s119, %s133
      %p135 = scmp.eq.s32.totalorder %s25, 0
      %p136 = por %p134, %p135
      %s138 = sadd.s32 %s137, 1
      %p141 = scmp.eq.s32.totalorder %s19, 1
      %p142 = scmp.ne.s32.totalorder %s137, %s139
      %p143 = scmp.eq.s32.totalorder %s19, 0
      %p144 = por %p142, %p143
      %p145 = scmp.ne.s32.totalorder %s137, %s139
      %p146 = scmp.eq.s32.totalorder %s24, 1
      %p147 = por %p145, %p146
      %p148 = scmp.ne.s32.totalorder %s139, %s140
      %p149 = scmp.eq.s32.totalorder %s24, 0
      %p150 = por %p148, %p149
      %p151 = scmp.ne.s32.totalorder %s139, %s140
      %p152 = scmp.eq.s32.totalorder %s25, 1
      %p153 = por %p151, %p152
      %p155 = scmp.ne.s32.totalorder %s140, %s154
      %p156 = scmp.eq.s32.totalorder %s25, 0
      %p157 = por %p155, %p156
      %s159 = sadd.s32 %s158, 1
      %p162 = scmp.eq.s32.totalorder %s19, 1
      %p163 = scmp.ne.s32.totalorder %s158, %s160
      %p164 = scmp.eq.s32.totalorder %s19, 0
      %p165 = por %p163, %p164
      %p166 = scmp.ne.s32.totalorder %s158, %s160
      %p167 = scmp.eq.s32.totalorder %s24, 1
      %p168 = por %p166, %p167
      %p169 = scmp.ne.s32.totalorder %s160, %s161
      %p170 = scmp.eq.s32.totalorder %s24, 0
      %p171 = por %p169, %p170
      %p172 = scmp.ne.s32.totalorder %s160, %s161
      %p173 = scmp.eq.s32.totalorder %s25, 1
      %p174 = por %p172, %p173
      %p176 = scmp.ne.s32.totalorder %s161, %s175
      %p177 = scmp.eq.s32.totalorder %s25, 0
      %p178 = por %p176, %p177
      %s180 = sadd.s32 %s179, 1
      %p183 = scmp.eq.s32.totalorder %s19, 1
      %p184 = scmp.ne.s32.totalorder %s179, %s181
      %p185 = scmp.eq.s32.totalorder %s19, 0
      %p186 = por %p184, %p185
      %p187 = scmp.ne.s32.totalorder %s179, %s181
      %p188 = scmp.eq.s32.totalorder %s24, 1
      %p189 = por %p187, %p188
      %p190 = scmp.ne.s32.totalorder %s181, %s182
      %p191 = scmp.eq.s32.totalorder %s24, 0
      %p192 = por %p190, %p191
      %p193 = scmp.ne.s32.totalorder %s181, %s182
      %p194 = scmp.eq.s32.totalorder %s25, 1
      %p195 = por %p193, %p194
      %p197 = scmp.ne.s32.totalorder %s182, %s196
      %p198 = scmp.eq.s32.totalorder %s25, 0
      %p199 = por %p197, %p198
      %s201 = sadd.s32 %s200, 1
      %p204 = scmp.eq.s32.totalorder %s19, 1
      %p205 = scmp.ne.s32.totalorder %s200, %s202
      %p206 = scmp.eq.s32.totalorder %s19, 0
      %p207 = por %p205, %p206
      %p208 = scmp.ne.s32.totalorder %s200, %s202
      %p209 = scmp.eq.s32.totalorder %s24, 1
      %p210 = por %p208, %p209
      %p211 = scmp.ne.s32.totalorder %s202, %s203
      %p212 = scmp.eq.s32.totalorder %s24, 0
      %p213 = por %p211, %p212
      %p214 = scmp.ne.s32.totalorder %s202, %s203
      %p215 = scmp.eq.s32.totalorder %s25, 1
      %p216 = por %p214, %p215
      %p218 = scmp.ne.s32.totalorder %s203, %s217
      %p219 = scmp.eq.s32.totalorder %s25, 0
      %p220 = por %p218, %p219
      %s222 = sadd.s32 %s221, 1
      %p225 = scmp.eq.s32.totalorder %s19, 1
      %p226 = scmp.ne.s32.totalorder %s221, %s223
      %p227 = scmp.eq.s32.totalorder %s19, 0
      %p228 = por %p226, %p227
      %p229 = scmp.ne.s32.totalorder %s221, %s223
      %p230 = scmp.eq.s32.totalorder %s24, 1
      %p231 = por %p229, %p230
      %p232 = scmp.ne.s32.totalorder %s223, %s224
      %p233 = scmp.eq.s32.totalorder %s24, 0
      %p234 = por %p232, %p233
      %p235 = scmp.ne.s32.totalorder %s223, %s224
      %p236 = scmp.eq.s32.totalorder %s25, 1
      %p237 = por %p235, %p236
      %p239 = scmp.ne.s32.totalorder %s224, %s238
      %p240 = scmp.eq.s32.totalorder %s25, 0
      %p241 = por %p239, %p240
      %s242 = ssub.s32 %s19, %s26
      %p243 = scmp.eq.s32.totalorder %s242, 0
      %s245 = sadd.s32 %s244, 1
      %s246 = scalar_select %p243, %s244, %s245
      %p249 = pneg %p243
      %p250 = scmp.eq.s32.totalorder %s19, 1
      %p251 = por %p249, %p250
      %p252 = scmp.ne.s32.totalorder %s244, %s247
      %p253 = scmp.eq.s32.totalorder %s19, 0
      %p254 = por %p252, %p253
      %p255 = scmp.ne.s32.totalorder %s244, %s247
      %p256 = scmp.eq.s32.totalorder %s24, 1
      %p257 = por %p255, %p256
      %p258 = scmp.ne.s32.totalorder %s247, %s248
      %p259 = scmp.eq.s32.totalorder %s24, 0
      %p260 = por %p258, %p259
      %p261 = scmp.ne.s32.totalorder %s247, %s248
      %p262 = scmp.eq.s32.totalorder %s25, 1
      %p263 = por %p261, %p262
      %p265 = scmp.ne.s32.totalorder %s248, %s264
      %p266 = scmp.eq.s32.totalorder %s25, 0
      %p267 = por %p265, %p266
      %p268 = scmp.le.s32.totalorder 1, %s19
      %p269 = scmp.lt.s32.totalorder %s19, 3
      %p270 = pnand %p268, %p269
      %p271 = pneg %p270
      // Predicated region
      $region9: #{block_forward.1} parent=5 // pred_check
        _
      $region10: #{block_forward.1} parent=5 // pred_check_branch
        %273 = sbr.rel (%p270) target = $region12
      $region11: #{block_forward.1} parent=5 // pred_region
        %s274 = ssub.s32 %s19, 1
        // Predicated region
        $region13: #{block_forward.1} parent=11 // pred_check
          %p275 = pneg %p66
        $region14: #{block_forward.1} parent=11 // pred_check_branch
          %277 = sbr.rel (%p275) target = $region16
        $region15: #{block_forward.1} parent=11 // pred_region
          _
        $region16: #{block_forward.1} parent=11 // pred_fallthru
          _
        // Predicated region
        $region17: #{block_forward.1} parent=11 // pred_check
          %p278 = pneg %p87
        $region18: #{block_forward.1} parent=11 // pred_check_branch
          %280 = sbr.rel (%p278) target = $region20
        $region19: #{block_forward.1} parent=11 // pred_region
          _
        $region20: #{block_forward.1} parent=11 // pred_fallthru
          _
        // Predicated region
        $region21: #{block_forward.1} parent=11 // pred_check
          %p281 = pneg %p108
        $region22: #{block_forward.1} parent=11 // pred_check_branch
          %283 = sbr.rel (%p281) target = $region24
        $region23: #{block_forward.1} parent=11 // pred_region
          _
        $region24: #{block_forward.1} parent=11 // pred_fallthru
          _
        // Predicated region
        $region25: #{block_forward.1} parent=11 // pred_check
          %p284 = pneg %p129
        $region26: #{block_forward.1} parent=11 // pred_check_branch
          %286 = sbr.rel (%p284) target = $region28
        $region27: #{block_forward.1} parent=11 // pred_region
          _
        $region28: #{block_forward.1} parent=11 // pred_fallthru
          _
        // Predicated region
        $region29: #{block_forward.1} parent=11 // pred_check
          %p287 = pneg %p150
        $region30: #{block_forward.1} parent=11 // pred_check_branch
          %289 = sbr.rel (%p287) target = $region32
        $region31: #{block_forward.1} parent=11 // pred_region
          _
        $region32: #{block_forward.1} parent=11 // pred_fallthru
          _
        // Predicated region
        $region33: #{block_forward.1} parent=11 // pred_check
          %p290 = pneg %p171
        $region34: #{block_forward.1} parent=11 // pred_check_branch
          %292 = sbr.rel (%p290) target = $region36
        $region35: #{block_forward.1} parent=11 // pred_region
          _
        $region36: #{block_forward.1} parent=11 // pred_fallthru
          _
        // Predicated region
        $region37: #{block_forward.1} parent=11 // pred_check
          %p293 = pneg %p192
        $region38: #{block_forward.1} parent=11 // pred_check_branch
          %295 = sbr.rel (%p293) target = $region40
        $region39: #{block_forward.1} parent=11 // pred_region
          _
        $region40: #{block_forward.1} parent=11 // pred_fallthru
          _
        // Predicated region
        $region41: #{block_forward.1} parent=11 // pred_check
          %p296 = pneg %p213
        $region42: #{block_forward.1} parent=11 // pred_check_branch
          %298 = sbr.rel (%p296) target = $region44
        $region43: #{block_forward.1} parent=11 // pred_region
          _
        $region44: #{block_forward.1} parent=11 // pred_fallthru
          _
        // Predicated region
        $region45: #{block_forward.1} parent=11 // pred_check
          %p299 = pneg %p234
        $region46: #{block_forward.1} parent=11 // pred_check_branch
          %301 = sbr.rel (%p299) target = $region48
        $region47: #{block_forward.1} parent=11 // pred_region
          _
        $region48: #{block_forward.1} parent=11 // pred_fallthru
          _
      $region12: #{block_forward.1} parent=5 // pred_fallthru
        _
      %p302 = scmp.lt.s32.totalorder %s19, 2
      // Predicated region
      $region49: #{block_forward.1} parent=5 // pred_check
        %p303 = pneg %p302
      $region50: #{block_forward.1} parent=5 // pred_check_branch
        %305 = sbr.rel (%p303) target = $region52
      $region51: #{block_forward.1} parent=5 // pred_region
        // Predicated region
        $region53: #{block_forward.1} parent=51 // pred_check
          %p306 = pneg %p39
        $region54: #{block_forward.1} parent=51 // pred_check_branch
          %308 = sbr.rel (%p306) target = $region56
        $region55: #{block_forward.1} parent=51 // pred_region
          %p309 = scmp.lt.s32.totalorder %s19, 1
          %s310 = scalar_select %p309, %s19, 1
          %s311 = smul.addr %s310, 8
          %s312 = smul.addr %s311, 8
          %s313 = scalar_lea.vmem %s0, %s312
        $region56: #{block_forward.1} parent=51 // pred_fallthru
          _
      $region52: #{block_forward.1} parent=5 // pred_fallthru
        _
      %p314 = scmp.le.s32.totalorder 1, %s19
      %p315 = scmp.lt.s32.totalorder %s19, 3
      %p316 = pnand %p314, %p315
      %p317 = pneg %p316
      // Predicated region
      $region57: #{block_forward.1} parent=5 // pred_check
        _
      $region58: #{block_forward.1} parent=5 // pred_check_branch
        %319 = sbr.rel (%p316) target = $region60
      $region59: #{block_forward.1} parent=5 // pred_region
        %s320 = ssub.s32 %s19, 1
        %p321 = scmp.lt.s32.totalorder %s24, 1
        %s322 = scalar_select %p321, %s24, 1
        %s323 = smul.addr %s322, 8
        %s324 = smul.addr %s323, 8
        %s325 = scalar_lea.vmem %s0, %s324
        %p326 = pneg %p45
        %p327 = pneg %p42
        %p328 = pneg %p66
        %p329 = pneg %p63
        %p330 = pneg %p87
        %p331 = pneg %p84
        %p332 = pneg %p108
        %p333 = pneg %p105
        %p334 = pneg %p129
        %p335 = pneg %p126
        %p336 = pneg %p150
        %p337 = pneg %p147
        %p338 = pneg %p171
        %p339 = pneg %p168
        %p340 = pneg %p192
        %p341 = pneg %p189
        %p342 = pneg %p213
        %p343 = pneg %p210
        %p344 = pneg %p234
        %p345 = pneg %p231
        %p346 = pneg %p260
        %p347 = pneg %p257
        %s348 = sand.u32 %s247, 1
        %s349 = scalar_lea.sflag [#allocation4], %s348
        %s350 = sand.u32 %s247, 1
        %s351 = smul.addr %s350, 64
        %s352 = scalar_lea.vmem [#allocation3], %s351
        %p353 = scmp.lt.s32.totalorder %s24, 1
        %s354 = scalar_select %p353, %s24, 1
        %s355 = smul.addr %s354, 8
        %s356 = smul.addr %s355, 8
        %s357 = scalar_lea.vmem %s0, %s356
        %v359 = vld [vmem:[%s357] sm:$0xff]
        %v360 = vld [vmem:[%s357 + $0x8] sm:$0xff]
        %v361 = vld [vmem:[%s357 + $0x10] sm:$0xff]
        %v362 = vld [vmem:[%s357 + $0x18] sm:$0xff]
        %v363 = vld [vmem:[%s357 + $0x20] sm:$0xff]
        %v364 = vld [vmem:[%s357 + $0x28] sm:$0xff]
        %v365 = vld [vmem:[%s357 + $0x30] sm:$0xff]
        %v366 = vld [vmem:[%s357 + $0x38] sm:$0xff]
        %v367 = vld [vmem:[%s8] sm:$0x1]
        %v368 = vld [vmem:[%s8 + $0x1] sm:$0x1]
        %v369 = vld [vmem:[%s8 + $0x2] sm:$0x1]
        %v370 = vld [vmem:[%s8 + $0x3] sm:$0x1]
        %v371 = vld [vmem:[%s8 + $0x4] sm:$0x1]
        %v372 = vld [vmem:[%s8 + $0x5] sm:$0x1]
        %v373 = vld [vmem:[%s9] ss:$2 sm:$0x3]
        %s374 = scalar_lea.vmem %s9, 1
        %v375 = vld [vmem:[%s374] ss:$2 sm:$0x3]
        %vm376 = vcmask 523264
        %v377 = vsel %vm376, %v359, 0.0
        %378 = vadd.xlane.f32.xlu0 %v377
        %v379 = vpop.xlane.xlu0 %378
        %v380 = vsel %vm376, %v360, 0.0
        %381 = vadd.xlane.f32.xlu0 %v380
        %v382 = vpop.xlane.xlu0 %381
        %v383 = vsel %vm376, %v361, 0.0
        %384 = vadd.xlane.f32.xlu0 %v383
        %v385 = vpop.xlane.xlu0 %384
        %v386 = vsel %vm376, %v362, 0.0
        %387 = vadd.xlane.f32.xlu0 %v386
        %v388 = vpop.xlane.xlu0 %387
        %v389 = vsel %vm376, %v363, 0.0
        %390 = vadd.xlane.f32.xlu0 %v389
        %v391 = vpop.xlane.xlu0 %390
        %v392 = vsel %vm376, %v364, 0.0
        %393 = vadd.xlane.f32.xlu0 %v392
        %v394 = vpop.xlane.xlu0 %393
        %v395 = vsel %vm376, %v365, 0.0
        %396 = vadd.xlane.f32.xlu0 %v395
        %v397 = vpop.xlane.xlu0 %396
        %v398 = vsel %vm376, %v366, 0.0
        %399 = vadd.xlane.f32.xlu0 %v398
        %v400 = vpop.xlane.xlu0 %399
        %v401 = vrcp.pop 64.0
        %v402 = vmul.f32 64.0, %v401
        %v403 = vsub.f32 1.0, %v402
        %v404 = vmul.f32 %v401, %v403
        %v405 = vadd.f32 %v401, %v404
        %vm406 = vweird.f32 %v401
        %v407 = vsel %vm406, %v401, %v405
        %v408 = vmul.f32 %v379, %v407
        %v409 = vmul.f32 %v382, %v407
        %v410 = vmul.f32 %v385, %v407
        %v411 = vmul.f32 %v388, %v407
        %v412 = vmul.f32 %v391, %v407
        %v413 = vmul.f32 %v394, %v407
        %v414 = vmul.f32 %v397, %v407
        %v415 = vmul.f32 %v400, %v407
        %v416 = vsub.f32 %v359, %v408
        %v417 = vsub.f32 %v360, %v409
        %v418 = vsub.f32 %v361, %v410
        %v419 = vsub.f32 %v362, %v411
        %v420 = vsub.f32 %v363, %v412
        %v421 = vsub.f32 %v364, %v413
        %v422 = vsub.f32 %v365, %v414
        %v423 = vsub.f32 %v366, %v415
        %v424 = vmul.f32 %v416, %v416
        %v425 = vmul.f32 %v417, %v417
        %v426 = vmul.f32 %v418, %v418
        %v427 = vmul.f32 %v419, %v419
        %v428 = vmul.f32 %v420, %v420
        %v429 = vmul.f32 %v421, %v421
        %v430 = vmul.f32 %v422, %v422
        %v431 = vmul.f32 %v423, %v423
        %v432 = vsel %vm376, %v424, 0.0
        %433 = vadd.xlane.f32.xlu0 %v432
        %v434 = vpop.xlane.xlu0 %433
        %v435 = vsel %vm376, %v425, 0.0
        %436 = vadd.xlane.f32.xlu0 %v435
        %v437 = vpop.xlane.xlu0 %436
        %v438 = vsel %vm376, %v426, 0.0
        %439 = vadd.xlane.f32.xlu0 %v438
        %v440 = vpop.xlane.xlu0 %439
        %v441 = vsel %vm376, %v427, 0.0
        %442 = vadd.xlane.f32.xlu0 %v441
        %v443 = vpop.xlane.xlu0 %442
        %v444 = vsel %vm376, %v428, 0.0
        %445 = vadd.xlane.f32.xlu0 %v444
        %v446 = vpop.xlane.xlu0 %445
        %v447 = vsel %vm376, %v429, 0.0
        %448 = vadd.xlane.f32.xlu0 %v447
        %v449 = vpop.xlane.xlu0 %448
        %v450 = vsel %vm376, %v430, 0.0
        %451 = vadd.xlane.f32.xlu0 %v450
        %v452 = vpop.xlane.xlu0 %451
        %v453 = vsel %vm376, %v431, 0.0
        %454 = vadd.xlane.f32.xlu0 %v453
        %v455 = vpop.xlane.xlu0 %454
        %v456 = vmul.f32 %v434, %v407
        %v457 = vmul.f32 %v437, %v407
        %v458 = vmul.f32 %v440, %v407
        %v459 = vmul.f32 %v443, %v407
        %v460 = vmul.f32 %v446, %v407
        %v461 = vmul.f32 %v449, %v407
        %v462 = vmul.f32 %v452, %v407
        %v463 = vmul.f32 %v455, %v407
        %v464 = vadd.f32 %v456, 1e-05
        %v465 = vadd.f32 %v457, 1e-05
        %v466 = vadd.f32 %v458, 1e-05
        %v467 = vadd.f32 %v459, 1e-05
        %v468 = vadd.f32 %v460, 1e-05
        %v469 = vadd.f32 %v461, 1e-05
        %v470 = vadd.f32 %v462, 1e-05
        %v471 = vadd.f32 %v463, 1e-05
        %v472 = vrsqrt.pop %v464
        %v473 = vmul.f32 %v472, %v464
        %v474 = vmul.f32 %v473, %v472
        %v475 = vmul.f32 0.5, %v474
        %v476 = vsub.f32 1.5, %v475
        %v477 = vmul.f32 %v472, %v476
        %vm478 = vweird.f32 %v464
        %vm479 = vweird.f32 %v472
        %vm480 = vmor %vm478, %vm479
        %v481 = vsel %vm480, %v472, %v477
        %v482 = vrsqrt.pop %v465
        %v483 = vmul.f32 %v482, %v465
        %v484 = vmul.f32 %v483, %v482
        %v485 = vmul.f32 0.5, %v484
        %v486 = vsub.f32 1.5, %v485
        %v487 = vmul.f32 %v482, %v486
        %vm488 = vweird.f32 %v465
        %vm489 = vweird.f32 %v482
        %vm490 = vmor %vm488, %vm489
        %v491 = vsel %vm490, %v482, %v487
        %v492 = vrsqrt.pop %v466
        %v493 = vmul.f32 %v492, %v466
        %v494 = vmul.f32 %v493, %v492
        %v495 = vmul.f32 0.5, %v494
        %v496 = vsub.f32 1.5, %v495
        %v497 = vmul.f32 %v492, %v496
        %vm498 = vweird.f32 %v466
        %vm499 = vweird.f32 %v492
        %vm500 = vmor %vm498, %vm499
        %v501 = vsel %vm500, %v492, %v497
        %v502 = vrsqrt.pop %v467
        %v503 = vmul.f32 %v502, %v467
        %v504 = vmul.f32 %v503, %v502
        %v505 = vmul.f32 0.5, %v504
        %v506 = vsub.f32 1.5, %v505
        %v507 = vmul.f32 %v502, %v506
        %vm508 = vweird.f32 %v467
        %vm509 = vweird.f32 %v502
        %vm510 = vmor %vm508, %vm509
        %v511 = vsel %vm510, %v502, %v507
        %v512 = vrsqrt.pop %v468
        %v513 = vmul.f32 %v512, %v468
        %v514 = vmul.f32 %v513, %v512
        %v515 = vmul.f32 0.5, %v514
        %v516 = vsub.f32 1.5, %v515
        %v517 = vmul.f32 %v512, %v516
        %vm518 = vweird.f32 %v468
        %vm519 = vweird.f32 %v512
        %vm520 = vmor %vm518, %vm519
        %v521 = vsel %vm520, %v512, %v517
        %v522 = vrsqrt.pop %v469
        %v523 = vmul.f32 %v522, %v469
        %v524 = vmul.f32 %v523, %v522
        %v525 = vmul.f32 0.5, %v524
        %v526 = vsub.f32 1.5, %v525
        %v527 = vmul.f32 %v522, %v526
        %vm528 = vweird.f32 %v469
        %vm529 = vweird.f32 %v522
        %vm530 = vmor %vm528, %vm529
        %v531 = vsel %vm530, %v522, %v527
        %v532 = vrsqrt.pop %v470
        %v533 = vmul.f32 %v532, %v470
        %v534 = vmul.f32 %v533, %v532
        %v535 = vmul.f32 0.5, %v534
        %v536 = vsub.f32 1.5, %v535
        %v537 = vmul.f32 %v532, %v536
        %vm538 = vweird.f32 %v470
        %vm539 = vweird.f32 %v532
        %vm540 = vmor %vm538, %vm539
        %v541 = vsel %vm540, %v532, %v537
        %v542 = vrsqrt.pop %v471
        %v543 = vmul.f32 %v542, %v471
        %v544 = vmul.f32 %v543, %v542
        %v545 = vmul.f32 0.5, %v544
        %v546 = vsub.f32 1.5, %v545
        %v547 = vmul.f32 %v542, %v546
        %vm548 = vweird.f32 %v471
        %vm549 = vweird.f32 %v542
        %vm550 = vmor %vm548, %vm549
        %v551 = vsel %vm550, %v542, %v547
        %v552 = vmul.f32 %v416, %v481
        %v553 = vmul.f32 %v417, %v491
        %v554 = vmul.f32 %v418, %v501
        %v555 = vmul.f32 %v419, %v511
        %v556 = vmul.f32 %v420, %v521
        %v557 = vmul.f32 %v421, %v531
        %v558 = vmul.f32 %v422, %v541
        %v559 = vmul.f32 %v423, %v551
        %v560 = vperm.slane %v367, 0
        %v561 = vmul.f32 %v552, %v560
        %v562 = vmul.f32 %v553, %v560
        %v563 = vmul.f32 %v554, %v560
        %v564 = vmul.f32 %v555, %v560
        %v565 = vmul.f32 %v556, %v560
        %v566 = vmul.f32 %v557, %v560
        %v567 = vmul.f32 %v558, %v560
        %v568 = vmul.f32 %v559, %v560
        %v569 = vperm.slane %v368, 0
        %v570 = vadd.f32 %v561, %v569
        %v571 = vadd.f32 %v562, %v569
        %v572 = vadd.f32 %v563, %v569
        %v573 = vadd.f32 %v564, %v569
        %v574 = vadd.f32 %v565, %v569
        %v575 = vadd.f32 %v566, %v569
        %v576 = vadd.f32 %v567, %v569
        %v577 = vadd.f32 %v568, %v569
        %v578 = vpack.c.bf16 %v571, %v570
        %v579 = vpack.c.bf16 %v573, %v572
        %v580 = vpack.c.bf16 %v575, %v574
        %v581 = vpack.c.bf16 %v577, %v576
        %v582 = vld [vmem:[%s1] sm:$0xf]
        %v583 = vld [vmem:[%s1 + $0x4] sm:$0xf]
        %v584 = vld [vmem:[%s1 + $0x8] sm:$0xf]
        %v585 = vld [vmem:[%s1 + $0xc] sm:$0xf]
        %v586 = vld [vmem:[%s1 + $0x10] sm:$0xf]
        %v587 = vld [vmem:[%s1 + $0x14] sm:$0xf]
        %v588 = vld [vmem:[%s1 + $0x18] sm:$0xf]
        %v589 = vld [vmem:[%s1 + $0x1c] sm:$0xf]
        %v598 = vunpack.c.l.b16 %v582
        %v599 = vunpack.c.l.b16 %v583
        %v600 = vunpack.c.l.b16 %v584
        %v601 = vunpack.c.l.b16 %v585
        %v602 = vunpack.c.l.b16 %v586
        %v603 = vunpack.c.l.b16 %v587
        %v604 = vunpack.c.l.b16 %v588
        %v605 = vunpack.c.l.b16 %v589
        %v606 = vpack.c.b16 %v599, %v598
        %v607 = vpack.c.b16 %v601, %v600
        %v608 = vpack.c.b16 %v603, %v602
        %v609 = vpack.c.b16 %v605, %v604
        %v615 = vsel %vm376, %v578, 0
        %v618 = vsel %vm376, %v579, 0
        %v621 = vsel %vm376, %v580, 0
        %v624 = vsel %vm376, %v581, 0
        %626 = vmatpush.bf16.msra.mxu0 0
        %627 = vmatpush.bf16.msra.mxu0 0
        %628 = vmatpush.bf16.msra.mxu0 0
        %629 = vmatpush.bf16.msra.mxu0 0
        %630 = vmatpush.bf16.msra.mxu0 %v609
        %631 = vmatpush.bf16.msra.mxu0 %v608
        %632 = vmatpush.bf16.msra.mxu0 %v607
        %633 = vmatpush.bf16.msra.mxu0 %v606
        %634 = vmatmul.bf16.gmra.mxu0 %v615
        %v635 = vpop.f32.mrf.mxu0
        %v636 = vadd.f32 0.0, %v635
        %v637 = vpop.f32.mrf.mxu0
        %v638 = vadd.f32 0.0, %v637
        %639 = vmatmul.bf16.gmra.mxu0 %v618
        %v640 = vpop.f32.mrf.mxu0
        %v641 = vadd.f32 0.0, %v640
        %v642 = vpop.f32.mrf.mxu0
        %v643 = vadd.f32 0.0, %v642
        %644 = vmatmul.bf16.gmra.mxu0 %v621
        %v645 = vpop.f32.mrf.mxu0
        %v646 = vadd.f32 0.0, %v645
        %v647 = vpop.f32.mrf.mxu0
        %v648 = vadd.f32 0.0, %v647
        %649 = vmatmul.bf16.gmra.mxu0 %v624
        %v650 = vpop.f32.mrf.mxu0
        %v651 = vadd.f32 0.0, %v650
        %v652 = vpop.f32.mrf.mxu0
        %v653 = vadd.f32 0.0, %v652
        %654 = vdwg.mxu0
        %v655 = vld [vmem:[%s2] sm:$0xf]
        %v656 = vld [vmem:[%s2 + $0x4] sm:$0xf]
        %v657 = vld [vmem:[%s2 + $0x8] sm:$0xf]
        %v658 = vld [vmem:[%s2 + $0xc] sm:$0xf]
        %v659 = vld [vmem:[%s2 + $0x10] sm:$0xf]
        %v660 = vld [vmem:[%s2 + $0x14] sm:$0xf]
        %v661 = vld [vmem:[%s2 + $0x18] sm:$0xf]
        %v662 = vld [vmem:[%s2 + $0x1c] sm:$0xf]
        %v671 = vunpack.c.l.b16 %v655
        %v672 = vunpack.c.l.b16 %v656
        %v673 = vunpack.c.l.b16 %v657
        %v674 = vunpack.c.l.b16 %v658
        %v675 = vunpack.c.l.b16 %v659
        %v676 = vunpack.c.l.b16 %v660
        %v677 = vunpack.c.l.b16 %v661
        %v678 = vunpack.c.l.b16 %v662
        %v679 = vpack.c.b16 %v672, %v671
        %v680 = vpack.c.b16 %v674, %v673
        %v681 = vpack.c.b16 %v676, %v675
        %v682 = vpack.c.b16 %v678, %v677
        %687 = vmatpush.bf16.msra.mxu0 0
        %688 = vmatpush.bf16.msra.mxu0 0
        %689 = vmatpush.bf16.msra.mxu0 0
        %690 = vmatpush.bf16.msra.mxu0 0
        %691 = vmatpush.bf16.msra.mxu0 %v682
        %692 = vmatpush.bf16.msra.mxu0 %v681
        %693 = vmatpush.bf16.msra.mxu0 %v680
        %694 = vmatpush.bf16.msra.mxu0 %v679
        %695 = vmatmul.bf16.gmra.mxu0 %v615
        %v696 = vpop.f32.mrf.mxu0
        %v697 = vadd.f32 0.0, %v696
        %v698 = vpop.f32.mrf.mxu0
        %v699 = vadd.f32 0.0, %v698
        %700 = vmatmul.bf16.gmra.mxu0 %v618
        %v701 = vpop.f32.mrf.mxu0
        %v702 = vadd.f32 0.0, %v701
        %v703 = vpop.f32.mrf.mxu0
        %v704 = vadd.f32 0.0, %v703
        %705 = vmatmul.bf16.gmra.mxu0 %v621
        %v706 = vpop.f32.mrf.mxu0
        %v707 = vadd.f32 0.0, %v706
        %v708 = vpop.f32.mrf.mxu0
        %v709 = vadd.f32 0.0, %v708
        %710 = vmatmul.bf16.gmra.mxu0 %v624
        %v711 = vpop.f32.mrf.mxu0
        %v712 = vadd.f32 0.0, %v711
        %v713 = vpop.f32.mrf.mxu0
        %v714 = vadd.f32 0.0, %v713
        %715 = vdwg.mxu0
        %v716 = vld [vmem:[%s3] sm:$0xf]
        %v717 = vld [vmem:[%s3 + $0x4] sm:$0xf]
        %v718 = vld [vmem:[%s3 + $0x8] sm:$0xf]
        %v719 = vld [vmem:[%s3 + $0xc] sm:$0xf]
        %v720 = vld [vmem:[%s3 + $0x10] sm:$0xf]
        %v721 = vld [vmem:[%s3 + $0x14] sm:$0xf]
        %v722 = vld [vmem:[%s3 + $0x18] sm:$0xf]
        %v723 = vld [vmem:[%s3 + $0x1c] sm:$0xf]
        %v732 = vunpack.c.l.b16 %v716
        %v733 = vunpack.c.l.b16 %v717
        %v734 = vunpack.c.l.b16 %v718
        %v735 = vunpack.c.l.b16 %v719
        %v736 = vunpack.c.l.b16 %v720
        %v737 = vunpack.c.l.b16 %v721
        %v738 = vunpack.c.l.b16 %v722
        %v739 = vunpack.c.l.b16 %v723
        %v740 = vpack.c.b16 %v733, %v732
        %v741 = vpack.c.b16 %v735, %v734
        %v742 = vpack.c.b16 %v737, %v736
        %v743 = vpack.c.b16 %v739, %v738
        %748 = vmatpush.bf16.msra.mxu0 0
        %749 = vmatpush.bf16.msra.mxu0 0
        %750 = vmatpush.bf16.msra.mxu0 0
        %751 = vmatpush.bf16.msra.mxu0 0
        %752 = vmatpush.bf16.msra.mxu0 %v743
        %753 = vmatpush.bf16.msra.mxu0 %v742
        %754 = vmatpush.bf16.msra.mxu0 %v741
        %755 = vmatpush.bf16.msra.mxu0 %v740
        %756 = vmatmul.bf16.gmra.mxu0 %v615
        %v757 = vpop.f32.mrf.mxu0
        %v758 = vadd.f32 0.0, %v757
        %v759 = vpop.f32.mrf.mxu0
        %v760 = vadd.f32 0.0, %v759
        %761 = vmatmul.bf16.gmra.mxu0 %v618
        %v762 = vpop.f32.mrf.mxu0
        %v763 = vadd.f32 0.0, %v762
        %v764 = vpop.f32.mrf.mxu0
        %v765 = vadd.f32 0.0, %v764
        %766 = vmatmul.bf16.gmra.mxu0 %v621
        %v767 = vpop.f32.mrf.mxu0
        %v768 = vadd.f32 0.0, %v767
        %v769 = vpop.f32.mrf.mxu0
        %v770 = vadd.f32 0.0, %v769
        %771 = vmatmul.bf16.gmra.mxu0 %v624
        %v772 = vpop.f32.mrf.mxu0
        %v773 = vadd.f32 0.0, %v772
        %v774 = vpop.f32.mrf.mxu0
        %v775 = vadd.f32 0.0, %v774
        %776 = vdwg.mxu0
        %v777 = vpack.c.bf16 %v638, %v636
        %v778 = vpack.c.bf16 %v643, %v641
        %v779 = vpack.c.bf16 %v648, %v646
        %v780 = vpack.c.bf16 %v653, %v651
        %v781 = vpack.c.bf16 %v699, %v697
        %v782 = vpack.c.bf16 %v704, %v702
        %v783 = vpack.c.bf16 %v709, %v707
        %v784 = vpack.c.bf16 %v714, %v712
        %vm785 = vcmask 130048
        %v787 = vsel %vm785, %v777, 0
        %v790 = vsel %vm785, %v778, 0
        %v793 = vsel %vm785, %v779, 0
        %v796 = vsel %vm785, %v780, 0
        %v799 = vsel %vm785, %v781, 0
        %v802 = vsel %vm785, %v782, 0
        %v805 = vsel %vm785, %v783, 0
        %v808 = vsel %vm785, %v784, 0
        %810 = vmatpush.bf16.xpose.msra.mxu0 0
        %811 = vmatpush.bf16.xpose.msra.mxu0 0
        %812 = vmatpush.bf16.xpose.msra.mxu0 0
        %813 = vmatpush.bf16.xpose.msra.mxu0 0
        %814 = vmatpush.bf16.xpose.msra.mxu0 %v808
        %815 = vmatpush.bf16.xpose.msra.mxu0 %v805
        %816 = vmatpush.bf16.xpose.msra.mxu0 %v802
        %817 = vmatpush.bf16.xpose.msra.mxu0 %v799
        %818 = vmatmul.bf16.gmra.mxu0 %v787
        %v819 = vpop.f32.mrf.mxu0
        %v820 = vadd.f32 0.0, %v819
        %v821 = vpop.f32.mrf.mxu0
        %v822 = vadd.f32 0.0, %v821
        %823 = vmatmul.bf16.gmra.mxu0 %v790
        %v824 = vpop.f32.mrf.mxu0
        %v825 = vadd.f32 0.0, %v824
        %v826 = vpop.f32.mrf.mxu0
        %v827 = vadd.f32 0.0, %v826
        %828 = vmatmul.bf16.gmra.mxu0 %v793
        %v829 = vpop.f32.mrf.mxu0
        %v830 = vadd.f32 0.0, %v829
        %v831 = vpop.f32.mrf.mxu0
        %v832 = vadd.f32 0.0, %v831
        %833 = vmatmul.bf16.gmra.mxu0 %v796
        %v834 = vpop.f32.mrf.mxu0
        %v835 = vadd.f32 0.0, %v834
        %v836 = vpop.f32.mrf.mxu0
        %v837 = vadd.f32 0.0, %v836
        %838 = vdwg.mxu0
        %v839 = vsel %vm376, %v820, -inf
        %840 = vmax.xlane.f32.xlu0 %v839
        %v841 = vpop.xlane.xlu0 %840
        %v842 = vsel %vm376, %v822, -inf
        %843 = vmax.xlane.f32.xlu0 %v842
        %v844 = vpop.xlane.xlu0 %843
        %v845 = vsel %vm376, %v825, -inf
        %846 = vmax.xlane.f32.xlu0 %v845
        %v847 = vpop.xlane.xlu0 %846
        %v848 = vsel %vm376, %v827, -inf
        %849 = vmax.xlane.f32.xlu0 %v848
        %v850 = vpop.xlane.xlu0 %849
        %v851 = vsel %vm376, %v830, -inf
        %852 = vmax.xlane.f32.xlu0 %v851
        %v853 = vpop.xlane.xlu0 %852
        %v854 = vsel %vm376, %v832, -inf
        %855 = vmax.xlane.f32.xlu0 %v854
        %v856 = vpop.xlane.xlu0 %855
        %v857 = vsel %vm376, %v835, -inf
        %858 = vmax.xlane.f32.xlu0 %v857
        %v859 = vpop.xlane.xlu0 %858
        %v860 = vsel %vm376, %v837, -inf
        %861 = vmax.xlane.f32.xlu0 %v860
        %v862 = vpop.xlane.xlu0 %861
        %v863 = vsub.f32 %v820, %v841
        %v864 = vsub.f32 %v822, %v844
        %v865 = vsub.f32 %v825, %v847
        %v866 = vsub.f32 %v827, %v850
        %v867 = vsub.f32 %v830, %v853
        %v868 = vsub.f32 %v832, %v856
        %v869 = vsub.f32 %v835, %v859
        %v870 = vsub.f32 %v837, %v862
        %v871 = vmul.f32 %v863, 1.442695
        %v872 = vpow.pop %v871
        %v873 = vmul.f32 %v864, 1.442695
        %v874 = vpow.pop %v873
        %v875 = vmul.f32 %v865, 1.442695
        %v876 = vpow.pop %v875
        %v877 = vmul.f32 %v866, 1.442695
        %v878 = vpow.pop %v877
        %v879 = vmul.f32 %v867, 1.442695
        %v880 = vpow.pop %v879
        %v881 = vmul.f32 %v868, 1.442695
        %v882 = vpow.pop %v881
        %v883 = vmul.f32 %v869, 1.442695
        %v884 = vpow.pop %v883
        %v885 = vmul.f32 %v870, 1.442695
        %v886 = vpow.pop %v885
        %v887 = vsel %vm376, %v872, 0.0
        %888 = vadd.xlane.f32.xlu0 %v887
        %v889 = vpop.xlane.xlu0 %888
        %v890 = vsel %vm376, %v874, 0.0
        %891 = vadd.xlane.f32.xlu0 %v890
        %v892 = vpop.xlane.xlu0 %891
        %v893 = vsel %vm376, %v876, 0.0
        %894 = vadd.xlane.f32.xlu0 %v893
        %v895 = vpop.xlane.xlu0 %894
        %v896 = vsel %vm376, %v878, 0.0
        %897 = vadd.xlane.f32.xlu0 %v896
        %v898 = vpop.xlane.xlu0 %897
        %v899 = vsel %vm376, %v880, 0.0
        %900 = vadd.xlane.f32.xlu0 %v899
        %v901 = vpop.xlane.xlu0 %900
        %v902 = vsel %vm376, %v882, 0.0
        %903 = vadd.xlane.f32.xlu0 %v902
        %v904 = vpop.xlane.xlu0 %903
        %v905 = vsel %vm376, %v884, 0.0
        %906 = vadd.xlane.f32.xlu0 %v905
        %v907 = vpop.xlane.xlu0 %906
        %v908 = vsel %vm376, %v886, 0.0
        %909 = vadd.xlane.f32.xlu0 %v908
        %v910 = vpop.xlane.xlu0 %909
        %v911 = vrcp.pop %v889
        %v912 = vrcp.pop %v892
        %v913 = vrcp.pop %v895
        %v914 = vrcp.pop %v898
        %v915 = vrcp.pop %v901
        %v916 = vrcp.pop %v904
        %v917 = vrcp.pop %v907
        %v918 = vrcp.pop %v910
        %v919 = vmul.f32 %v872, %v911
        %v920 = vmul.f32 %v874, %v912
        %v921 = vmul.f32 %v876, %v913
        %v922 = vmul.f32 %v878, %v914
        %v923 = vmul.f32 %v880, %v915
        %v924 = vmul.f32 %v882, %v916
        %v925 = vmul.f32 %v884, %v917
        %v926 = vmul.f32 %v886, %v918
        %v927 = vpack.c.bf16 %v920, %v919
        %v928 = vpack.c.bf16 %v922, %v921
        %v929 = vpack.c.bf16 %v924, %v923
        %v930 = vpack.c.bf16 %v926, %v925
        %v931 = vpack.c.bf16 %v760, %v758
        %v932 = vpack.c.bf16 %v765, %v763
        %v933 = vpack.c.bf16 %v770, %v768
        %v934 = vpack.c.bf16 %v775, %v773
        %v936 = vsel %vm376, %v927, 0
        %v939 = vsel %vm376, %v928, 0
        %v942 = vsel %vm376, %v929, 0
        %v945 = vsel %vm376, %v930, 0
        %947 = vmatpush.bf16.msra.mxu0 0
        %948 = vmatpush.bf16.msra.mxu0 0
        %949 = vmatpush.bf16.msra.mxu0 0
        %950 = vmatpush.bf16.msra.mxu0 0
        %951 = vmatpush.bf16.msra.mxu0 %v934
        %952 = vmatpush.bf16.msra.mxu0 %v933
        %953 = vmatpush.bf16.msra.mxu0 %v932
        %954 = vmatpush.bf16.msra.mxu0 %v931
        %955 = vmatmul.bf16.gmra.mxu0 %v936
        %v956 = vpop.f32.mrf.mxu0
        %v957 = vadd.f32 0.0, %v956
        %v958 = vpop.f32.mrf.mxu0
        %v959 = vadd.f32 0.0, %v958
        %960 = vmatmul.bf16.gmra.mxu0 %v939
        %v961 = vpop.f32.mrf.mxu0
        %v962 = vadd.f32 0.0, %v961
        %v963 = vpop.f32.mrf.mxu0
        %v964 = vadd.f32 0.0, %v963
        %965 = vmatmul.bf16.gmra.mxu0 %v942
        %v966 = vpop.f32.mrf.mxu0
        %v967 = vadd.f32 0.0, %v966
        %v968 = vpop.f32.mrf.mxu0
        %v969 = vadd.f32 0.0, %v968
        %970 = vmatmul.bf16.gmra.mxu0 %v945
        %v971 = vpop.f32.mrf.mxu0
        %v972 = vadd.f32 0.0, %v971
        %v973 = vpop.f32.mrf.mxu0
        %v974 = vadd.f32 0.0, %v973
        %975 = vdwg.mxu0
        %v976 = vpack.c.bf16 %v959, %v957
        %v977 = vpack.c.bf16 %v964, %v962
        %v978 = vpack.c.bf16 %v969, %v967
        %v979 = vpack.c.bf16 %v974, %v972
        %v980 = vld [vmem:[%s4] sm:$0xf]
        %v981 = vld [vmem:[%s4 + $0x4] sm:$0xf]
        %s982 = scalar_lea.vmem %s1, 32
        %v983 = vld [vmem:[%s982] sm:$0xf]
        %v984 = vld [vmem:[%s982 + $0x4] sm:$0xf]
        %v985 = vld [vmem:[%s982 + $0x8] sm:$0xf]
        %v986 = vld [vmem:[%s982 + $0xc] sm:$0xf]
        %v987 = vld [vmem:[%s982 + $0x10] sm:$0xf]
        %v988 = vld [vmem:[%s982 + $0x14] sm:$0xf]
        %v989 = vld [vmem:[%s982 + $0x18] sm:$0xf]
        %v990 = vld [vmem:[%s982 + $0x1c] sm:$0xf]
        %v999 = vunpack.c.l.b16 %v983
        %v1000 = vunpack.c.l.b16 %v984
        %v1001 = vunpack.c.l.b16 %v985
        %v1002 = vunpack.c.l.b16 %v986
        %v1003 = vunpack.c.l.b16 %v987
        %v1004 = vunpack.c.l.b16 %v988
        %v1005 = vunpack.c.l.b16 %v989
        %v1006 = vunpack.c.l.b16 %v990
        %v1007 = vpack.c.b16 %v1000, %v999
        %v1008 = vpack.c.b16 %v1002, %v1001
        %v1009 = vpack.c.b16 %v1004, %v1003
        %v1010 = vpack.c.b16 %v1006, %v1005
        %1015 = vmatpush.bf16.msra.mxu0 0
        %1016 = vmatpush.bf16.msra.mxu0 0
        %1017 = vmatpush.bf16.msra.mxu0 0
        %1018 = vmatpush.bf16.msra.mxu0 0
        %1019 = vmatpush.bf16.msra.mxu0 %v1010
        %1020 = vmatpush.bf16.msra.mxu0 %v1009
        %1021 = vmatpush.bf16.msra.mxu0 %v1008
        %1022 = vmatpush.bf16.msra.mxu0 %v1007
        %1023 = vmatmul.bf16.gmra.mxu0 %v615
        %v1024 = vpop.f32.mrf.mxu0
        %v1025 = vadd.f32 0.0, %v1024
        %v1026 = vpop.f32.mrf.mxu0
        %v1027 = vadd.f32 0.0, %v1026
        %1028 = vmatmul.bf16.gmra.mxu0 %v618
        %v1029 = vpop.f32.mrf.mxu0
        %v1030 = vadd.f32 0.0, %v1029
        %v1031 = vpop.f32.mrf.mxu0
        %v1032 = vadd.f32 0.0, %v1031
        %1033 = vmatmul.bf16.gmra.mxu0 %v621
        %v1034 = vpop.f32.mrf.mxu0
        %v1035 = vadd.f32 0.0, %v1034
        %v1036 = vpop.f32.mrf.mxu0
        %v1037 = vadd.f32 0.0, %v1036
        %1038 = vmatmul.bf16.gmra.mxu0 %v624
        %v1039 = vpop.f32.mrf.mxu0
        %v1040 = vadd.f32 0.0, %v1039
        %v1041 = vpop.f32.mrf.mxu0
        %v1042 = vadd.f32 0.0, %v1041
        %1043 = vdwg.mxu0
        %s1044 = scalar_lea.vmem %s2, 32
        %v1045 = vld [vmem:[%s1044] sm:$0xf]
        %v1046 = vld [vmem:[%s1044 + $0x4] sm:$0xf]
        %v1047 = vld [vmem:[%s1044 + $0x8] sm:$0xf]
        %v1048 = vld [vmem:[%s1044 + $0xc] sm:$0xf]
        %v1049 = vld [vmem:[%s1044 + $0x10] sm:$0xf]
        %v1050 = vld [vmem:[%s1044 + $0x14] sm:$0xf]
        %v1051 = vld [vmem:[%s1044 + $0x18] sm:$0xf]
        %v1052 = vld [vmem:[%s1044 + $0x1c] sm:$0xf]
        %v1061 = vunpack.c.l.b16 %v1045
        %v1062 = vunpack.c.l.b16 %v1046
        %v1063 = vunpack.c.l.b16 %v1047
        %v1064 = vunpack.c.l.b16 %v1048
        %v1065 = vunpack.c.l.b16 %v1049
        %v1066 = vunpack.c.l.b16 %v1050
        %v1067 = vunpack.c.l.b16 %v1051
        %v1068 = vunpack.c.l.b16 %v1052
        %v1069 = vpack.c.b16 %v1062, %v1061
        %v1070 = vpack.c.b16 %v1064, %v1063
        %v1071 = vpack.c.b16 %v1066, %v1065
        %v1072 = vpack.c.b16 %v1068, %v1067
        %1077 = vmatpush.bf16.msra.mxu0 0
        %1078 = vmatpush.bf16.msra.mxu0 0
        %1079 = vmatpush.bf16.msra.mxu0 0
        %1080 = vmatpush.bf16.msra.mxu0 0
        %1081 = vmatpush.bf16.msra.mxu0 %v1072
        %1082 = vmatpush.bf16.msra.mxu0 %v1071
        %1083 = vmatpush.bf16.msra.mxu0 %v1070
        %1084 = vmatpush.bf16.msra.mxu0 %v1069
        %1085 = vmatmul.bf16.gmra.mxu0 %v615
        %v1086 = vpop.f32.mrf.mxu0
        %v1087 = vadd.f32 0.0, %v1086
        %v1088 = vpop.f32.mrf.mxu0
        %v1089 = vadd.f32 0.0, %v1088
        %1090 = vmatmul.bf16.gmra.mxu0 %v618
        %v1091 = vpop.f32.mrf.mxu0
        %v1092 = vadd.f32 0.0, %v1091
        %v1093 = vpop.f32.mrf.mxu0
        %v1094 = vadd.f32 0.0, %v1093
        %1095 = vmatmul.bf16.gmra.mxu0 %v621
        %v1096 = vpop.f32.mrf.mxu0
        %v1097 = vadd.f32 0.0, %v1096
        %v1098 = vpop.f32.mrf.mxu0
        %v1099 = vadd.f32 0.0, %v1098
        %1100 = vmatmul.bf16.gmra.mxu0 %v624
        %v1101 = vpop.f32.mrf.mxu0
        %v1102 = vadd.f32 0.0, %v1101
        %v1103 = vpop.f32.mrf.mxu0
        %v1104 = vadd.f32 0.0, %v1103
        %1105 = vdwg.mxu0
        %s1106 = scalar_lea.vmem %s3, 32
        %v1107 = vld [vmem:[%s1106] sm:$0xf]
        %v1108 = vld [vmem:[%s1106 + $0x4] sm:$0xf]
        %v1109 = vld [vmem:[%s1106 + $0x8] sm:$0xf]
        %v1110 = vld [vmem:[%s1106 + $0xc] sm:$0xf]
        %v1111 = vld [vmem:[%s1106 + $0x10] sm:$0xf]
        %v1112 = vld [vmem:[%s1106 + $0x14] sm:$0xf]
        %v1113 = vld [vmem:[%s1106 + $0x18] sm:$0xf]
        %v1114 = vld [vmem:[%s1106 + $0x1c] sm:$0xf]
        %v1123 = vunpack.c.l.b16 %v1107
        %v1124 = vunpack.c.l.b16 %v1108
        %v1125 = vunpack.c.l.b16 %v1109
        %v1126 = vunpack.c.l.b16 %v1110
        %v1127 = vunpack.c.l.b16 %v1111
        %v1128 = vunpack.c.l.b16 %v1112
        %v1129 = vunpack.c.l.b16 %v1113
        %v1130 = vunpack.c.l.b16 %v1114
        %v1131 = vpack.c.b16 %v1124, %v1123
        %v1132 = vpack.c.b16 %v1126, %v1125
        %v1133 = vpack.c.b16 %v1128, %v1127
        %v1134 = vpack.c.b16 %v1130, %v1129
        %1139 = vmatpush.bf16.msra.mxu0 0
        %1140 = vmatpush.bf16.msra.mxu0 0
        %1141 = vmatpush.bf16.msra.mxu0 0
        %1142 = vmatpush.bf16.msra.mxu0 0
        %1143 = vmatpush.bf16.msra.mxu0 %v1134
        %1144 = vmatpush.bf16.msra.mxu0 %v1133
        %1145 = vmatpush.bf16.msra.mxu0 %v1132
        %1146 = vmatpush.bf16.msra.mxu0 %v1131
        %1147 = vmatmul.bf16.gmra.mxu0 %v615
        %v1148 = vpop.f32.mrf.mxu0
        %v1149 = vadd.f32 0.0, %v1148
        %v1150 = vpop.f32.mrf.mxu0
        %v1151 = vadd.f32 0.0, %v1150
        %1152 = vmatmul.bf16.gmra.mxu0 %v618
        %v1153 = vpop.f32.mrf.mxu0
        %v1154 = vadd.f32 0.0, %v1153
        %v1155 = vpop.f32.mrf.mxu0
        %v1156 = vadd.f32 0.0, %v1155
        %1157 = vmatmul.bf16.gmra.mxu0 %v621
        %v1158 = vpop.f32.mrf.mxu0
        %v1159 = vadd.f32 0.0, %v1158
        %v1160 = vpop.f32.mrf.mxu0
        %v1161 = vadd.f32 0.0, %v1160
        %1162 = vmatmul.bf16.gmra.mxu0 %v624
        %v1163 = vpop.f32.mrf.mxu0
        %v1164 = vadd.f32 0.0, %v1163
        %v1165 = vpop.f32.mrf.mxu0
        %v1166 = vadd.f32 0.0, %v1165
        %1167 = vdwg.mxu0
        %v1168 = vpack.c.bf16 %v1027, %v1025
        %v1169 = vpack.c.bf16 %v1032, %v1030
        %v1170 = vpack.c.bf16 %v1037, %v1035
        %v1171 = vpack.c.bf16 %v1042, %v1040
        %v1172 = vpack.c.bf16 %v1089, %v1087
        %v1173 = vpack.c.bf16 %v1094, %v1092
        %v1174 = vpack.c.bf16 %v1099, %v1097
        %v1175 = vpack.c.bf16 %v1104, %v1102
        %v1177 = vsel %vm785, %v1168, 0
        %v1180 = vsel %vm785, %v1169, 0
        %v1183 = vsel %vm785, %v1170, 0
        %v1186 = vsel %vm785, %v1171, 0
        %v1189 = vsel %vm785, %v1172, 0
        %v1192 = vsel %vm785, %v1173, 0
        %v1195 = vsel %vm785, %v1174, 0
        %v1198 = vsel %vm785, %v1175, 0
        %1200 = vmatpush.bf16.xpose.msra.mxu0 0
        %1201 = vmatpush.bf16.xpose.msra.mxu0 0
        %1202 = vmatpush.bf16.xpose.msra.mxu0 0
        %1203 = vmatpush.bf16.xpose.msra.mxu0 0
        %1204 = vmatpush.bf16.xpose.msra.mxu0 %v1198
        %1205 = vmatpush.bf16.xpose.msra.mxu0 %v1195
        %1206 = vmatpush.bf16.xpose.msra.mxu0 %v1192
        %1207 = vmatpush.bf16.xpose.msra.mxu0 %v1189
        %1208 = vmatmul.bf16.gmra.mxu0 %v1177
        %v1209 = vpop.f32.mrf.mxu0
        %v1210 = vadd.f32 0.0, %v1209
        %v1211 = vpop.f32.mrf.mxu0
        %v1212 = vadd.f32 0.0, %v1211
        %1213 = vmatmul.bf16.gmra.mxu0 %v1180
        %v1214 = vpop.f32.mrf.mxu0
        %v1215 = vadd.f32 0.0, %v1214
        %v1216 = vpop.f32.mrf.mxu0
        %v1217 = vadd.f32 0.0, %v1216
        %1218 = vmatmul.bf16.gmra.mxu0 %v1183
        %v1219 = vpop.f32.mrf.mxu0
        %v1220 = vadd.f32 0.0, %v1219
        %v1221 = vpop.f32.mrf.mxu0
        %v1222 = vadd.f32 0.0, %v1221
        %1223 = vmatmul.bf16.gmra.mxu0 %v1186
        %v1224 = vpop.f32.mrf.mxu0
        %v1225 = vadd.f32 0.0, %v1224
        %v1226 = vpop.f32.mrf.mxu0
        %v1227 = vadd.f32 0.0, %v1226
        %1228 = vdwg.mxu0
        %v1229 = vsel %vm376, %v1210, -inf
        %1230 = vmax.xlane.f32.xlu0 %v1229
        %v1231 = vpop.xlane.xlu0 %1230
        %v1232 = vsel %vm376, %v1212, -inf
        %1233 = vmax.xlane.f32.xlu0 %v1232
        %v1234 = vpop.xlane.xlu0 %1233
        %v1235 = vsel %vm376, %v1215, -inf
        %1236 = vmax.xlane.f32.xlu0 %v1235
        %v1237 = vpop.xlane.xlu0 %1236
        %v1238 = vsel %vm376, %v1217, -inf
        %1239 = vmax.xlane.f32.xlu0 %v1238
        %v1240 = vpop.xlane.xlu0 %1239
        %v1241 = vsel %vm376, %v1220, -inf
        %1242 = vmax.xlane.f32.xlu0 %v1241
        %v1243 = vpop.xlane.xlu0 %1242
        %v1244 = vsel %vm376, %v1222, -inf
        %1245 = vmax.xlane.f32.xlu0 %v1244
        %v1246 = vpop.xlane.xlu0 %1245
        %v1247 = vsel %vm376, %v1225, -inf
        %1248 = vmax.xlane.f32.xlu0 %v1247
        %v1249 = vpop.xlane.xlu0 %1248
        %v1250 = vsel %vm376, %v1227, -inf
        %1251 = vmax.xlane.f32.xlu0 %v1250
        %v1252 = vpop.xlane.xlu0 %1251
        %v1253 = vsub.f32 %v1210, %v1231
        %v1254 = vsub.f32 %v1212, %v1234
        %v1255 = vsub.f32 %v1215, %v1237
        %v1256 = vsub.f32 %v1217, %v1240
        %v1257 = vsub.f32 %v1220, %v1243
        %v1258 = vsub.f32 %v1222, %v1246
        %v1259 = vsub.f32 %v1225, %v1249
        %v1260 = vsub.f32 %v1227, %v1252
        %v1261 = vmul.f32 %v1253, 1.442695
        %v1262 = vpow.pop %v1261
        %v1263 = vmul.f32 %v1254, 1.442695
        %v1264 = vpow.pop %v1263
        %v1265 = vmul.f32 %v1255, 1.442695
        %v1266 = vpow.pop %v1265
        %v1267 = vmul.f32 %v1256, 1.442695
        %v1268 = vpow.pop %v1267
        %v1269 = vmul.f32 %v1257, 1.442695
        %v1270 = vpow.pop %v1269
        %v1271 = vmul.f32 %v1258, 1.442695
        %v1272 = vpow.pop %v1271
        %v1273 = vmul.f32 %v1259, 1.442695
        %v1274 = vpow.pop %v1273
        %v1275 = vmul.f32 %v1260, 1.442695
        %v1276 = vpow.pop %v1275
        %v1277 = vsel %vm376, %v1262, 0.0
        %1278 = vadd.xlane.f32.xlu0 %v1277
        %v1279 = vpop.xlane.xlu0 %1278
        %v1280 = vsel %vm376, %v1264, 0.0
        %1281 = vadd.xlane.f32.xlu0 %v1280
        %v1282 = vpop.xlane.xlu0 %1281
        %v1283 = vsel %vm376, %v1266, 0.0
        %1284 = vadd.xlane.f32.xlu0 %v1283
        %v1285 = vpop.xlane.xlu0 %1284
        %v1286 = vsel %vm376, %v1268, 0.0
        %1287 = vadd.xlane.f32.xlu0 %v1286
        %v1288 = vpop.xlane.xlu0 %1287
        %v1289 = vsel %vm376, %v1270, 0.0
        %1290 = vadd.xlane.f32.xlu0 %v1289
        %v1291 = vpop.xlane.xlu0 %1290
        %v1292 = vsel %vm376, %v1272, 0.0
        %1293 = vadd.xlane.f32.xlu0 %v1292
        %v1294 = vpop.xlane.xlu0 %1293
        %v1295 = vsel %vm376, %v1274, 0.0
        %1296 = vadd.xlane.f32.xlu0 %v1295
        %v1297 = vpop.xlane.xlu0 %1296
        %v1298 = vsel %vm376, %v1276, 0.0
        %1299 = vadd.xlane.f32.xlu0 %v1298
        %v1300 = vpop.xlane.xlu0 %1299
        %v1301 = vrcp.pop %v1279
        %v1302 = vrcp.pop %v1282
        %v1303 = vrcp.pop %v1285
        %v1304 = vrcp.pop %v1288
        %v1305 = vrcp.pop %v1291
        %v1306 = vrcp.pop %v1294
        %v1307 = vrcp.pop %v1297
        %v1308 = vrcp.pop %v1300
        %v1309 = vmul.f32 %v1262, %v1301
        %v1310 = vmul.f32 %v1264, %v1302
        %v1311 = vmul.f32 %v1266, %v1303
        %v1312 = vmul.f32 %v1268, %v1304
        %v1313 = vmul.f32 %v1270, %v1305
        %v1314 = vmul.f32 %v1272, %v1306
        %v1315 = vmul.f32 %v1274, %v1307
        %v1316 = vmul.f32 %v1276, %v1308
        %v1317 = vpack.c.bf16 %v1310, %v1309
        %v1318 = vpack.c.bf16 %v1312, %v1311
        %v1319 = vpack.c.bf16 %v1314, %v1313
        %v1320 = vpack.c.bf16 %v1316, %v1315
        %v1321 = vpack.c.bf16 %v1151, %v1149
        %v1322 = vpack.c.bf16 %v1156, %v1154
        %v1323 = vpack.c.bf16 %v1161, %v1159
        %v1324 = vpack.c.bf16 %v1166, %v1164
        %v1326 = vsel %vm376, %v1317, 0
        %v1329 = vsel %vm376, %v1318, 0
        %v1332 = vsel %vm376, %v1319, 0
        %v1335 = vsel %vm376, %v1320, 0
        %1337 = vmatpush.bf16.msra.mxu0 0
        %1338 = vmatpush.bf16.msra.mxu0 0
        %1339 = vmatpush.bf16.msra.mxu0 0
        %1340 = vmatpush.bf16.msra.mxu0 0
        %1341 = vmatpush.bf16.msra.mxu0 %v1324
        %1342 = vmatpush.bf16.msra.mxu0 %v1323
        %1343 = vmatpush.bf16.msra.mxu0 %v1322
        %1344 = vmatpush.bf16.msra.mxu0 %v1321
        %1345 = vmatmul.bf16.gmra.mxu0 %v1326
        %v1346 = vpop.f32.mrf.mxu0
        %v1347 = vadd.f32 0.0, %v1346
        %v1348 = vpop.f32.mrf.mxu0
        %v1349 = vadd.f32 0.0, %v1348
        %1350 = vmatmul.bf16.gmra.mxu0 %v1329
        %v1351 = vpop.f32.mrf.mxu0
        %v1352 = vadd.f32 0.0, %v1351
        %v1353 = vpop.f32.mrf.mxu0
        %v1354 = vadd.f32 0.0, %v1353
        %1355 = vmatmul.bf16.gmra.mxu0 %v1332
        %v1356 = vpop.f32.mrf.mxu0
        %v1357 = vadd.f32 0.0, %v1356
        %v1358 = vpop.f32.mrf.mxu0
        %v1359 = vadd.f32 0.0, %v1358
        %1360 = vmatmul.bf16.gmra.mxu0 %v1335
        %v1361 = vpop.f32.mrf.mxu0
        %v1362 = vadd.f32 0.0, %v1361
        %v1363 = vpop.f32.mrf.mxu0
        %v1364 = vadd.f32 0.0, %v1363
        %1365 = vdwg.mxu0
        %v1366 = vpack.c.bf16 %v1349, %v1347
        %v1367 = vpack.c.bf16 %v1354, %v1352
        %v1368 = vpack.c.bf16 %v1359, %v1357
        %v1369 = vpack.c.bf16 %v1364, %v1362
        %s1370 = scalar_lea.vmem %s4, 8
        %v1371 = vld [vmem:[%s1370] sm:$0xf]
        %v1372 = vld [vmem:[%s1370 + $0x4] sm:$0xf]
        %v1375 = vunpack.c.l.b16 %v1371
        %v1376 = vunpack.c.l.b16 %v1372
        %v1377 = vpack.c.b16 %v1376, %v1375
        %v1380 = vsel %vm785, %v1366, 0
        %v1383 = vsel %vm785, %v1367, 0
        %v1386 = vsel %vm785, %v1368, 0
        %v1389 = vsel %vm785, %v1369, 0
        %1391 = vmatpush.bf16.msra.mxu0 0
        %1392 = vmatpush.bf16.msra.mxu0 0
        %1393 = vmatpush.bf16.msra.mxu0 0
        %1394 = vmatpush.bf16.msra.mxu0 0
        %1395 = vmatpush.bf16.msra.mxu0 0
        %1396 = vmatpush.bf16.msra.mxu0 0
        %1397 = vmatpush.bf16.msra.mxu0 0
        %1398 = vmatpush.bf16.msra.mxu0 %v1377
        %1399 = vmatmul.bf16.gmra.mxu0 %v1380
        %v1400 = vpop.f32.mrf.mxu0
        %v1401 = vadd.f32 0.0, %v1400
        %v1402 = vpop.f32.mrf.mxu0
        %v1403 = vadd.f32 0.0, %v1402
        %1404 = vmatmul.bf16.gmra.mxu0 %v1383
        %v1405 = vpop.f32.mrf.mxu0
        %v1406 = vadd.f32 0.0, %v1405
        %v1407 = vpop.f32.mrf.mxu0
        %v1408 = vadd.f32 0.0, %v1407
        %1409 = vmatmul.bf16.gmra.mxu0 %v1386
        %v1410 = vpop.f32.mrf.mxu0
        %v1411 = vadd.f32 0.0, %v1410
        %v1412 = vpop.f32.mrf.mxu0
        %v1413 = vadd.f32 0.0, %v1412
        %1414 = vmatmul.bf16.gmra.mxu0 %v1389
        %v1415 = vpop.f32.mrf.mxu0
        %v1416 = vadd.f32 0.0, %v1415
        %v1417 = vpop.f32.mrf.mxu0
        %v1418 = vadd.f32 0.0, %v1417
        %1419 = vdwg.mxu0
        %v1422 = vunpack.c.l.b16 %v980
        %v1423 = vunpack.c.l.b16 %v981
        %v1424 = vpack.c.b16 %v1423, %v1422
        %v1427 = vsel %vm785, %v976, 0
        %v1430 = vsel %vm785, %v977, 0
        %v1433 = vsel %vm785, %v978, 0
        %v1436 = vsel %vm785, %v979, 0
        %1438 = vmatpush.bf16.msra.mxu0 0
        %1439 = vmatpush.bf16.msra.mxu0 0
        %1440 = vmatpush.bf16.msra.mxu0 0
        %1441 = vmatpush.bf16.msra.mxu0 0
        %1442 = vmatpush.bf16.msra.mxu0 0
        %1443 = vmatpush.bf16.msra.mxu0 0
        %1444 = vmatpush.bf16.msra.mxu0 0
        %1445 = vmatpush.bf16.msra.mxu0 %v1424
        %1446 = vmatmul.bf16.gmra.mxu0 %v1427
        %v1447 = vpop.f32.mrf.mxu0
        %v1448 = vadd.f32 %v1401, %v1447
        %v1449 = vpop.f32.mrf.mxu0
        %v1450 = vadd.f32 %v1403, %v1449
        %1451 = vmatmul.bf16.gmra.mxu0 %v1430
        %v1452 = vpop.f32.mrf.mxu0
        %v1453 = vadd.f32 %v1406, %v1452
        %v1454 = vpop.f32.mrf.mxu0
        %v1455 = vadd.f32 %v1408, %v1454
        %1456 = vmatmul.bf16.gmra.mxu0 %v1433
        %v1457 = vpop.f32.mrf.mxu0
        %v1458 = vadd.f32 %v1411, %v1457
        %v1459 = vpop.f32.mrf.mxu0
        %v1460 = vadd.f32 %v1413, %v1459
        %1461 = vmatmul.bf16.gmra.mxu0 %v1436
        %v1462 = vpop.f32.mrf.mxu0
        %v1463 = vadd.f32 %v1416, %v1462
        %v1464 = vpop.f32.mrf.mxu0
        %v1465 = vadd.f32 %v1418, %v1464
        %1466 = vdwg.mxu0
        %s1467 = scalar_lea.vmem %s1, 64
        %v1468 = vld [vmem:[%s1467] sm:$0xf]
        %v1469 = vld [vmem:[%s1467 + $0x4] sm:$0xf]
        %v1470 = vld [vmem:[%s1467 + $0x8] sm:$0xf]
        %v1471 = vld [vmem:[%s1467 + $0xc] sm:$0xf]
        %v1472 = vld [vmem:[%s1467 + $0x10] sm:$0xf]
        %v1473 = vld [vmem:[%s1467 + $0x14] sm:$0xf]
        %v1474 = vld [vmem:[%s1467 + $0x18] sm:$0xf]
        %v1475 = vld [vmem:[%s1467 + $0x1c] sm:$0xf]
        %v1484 = vunpack.c.l.b16 %v1468
        %v1485 = vunpack.c.l.b16 %v1469
        %v1486 = vunpack.c.l.b16 %v1470
        %v1487 = vunpack.c.l.b16 %v1471
        %v1488 = vunpack.c.l.b16 %v1472
        %v1489 = vunpack.c.l.b16 %v1473
        %v1490 = vunpack.c.l.b16 %v1474
        %v1491 = vunpack.c.l.b16 %v1475
        %v1492 = vpack.c.b16 %v1485, %v1484
        %v1493 = vpack.c.b16 %v1487, %v1486
        %v1494 = vpack.c.b16 %v1489, %v1488
        %v1495 = vpack.c.b16 %v1491, %v1490
        %1500 = vmatpush.bf16.msra.mxu0 0
        %1501 = vmatpush.bf16.msra.mxu0 0
        %1502 = vmatpush.bf16.msra.mxu0 0
        %1503 = vmatpush.bf16.msra.mxu0 0
        %1504 = vmatpush.bf16.msra.mxu0 %v1495
        %1505 = vmatpush.bf16.msra.mxu0 %v1494
        %1506 = vmatpush.bf16.msra.mxu0 %v1493
        %1507 = vmatpush.bf16.msra.mxu0 %v1492
        %1508 = vmatmul.bf16.gmra.mxu0 %v615
        %v1509 = vpop.f32.mrf.mxu0
        %v1510 = vadd.f32 0.0, %v1509
        %v1511 = vpop.f32.mrf.mxu0
        %v1512 = vadd.f32 0.0, %v1511
        %1513 = vmatmul.bf16.gmra.mxu0 %v618
        %v1514 = vpop.f32.mrf.mxu0
        %v1515 = vadd.f32 0.0, %v1514
        %v1516 = vpop.f32.mrf.mxu0
        %v1517 = vadd.f32 0.0, %v1516
        %1518 = vmatmul.bf16.gmra.mxu0 %v621
        %v1519 = vpop.f32.mrf.mxu0
        %v1520 = vadd.f32 0.0, %v1519
        %v1521 = vpop.f32.mrf.mxu0
        %v1522 = vadd.f32 0.0, %v1521
        %1523 = vmatmul.bf16.gmra.mxu0 %v624
        %v1524 = vpop.f32.mrf.mxu0
        %v1525 = vadd.f32 0.0, %v1524
        %v1526 = vpop.f32.mrf.mxu0
        %v1527 = vadd.f32 0.0, %v1526
        %1528 = vdwg.mxu0
        %s1529 = scalar_lea.vmem %s2, 64
        %v1530 = vld [vmem:[%s1529] sm:$0xf]
        %v1531 = vld [vmem:[%s1529 + $0x4] sm:$0xf]
        %v1532 = vld [vmem:[%s1529 + $0x8] sm:$0xf]
        %v1533 = vld [vmem:[%s1529 + $0xc] sm:$0xf]
        %v1534 = vld [vmem:[%s1529 + $0x10] sm:$0xf]
        %v1535 = vld [vmem:[%s1529 + $0x14] sm:$0xf]
        %v1536 = vld [vmem:[%s1529 + $0x18] sm:$0xf]
        %v1537 = vld [vmem:[%s1529 + $0x1c] sm:$0xf]
        %v1546 = vunpack.c.l.b16 %v1530
        %v1547 = vunpack.c.l.b16 %v1531
        %v1548 = vunpack.c.l.b16 %v1532
        %v1549 = vunpack.c.l.b16 %v1533
        %v1550 = vunpack.c.l.b16 %v1534
        %v1551 = vunpack.c.l.b16 %v1535
        %v1552 = vunpack.c.l.b16 %v1536
        %v1553 = vunpack.c.l.b16 %v1537
        %v1554 = vpack.c.b16 %v1547, %v1546
        %v1555 = vpack.c.b16 %v1549, %v1548
        %v1556 = vpack.c.b16 %v1551, %v1550
        %v1557 = vpack.c.b16 %v1553, %v1552
        %1562 = vmatpush.bf16.msra.mxu0 0
        %1563 = vmatpush.bf16.msra.mxu0 0
        %1564 = vmatpush.bf16.msra.mxu0 0
        %1565 = vmatpush.bf16.msra.mxu0 0
        %1566 = vmatpush.bf16.msra.mxu0 %v1557
        %1567 = vmatpush.bf16.msra.mxu0 %v1556
        %1568 = vmatpush.bf16.msra.mxu0 %v1555
        %1569 = vmatpush.bf16.msra.mxu0 %v1554
        %1570 = vmatmul.bf16.gmra.mxu0 %v615
        %v1571 = vpop.f32.mrf.mxu0
        %v1572 = vadd.f32 0.0, %v1571
        %v1573 = vpop.f32.mrf.mxu0
        %v1574 = vadd.f32 0.0, %v1573
        %1575 = vmatmul.bf16.gmra.mxu0 %v618
        %v1576 = vpop.f32.mrf.mxu0
        %v1577 = vadd.f32 0.0, %v1576
        %v1578 = vpop.f32.mrf.mxu0
        %v1579 = vadd.f32 0.0, %v1578
        %1580 = vmatmul.bf16.gmra.mxu0 %v621
        %v1581 = vpop.f32.mrf.mxu0
        %v1582 = vadd.f32 0.0, %v1581
        %v1583 = vpop.f32.mrf.mxu0
        %v1584 = vadd.f32 0.0, %v1583
        %1585 = vmatmul.bf16.gmra.mxu0 %v624
        %v1586 = vpop.f32.mrf.mxu0
        %v1587 = vadd.f32 0.0, %v1586
        %v1588 = vpop.f32.mrf.mxu0
        %v1589 = vadd.f32 0.0, %v1588
        %1590 = vdwg.mxu0
        %s1591 = scalar_lea.vmem %s3, 64
        %v1592 = vld [vmem:[%s1591] sm:$0xf]
        %v1593 = vld [vmem:[%s1591 + $0x4] sm:$0xf]
        %v1594 = vld [vmem:[%s1591 + $0x8] sm:$0xf]
        %v1595 = vld [vmem:[%s1591 + $0xc] sm:$0xf]
        %v1596 = vld [vmem:[%s1591 + $0x10] sm:$0xf]
        %v1597 = vld [vmem:[%s1591 + $0x14] sm:$0xf]
        %v1598 = vld [vmem:[%s1591 + $0x18] sm:$0xf]
        %v1599 = vld [vmem:[%s1591 + $0x1c] sm:$0xf]
        %v1608 = vunpack.c.l.b16 %v1592
        %v1609 = vunpack.c.l.b16 %v1593
        %v1610 = vunpack.c.l.b16 %v1594
        %v1611 = vunpack.c.l.b16 %v1595
        %v1612 = vunpack.c.l.b16 %v1596
        %v1613 = vunpack.c.l.b16 %v1597
        %v1614 = vunpack.c.l.b16 %v1598
        %v1615 = vunpack.c.l.b16 %v1599
        %v1616 = vpack.c.b16 %v1609, %v1608
        %v1617 = vpack.c.b16 %v1611, %v1610
        %v1618 = vpack.c.b16 %v1613, %v1612
        %v1619 = vpack.c.b16 %v1615, %v1614
        %1624 = vmatpush.bf16.msra.mxu0 0
        %1625 = vmatpush.bf16.msra.mxu0 0
        %1626 = vmatpush.bf16.msra.mxu0 0
        %1627 = vmatpush.bf16.msra.mxu0 0
        %1628 = vmatpush.bf16.msra.mxu0 %v1619
        %1629 = vmatpush.bf16.msra.mxu0 %v1618
        %1630 = vmatpush.bf16.msra.mxu0 %v1617
        %1631 = vmatpush.bf16.msra.mxu0 %v1616
        %1632 = vmatmul.bf16.gmra.mxu0 %v615
        %v1633 = vpop.f32.mrf.mxu0
        %v1634 = vadd.f32 0.0, %v1633
        %v1635 = vpop.f32.mrf.mxu0
        %v1636 = vadd.f32 0.0, %v1635
        %1637 = vmatmul.bf16.gmra.mxu0 %v618
        %v1638 = vpop.f32.mrf.mxu0
        %v1639 = vadd.f32 0.0, %v1638
        %v1640 = vpop.f32.mrf.mxu0
        %v1641 = vadd.f32 0.0, %v1640
        %1642 = vmatmul.bf16.gmra.mxu0 %v621
        %v1643 = vpop.f32.mrf.mxu0
        %v1644 = vadd.f32 0.0, %v1643
        %v1645 = vpop.f32.mrf.mxu0
        %v1646 = vadd.f32 0.0, %v1645
        %1647 = vmatmul.bf16.gmra.mxu0 %v624
        %v1648 = vpop.f32.mrf.mxu0
        %v1649 = vadd.f32 0.0, %v1648
        %v1650 = vpop.f32.mrf.mxu0
        %v1651 = vadd.f32 0.0, %v1650
        %1652 = vdwg.mxu0
        %v1653 = vpack.c.bf16 %v1512, %v1510
        %v1654 = vpack.c.bf16 %v1517, %v1515
        %v1655 = vpack.c.bf16 %v1522, %v1520
        %v1656 = vpack.c.bf16 %v1527, %v1525
        %v1657 = vpack.c.bf16 %v1574, %v1572
        %v1658 = vpack.c.bf16 %v1579, %v1577
        %v1659 = vpack.c.bf16 %v1584, %v1582
        %v1660 = vpack.c.bf16 %v1589, %v1587
        %v1662 = vsel %vm785, %v1653, 0
        %v1665 = vsel %vm785, %v1654, 0
        %v1668 = vsel %vm785, %v1655, 0
        %v1671 = vsel %vm785, %v1656, 0
        %v1674 = vsel %vm785, %v1657, 0
        %v1677 = vsel %vm785, %v1658, 0
        %v1680 = vsel %vm785, %v1659, 0
        %v1683 = vsel %vm785, %v1660, 0
        %1685 = vmatpush.bf16.xpose.msra.mxu0 0
        %1686 = vmatpush.bf16.xpose.msra.mxu0 0
        %1687 = vmatpush.bf16.xpose.msra.mxu0 0
        %1688 = vmatpush.bf16.xpose.msra.mxu0 0
        %1689 = vmatpush.bf16.xpose.msra.mxu0 %v1683
        %1690 = vmatpush.bf16.xpose.msra.mxu0 %v1680
        %1691 = vmatpush.bf16.xpose.msra.mxu0 %v1677
        %1692 = vmatpush.bf16.xpose.msra.mxu0 %v1674
        %1693 = vmatmul.bf16.gmra.mxu0 %v1662
        %v1694 = vpop.f32.mrf.mxu0
        %v1695 = vadd.f32 0.0, %v1694
        %v1696 = vpop.f32.mrf.mxu0
        %v1697 = vadd.f32 0.0, %v1696
        %1698 = vmatmul.bf16.gmra.mxu0 %v1665
        %v1699 = vpop.f32.mrf.mxu0
        %v1700 = vadd.f32 0.0, %v1699
        %v1701 = vpop.f32.mrf.mxu0
        %v1702 = vadd.f32 0.0, %v1701
        %1703 = vmatmul.bf16.gmra.mxu0 %v1668
        %v1704 = vpop.f32.mrf.mxu0
        %v1705 = vadd.f32 0.0, %v1704
        %v1706 = vpop.f32.mrf.mxu0
        %v1707 = vadd.f32 0.0, %v1706
        %1708 = vmatmul.bf16.gmra.mxu0 %v1671
        %v1709 = vpop.f32.mrf.mxu0
        %v1710 = vadd.f32 0.0, %v1709
        %v1711 = vpop.f32.mrf.mxu0
        %v1712 = vadd.f32 0.0, %v1711
        %1713 = vdwg.mxu0
        %v1714 = vsel %vm376, %v1695, -inf
        %1715 = vmax.xlane.f32.xlu0 %v1714
        %v1716 = vpop.xlane.xlu0 %1715
        %v1717 = vsel %vm376, %v1697, -inf
        %1718 = vmax.xlane.f32.xlu0 %v1717
        %v1719 = vpop.xlane.xlu0 %1718
        %v1720 = vsel %vm376, %v1700, -inf
        %1721 = vmax.xlane.f32.xlu0 %v1720
        %v1722 = vpop.xlane.xlu0 %1721
        %v1723 = vsel %vm376, %v1702, -inf
        %1724 = vmax.xlane.f32.xlu0 %v1723
        %v1725 = vpop.xlane.xlu0 %1724
        %v1726 = vsel %vm376, %v1705, -inf
        %1727 = vmax.xlane.f32.xlu0 %v1726
        %v1728 = vpop.xlane.xlu0 %1727
        %v1729 = vsel %vm376, %v1707, -inf
        %1730 = vmax.xlane.f32.xlu0 %v1729
        %v1731 = vpop.xlane.xlu0 %1730
        %v1732 = vsel %vm376, %v1710, -inf
        %1733 = vmax.xlane.f32.xlu0 %v1732
        %v1734 = vpop.xlane.xlu0 %1733
        %v1735 = vsel %vm376, %v1712, -inf
        %1736 = vmax.xlane.f32.xlu0 %v1735
        %v1737 = vpop.xlane.xlu0 %1736
        %v1738 = vsub.f32 %v1695, %v1716
        %v1739 = vsub.f32 %v1697, %v1719
        %v1740 = vsub.f32 %v1700, %v1722
        %v1741 = vsub.f32 %v1702, %v1725
        %v1742 = vsub.f32 %v1705, %v1728
        %v1743 = vsub.f32 %v1707, %v1731
        %v1744 = vsub.f32 %v1710, %v1734
        %v1745 = vsub.f32 %v1712, %v1737
        %v1746 = vmul.f32 %v1738, 1.442695
        %v1747 = vpow.pop %v1746
        %v1748 = vmul.f32 %v1739, 1.442695
        %v1749 = vpow.pop %v1748
        %v1750 = vmul.f32 %v1740, 1.442695
        %v1751 = vpow.pop %v1750
        %v1752 = vmul.f32 %v1741, 1.442695
        %v1753 = vpow.pop %v1752
        %v1754 = vmul.f32 %v1742, 1.442695
        %v1755 = vpow.pop %v1754
        %v1756 = vmul.f32 %v1743, 1.442695
        %v1757 = vpow.pop %v1756
        %v1758 = vmul.f32 %v1744, 1.442695
        %v1759 = vpow.pop %v1758
        %v1760 = vmul.f32 %v1745, 1.442695
        %v1761 = vpow.pop %v1760
        %v1762 = vsel %vm376, %v1747, 0.0
        %1763 = vadd.xlane.f32.xlu0 %v1762
        %v1764 = vpop.xlane.xlu0 %1763
        %v1765 = vsel %vm376, %v1749, 0.0
        %1766 = vadd.xlane.f32.xlu0 %v1765
        %v1767 = vpop.xlane.xlu0 %1766
        %v1768 = vsel %vm376, %v1751, 0.0
        %1769 = vadd.xlane.f32.xlu0 %v1768
        %v1770 = vpop.xlane.xlu0 %1769
        %v1771 = vsel %vm376, %v1753, 0.0
        %1772 = vadd.xlane.f32.xlu0 %v1771
        %v1773 = vpop.xlane.xlu0 %1772
        %v1774 = vsel %vm376, %v1755, 0.0
        %1775 = vadd.xlane.f32.xlu0 %v1774
        %v1776 = vpop.xlane.xlu0 %1775
        %v1777 = vsel %vm376, %v1757, 0.0
        %1778 = vadd.xlane.f32.xlu0 %v1777
        %v1779 = vpop.xlane.xlu0 %1778
        %v1780 = vsel %vm376, %v1759, 0.0
        %1781 = vadd.xlane.f32.xlu0 %v1780
        %v1782 = vpop.xlane.xlu0 %1781
        %v1783 = vsel %vm376, %v1761, 0.0
        %1784 = vadd.xlane.f32.xlu0 %v1783
        %v1785 = vpop.xlane.xlu0 %1784
        %v1786 = vrcp.pop %v1764
        %v1787 = vrcp.pop %v1767
        %v1788 = vrcp.pop %v1770
        %v1789 = vrcp.pop %v1773
        %v1790 = vrcp.pop %v1776
        %v1791 = vrcp.pop %v1779
        %v1792 = vrcp.pop %v1782
        %v1793 = vrcp.pop %v1785
        %v1794 = vmul.f32 %v1747, %v1786
        %v1795 = vmul.f32 %v1749, %v1787
        %v1796 = vmul.f32 %v1751, %v1788
        %v1797 = vmul.f32 %v1753, %v1789
        %v1798 = vmul.f32 %v1755, %v1790
        %v1799 = vmul.f32 %v1757, %v1791
        %v1800 = vmul.f32 %v1759, %v1792
        %v1801 = vmul.f32 %v1761, %v1793
        %v1802 = vpack.c.bf16 %v1795, %v1794
        %v1803 = vpack.c.bf16 %v1797, %v1796
        %v1804 = vpack.c.bf16 %v1799, %v1798
        %v1805 = vpack.c.bf16 %v1801, %v1800
        %v1806 = vpack.c.bf16 %v1636, %v1634
        %v1807 = vpack.c.bf16 %v1641, %v1639
        %v1808 = vpack.c.bf16 %v1646, %v1644
        %v1809 = vpack.c.bf16 %v1651, %v1649
        %v1811 = vsel %vm376, %v1802, 0
        %v1814 = vsel %vm376, %v1803, 0
        %v1817 = vsel %vm376, %v1804, 0
        %v1820 = vsel %vm376, %v1805, 0
        %1822 = vmatpush.bf16.msra.mxu0 0
        %1823 = vmatpush.bf16.msra.mxu0 0
        %1824 = vmatpush.bf16.msra.mxu0 0
        %1825 = vmatpush.bf16.msra.mxu0 0
        %1826 = vmatpush.bf16.msra.mxu0 %v1809
        %1827 = vmatpush.bf16.msra.mxu0 %v1808
        %1828 = vmatpush.bf16.msra.mxu0 %v1807
        %1829 = vmatpush.bf16.msra.mxu0 %v1806
        %1830 = vmatmul.bf16.gmra.mxu0 %v1811
        %v1831 = vpop.f32.mrf.mxu0
        %v1832 = vadd.f32 0.0, %v1831
        %v1833 = vpop.f32.mrf.mxu0
        %v1834 = vadd.f32 0.0, %v1833
        %1835 = vmatmul.bf16.gmra.mxu0 %v1814
        %v1836 = vpop.f32.mrf.mxu0
        %v1837 = vadd.f32 0.0, %v1836
        %v1838 = vpop.f32.mrf.mxu0
        %v1839 = vadd.f32 0.0, %v1838
        %1840 = vmatmul.bf16.gmra.mxu0 %v1817
        %v1841 = vpop.f32.mrf.mxu0
        %v1842 = vadd.f32 0.0, %v1841
        %v1843 = vpop.f32.mrf.mxu0
        %v1844 = vadd.f32 0.0, %v1843
        %1845 = vmatmul.bf16.gmra.mxu0 %v1820
        %v1846 = vpop.f32.mrf.mxu0
        %v1847 = vadd.f32 0.0, %v1846
        %v1848 = vpop.f32.mrf.mxu0
        %v1849 = vadd.f32 0.0, %v1848
        %1850 = vdwg.mxu0
        %v1851 = vpack.c.bf16 %v1834, %v1832
        %v1852 = vpack.c.bf16 %v1839, %v1837
        %v1853 = vpack.c.bf16 %v1844, %v1842
        %v1854 = vpack.c.bf16 %v1849, %v1847
        %s1855 = scalar_lea.vmem %s4, 16
        %v1856 = vld [vmem:[%s1855] sm:$0xf]
        %v1857 = vld [vmem:[%s1855 + $0x4] sm:$0xf]
        %v1860 = vunpack.c.l.b16 %v1856
        %v1861 = vunpack.c.l.b16 %v1857
        %v1862 = vpack.c.b16 %v1861, %v1860
        %v1865 = vsel %vm785, %v1851, 0
        %v1868 = vsel %vm785, %v1852, 0
        %v1871 = vsel %vm785, %v1853, 0
        %v1874 = vsel %vm785, %v1854, 0
        %1876 = vmatpush.bf16.msra.mxu0 0
        %1877 = vmatpush.bf16.msra.mxu0 0
        %1878 = vmatpush.bf16.msra.mxu0 0
        %1879 = vmatpush.bf16.msra.mxu0 0
        %1880 = vmatpush.bf16.msra.mxu0 0
        %1881 = vmatpush.bf16.msra.mxu0 0
        %1882 = vmatpush.bf16.msra.mxu0 0
        %1883 = vmatpush.bf16.msra.mxu0 %v1862
        %1884 = vmatmul.bf16.gmra.mxu0 %v1865
        %v1885 = vpop.f32.mrf.mxu0
        %v1886 = vadd.f32 0.0, %v1885
        %v1887 = vpop.f32.mrf.mxu0
        %v1888 = vadd.f32 0.0, %v1887
        %1889 = vmatmul.bf16.gmra.mxu0 %v1868
        %v1890 = vpop.f32.mrf.mxu0
        %v1891 = vadd.f32 0.0, %v1890
        %v1892 = vpop.f32.mrf.mxu0
        %v1893 = vadd.f32 0.0, %v1892
        %1894 = vmatmul.bf16.gmra.mxu0 %v1871
        %v1895 = vpop.f32.mrf.mxu0
        %v1896 = vadd.f32 0.0, %v1895
        %v1897 = vpop.f32.mrf.mxu0
        %v1898 = vadd.f32 0.0, %v1897
        %1899 = vmatmul.bf16.gmra.mxu0 %v1874
        %v1900 = vpop.f32.mrf.mxu0
        %v1901 = vadd.f32 0.0, %v1900
        %v1902 = vpop.f32.mrf.mxu0
        %v1903 = vadd.f32 0.0, %v1902
        %1904 = vdwg.mxu0
        %v1905 = vadd.f32 %v1448, %v1886
        %v1906 = vadd.f32 %v1450, %v1888
        %v1907 = vadd.f32 %v1453, %v1891
        %v1908 = vadd.f32 %v1455, %v1893
        %v1909 = vadd.f32 %v1458, %v1896
        %v1910 = vadd.f32 %v1460, %v1898
        %v1911 = vadd.f32 %v1463, %v1901
        %v1912 = vadd.f32 %v1465, %v1903
        %s1913 = scalar_lea.vmem %s1, 96
        %v1914 = vld [vmem:[%s1913] sm:$0xf]
        %v1915 = vld [vmem:[%s1913 + $0x4] sm:$0xf]
        %v1916 = vld [vmem:[%s1913 + $0x8] sm:$0xf]
        %v1917 = vld [vmem:[%s1913 + $0xc] sm:$0xf]
        %v1918 = vld [vmem:[%s1913 + $0x10] sm:$0xf]
        %v1919 = vld [vmem:[%s1913 + $0x14] sm:$0xf]
        %v1920 = vld [vmem:[%s1913 + $0x18] sm:$0xf]
        %v1921 = vld [vmem:[%s1913 + $0x1c] sm:$0xf]
        %v1930 = vunpack.c.l.b16 %v1914
        %v1931 = vunpack.c.l.b16 %v1915
        %v1932 = vunpack.c.l.b16 %v1916
        %v1933 = vunpack.c.l.b16 %v1917
        %v1934 = vunpack.c.l.b16 %v1918
        %v1935 = vunpack.c.l.b16 %v1919
        %v1936 = vunpack.c.l.b16 %v1920
        %v1937 = vunpack.c.l.b16 %v1921
        %v1938 = vpack.c.b16 %v1931, %v1930
        %v1939 = vpack.c.b16 %v1933, %v1932
        %v1940 = vpack.c.b16 %v1935, %v1934
        %v1941 = vpack.c.b16 %v1937, %v1936
        %1946 = vmatpush.bf16.msra.mxu0 0
        %1947 = vmatpush.bf16.msra.mxu0 0
        %1948 = vmatpush.bf16.msra.mxu0 0
        %1949 = vmatpush.bf16.msra.mxu0 0
        %1950 = vmatpush.bf16.msra.mxu0 %v1941
        %1951 = vmatpush.bf16.msra.mxu0 %v1940
        %1952 = vmatpush.bf16.msra.mxu0 %v1939
        %1953 = vmatpush.bf16.msra.mxu0 %v1938
        %1954 = vmatmul.bf16.gmra.mxu0 %v615
        %v1955 = vpop.f32.mrf.mxu0
        %v1956 = vadd.f32 0.0, %v1955
        %v1957 = vpop.f32.mrf.mxu0
        %v1958 = vadd.f32 0.0, %v1957
        %1959 = vmatmul.bf16.gmra.mxu0 %v618
        %v1960 = vpop.f32.mrf.mxu0
        %v1961 = vadd.f32 0.0, %v1960
        %v1962 = vpop.f32.mrf.mxu0
        %v1963 = vadd.f32 0.0, %v1962
        %1964 = vmatmul.bf16.gmra.mxu0 %v621
        %v1965 = vpop.f32.mrf.mxu0
        %v1966 = vadd.f32 0.0, %v1965
        %v1967 = vpop.f32.mrf.mxu0
        %v1968 = vadd.f32 0.0, %v1967
        %1969 = vmatmul.bf16.gmra.mxu0 %v624
        %v1970 = vpop.f32.mrf.mxu0
        %v1971 = vadd.f32 0.0, %v1970
        %v1972 = vpop.f32.mrf.mxu0
        %v1973 = vadd.f32 0.0, %v1972
        %1974 = vdwg.mxu0
        %s1975 = scalar_lea.vmem %s2, 96
        %v1976 = vld [vmem:[%s1975] sm:$0xf]
        %v1977 = vld [vmem:[%s1975 + $0x4] sm:$0xf]
        %v1978 = vld [vmem:[%s1975 + $0x8] sm:$0xf]
        %v1979 = vld [vmem:[%s1975 + $0xc] sm:$0xf]
        %v1980 = vld [vmem:[%s1975 + $0x10] sm:$0xf]
        %v1981 = vld [vmem:[%s1975 + $0x14] sm:$0xf]
        %v1982 = vld [vmem:[%s1975 + $0x18] sm:$0xf]
        %v1983 = vld [vmem:[%s1975 + $0x1c] sm:$0xf]
        %v1992 = vunpack.c.l.b16 %v1976
        %v1993 = vunpack.c.l.b16 %v1977
        %v1994 = vunpack.c.l.b16 %v1978
        %v1995 = vunpack.c.l.b16 %v1979
        %v1996 = vunpack.c.l.b16 %v1980
        %v1997 = vunpack.c.l.b16 %v1981
        %v1998 = vunpack.c.l.b16 %v1982
        %v1999 = vunpack.c.l.b16 %v1983
        %v2000 = vpack.c.b16 %v1993, %v1992
        %v2001 = vpack.c.b16 %v1995, %v1994
        %v2002 = vpack.c.b16 %v1997, %v1996
        %v2003 = vpack.c.b16 %v1999, %v1998
        %2008 = vmatpush.bf16.msra.mxu0 0
        %2009 = vmatpush.bf16.msra.mxu0 0
        %2010 = vmatpush.bf16.msra.mxu0 0
        %2011 = vmatpush.bf16.msra.mxu0 0
        %2012 = vmatpush.bf16.msra.mxu0 %v2003
        %2013 = vmatpush.bf16.msra.mxu0 %v2002
        %2014 = vmatpush.bf16.msra.mxu0 %v2001
        %2015 = vmatpush.bf16.msra.mxu0 %v2000
        %2016 = vmatmul.bf16.gmra.mxu0 %v615
        %v2017 = vpop.f32.mrf.mxu0
        %v2018 = vadd.f32 0.0, %v2017
        %v2019 = vpop.f32.mrf.mxu0
        %v2020 = vadd.f32 0.0, %v2019
        %2021 = vmatmul.bf16.gmra.mxu0 %v618
        %v2022 = vpop.f32.mrf.mxu0
        %v2023 = vadd.f32 0.0, %v2022
        %v2024 = vpop.f32.mrf.mxu0
        %v2025 = vadd.f32 0.0, %v2024
        %2026 = vmatmul.bf16.gmra.mxu0 %v621
        %v2027 = vpop.f32.mrf.mxu0
        %v2028 = vadd.f32 0.0, %v2027
        %v2029 = vpop.f32.mrf.mxu0
        %v2030 = vadd.f32 0.0, %v2029
        %2031 = vmatmul.bf16.gmra.mxu0 %v624
        %v2032 = vpop.f32.mrf.mxu0
        %v2033 = vadd.f32 0.0, %v2032
        %v2034 = vpop.f32.mrf.mxu0
        %v2035 = vadd.f32 0.0, %v2034
        %2036 = vdwg.mxu0
        %s2037 = scalar_lea.vmem %s3, 96
        %v2038 = vld [vmem:[%s2037] sm:$0xf]
        %v2039 = vld [vmem:[%s2037 + $0x4] sm:$0xf]
        %v2040 = vld [vmem:[%s2037 + $0x8] sm:$0xf]
        %v2041 = vld [vmem:[%s2037 + $0xc] sm:$0xf]
        %v2042 = vld [vmem:[%s2037 + $0x10] sm:$0xf]
        %v2043 = vld [vmem:[%s2037 + $0x14] sm:$0xf]
        %v2044 = vld [vmem:[%s2037 + $0x18] sm:$0xf]
        %v2045 = vld [vmem:[%s2037 + $0x1c] sm:$0xf]
        %v2054 = vunpack.c.l.b16 %v2038
        %v2055 = vunpack.c.l.b16 %v2039
        %v2056 = vunpack.c.l.b16 %v2040
        %v2057 = vunpack.c.l.b16 %v2041
        %v2058 = vunpack.c.l.b16 %v2042
        %v2059 = vunpack.c.l.b16 %v2043
        %v2060 = vunpack.c.l.b16 %v2044
        %v2061 = vunpack.c.l.b16 %v2045
        %v2062 = vpack.c.b16 %v2055, %v2054
        %v2063 = vpack.c.b16 %v2057, %v2056
        %v2064 = vpack.c.b16 %v2059, %v2058
        %v2065 = vpack.c.b16 %v2061, %v2060
        %2070 = vmatpush.bf16.msra.mxu0 0
        %2071 = vmatpush.bf16.msra.mxu0 0
        %2072 = vmatpush.bf16.msra.mxu0 0
        %2073 = vmatpush.bf16.msra.mxu0 0
        %2074 = vmatpush.bf16.msra.mxu0 %v2065
        %2075 = vmatpush.bf16.msra.mxu0 %v2064
        %2076 = vmatpush.bf16.msra.mxu0 %v2063
        %2077 = vmatpush.bf16.msra.mxu0 %v2062
        %2078 = vmatmul.bf16.gmra.mxu0 %v615
        %v2079 = vpop.f32.mrf.mxu0
        %v2080 = vadd.f32 0.0, %v2079
        %v2081 = vpop.f32.mrf.mxu0
        %v2082 = vadd.f32 0.0, %v2081
        %2083 = vmatmul.bf16.gmra.mxu0 %v618
        %v2084 = vpop.f32.mrf.mxu0
        %v2085 = vadd.f32 0.0, %v2084
        %v2086 = vpop.f32.mrf.mxu0
        %v2087 = vadd.f32 0.0, %v2086
        %2088 = vmatmul.bf16.gmra.mxu0 %v621
        %v2089 = vpop.f32.mrf.mxu0
        %v2090 = vadd.f32 0.0, %v2089
        %v2091 = vpop.f32.mrf.mxu0
        %v2092 = vadd.f32 0.0, %v2091
        %2093 = vmatmul.bf16.gmra.mxu0 %v624
        %v2094 = vpop.f32.mrf.mxu0
        %v2095 = vadd.f32 0.0, %v2094
        %v2096 = vpop.f32.mrf.mxu0
        %v2097 = vadd.f32 0.0, %v2096
        %2098 = vdwg.mxu0
        %v2099 = vpack.c.bf16 %v1958, %v1956
        %v2100 = vpack.c.bf16 %v1963, %v1961
        %v2101 = vpack.c.bf16 %v1968, %v1966
        %v2102 = vpack.c.bf16 %v1973, %v1971
        %v2103 = vpack.c.bf16 %v2020, %v2018
        %v2104 = vpack.c.bf16 %v2025, %v2023
        %v2105 = vpack.c.bf16 %v2030, %v2028
        %v2106 = vpack.c.bf16 %v2035, %v2033
        %v2108 = vsel %vm785, %v2099, 0
        %v2111 = vsel %vm785, %v2100, 0
        %v2114 = vsel %vm785, %v2101, 0
        %v2117 = vsel %vm785, %v2102, 0
        %v2120 = vsel %vm785, %v2103, 0
        %v2123 = vsel %vm785, %v2104, 0
        %v2126 = vsel %vm785, %v2105, 0
        %v2129 = vsel %vm785, %v2106, 0
        %2131 = vmatpush.bf16.xpose.msra.mxu0 0
        %2132 = vmatpush.bf16.xpose.msra.mxu0 0
        %2133 = vmatpush.bf16.xpose.msra.mxu0 0
        %2134 = vmatpush.bf16.xpose.msra.mxu0 0
        %2135 = vmatpush.bf16.xpose.msra.mxu0 %v2129
        %2136 = vmatpush.bf16.xpose.msra.mxu0 %v2126
        %2137 = vmatpush.bf16.xpose.msra.mxu0 %v2123
        %2138 = vmatpush.bf16.xpose.msra.mxu0 %v2120
        %2139 = vmatmul.bf16.gmra.mxu0 %v2108
        %v2140 = vpop.f32.mrf.mxu0
        %v2141 = vadd.f32 0.0, %v2140
        %v2142 = vpop.f32.mrf.mxu0
        %v2143 = vadd.f32 0.0, %v2142
        %2144 = vmatmul.bf16.gmra.mxu0 %v2111
        %v2145 = vpop.f32.mrf.mxu0
        %v2146 = vadd.f32 0.0, %v2145
        %v2147 = vpop.f32.mrf.mxu0
        %v2148 = vadd.f32 0.0, %v2147
        %2149 = vmatmul.bf16.gmra.mxu0 %v2114
        %v2150 = vpop.f32.mrf.mxu0
        %v2151 = vadd.f32 0.0, %v2150
        %v2152 = vpop.f32.mrf.mxu0
        %v2153 = vadd.f32 0.0, %v2152
        %2154 = vmatmul.bf16.gmra.mxu0 %v2117
        %v2155 = vpop.f32.mrf.mxu0
        %v2156 = vadd.f32 0.0, %v2155
        %v2157 = vpop.f32.mrf.mxu0
        %v2158 = vadd.f32 0.0, %v2157
        %2159 = vdwg.mxu0
        %v2160 = vsel %vm376, %v2141, -inf
        %2161 = vmax.xlane.f32.xlu0 %v2160
        %v2162 = vpop.xlane.xlu0 %2161
        %v2163 = vsel %vm376, %v2143, -inf
        %2164 = vmax.xlane.f32.xlu0 %v2163
        %v2165 = vpop.xlane.xlu0 %2164
        %v2166 = vsel %vm376, %v2146, -inf
        %2167 = vmax.xlane.f32.xlu0 %v2166
        %v2168 = vpop.xlane.xlu0 %2167
        %v2169 = vsel %vm376, %v2148, -inf
        %2170 = vmax.xlane.f32.xlu0 %v2169
        %v2171 = vpop.xlane.xlu0 %2170
        %v2172 = vsel %vm376, %v2151, -inf
        %2173 = vmax.xlane.f32.xlu0 %v2172
        %v2174 = vpop.xlane.xlu0 %2173
        %v2175 = vsel %vm376, %v2153, -inf
        %2176 = vmax.xlane.f32.xlu0 %v2175
        %v2177 = vpop.xlane.xlu0 %2176
        %v2178 = vsel %vm376, %v2156, -inf
        %2179 = vmax.xlane.f32.xlu0 %v2178
        %v2180 = vpop.xlane.xlu0 %2179
        %v2181 = vsel %vm376, %v2158, -inf
        %2182 = vmax.xlane.f32.xlu0 %v2181
        %v2183 = vpop.xlane.xlu0 %2182
        %v2184 = vsub.f32 %v2141, %v2162
        %v2185 = vsub.f32 %v2143, %v2165
        %v2186 = vsub.f32 %v2146, %v2168
        %v2187 = vsub.f32 %v2148, %v2171
        %v2188 = vsub.f32 %v2151, %v2174
        %v2189 = vsub.f32 %v2153, %v2177
        %v2190 = vsub.f32 %v2156, %v2180
        %v2191 = vsub.f32 %v2158, %v2183
        %v2192 = vmul.f32 %v2184, 1.442695
        %v2193 = vpow.pop %v2192
        %v2194 = vmul.f32 %v2185, 1.442695
        %v2195 = vpow.pop %v2194
        %v2196 = vmul.f32 %v2186, 1.442695
        %v2197 = vpow.pop %v2196
        %v2198 = vmul.f32 %v2187, 1.442695
        %v2199 = vpow.pop %v2198
        %v2200 = vmul.f32 %v2188, 1.442695
        %v2201 = vpow.pop %v2200
        %v2202 = vmul.f32 %v2189, 1.442695
        %v2203 = vpow.pop %v2202
        %v2204 = vmul.f32 %v2190, 1.442695
        %v2205 = vpow.pop %v2204
        %v2206 = vmul.f32 %v2191, 1.442695
        %v2207 = vpow.pop %v2206
        %v2208 = vsel %vm376, %v2193, 0.0
        %2209 = vadd.xlane.f32.xlu0 %v2208
        %v2210 = vpop.xlane.xlu0 %2209
        %v2211 = vsel %vm376, %v2195, 0.0
        %2212 = vadd.xlane.f32.xlu0 %v2211
        %v2213 = vpop.xlane.xlu0 %2212
        %v2214 = vsel %vm376, %v2197, 0.0
        %2215 = vadd.xlane.f32.xlu0 %v2214
        %v2216 = vpop.xlane.xlu0 %2215
        %v2217 = vsel %vm376, %v2199, 0.0
        %2218 = vadd.xlane.f32.xlu0 %v2217
        %v2219 = vpop.xlane.xlu0 %2218
        %v2220 = vsel %vm376, %v2201, 0.0
        %2221 = vadd.xlane.f32.xlu0 %v2220
        %v2222 = vpop.xlane.xlu0 %2221
        %v2223 = vsel %vm376, %v2203, 0.0
        %2224 = vadd.xlane.f32.xlu0 %v2223
        %v2225 = vpop.xlane.xlu0 %2224
        %v2226 = vsel %vm376, %v2205, 0.0
        %2227 = vadd.xlane.f32.xlu0 %v2226
        %v2228 = vpop.xlane.xlu0 %2227
        %v2229 = vsel %vm376, %v2207, 0.0
        %2230 = vadd.xlane.f32.xlu0 %v2229
        %v2231 = vpop.xlane.xlu0 %2230
        %v2232 = vrcp.pop %v2210
        %v2233 = vrcp.pop %v2213
        %v2234 = vrcp.pop %v2216
        %v2235 = vrcp.pop %v2219
        %v2236 = vrcp.pop %v2222
        %v2237 = vrcp.pop %v2225
        %v2238 = vrcp.pop %v2228
        %v2239 = vrcp.pop %v2231
        %v2240 = vmul.f32 %v2193, %v2232
        %v2241 = vmul.f32 %v2195, %v2233
        %v2242 = vmul.f32 %v2197, %v2234
        %v2243 = vmul.f32 %v2199, %v2235
        %v2244 = vmul.f32 %v2201, %v2236
        %v2245 = vmul.f32 %v2203, %v2237
        %v2246 = vmul.f32 %v2205, %v2238
        %v2247 = vmul.f32 %v2207, %v2239
        %v2248 = vpack.c.bf16 %v2241, %v2240
        %v2249 = vpack.c.bf16 %v2243, %v2242
        %v2250 = vpack.c.bf16 %v2245, %v2244
        %v2251 = vpack.c.bf16 %v2247, %v2246
        %v2252 = vpack.c.bf16 %v2082, %v2080
        %v2253 = vpack.c.bf16 %v2087, %v2085
        %v2254 = vpack.c.bf16 %v2092, %v2090
        %v2255 = vpack.c.bf16 %v2097, %v2095
        %v2257 = vsel %vm376, %v2248, 0
        %v2260 = vsel %vm376, %v2249, 0
        %v2263 = vsel %vm376, %v2250, 0
        %v2266 = vsel %vm376, %v2251, 0
        %2268 = vmatpush.bf16.msra.mxu0 0
        %2269 = vmatpush.bf16.msra.mxu0 0
        %2270 = vmatpush.bf16.msra.mxu0 0
        %2271 = vmatpush.bf16.msra.mxu0 0
        %2272 = vmatpush.bf16.msra.mxu0 %v2255
        %2273 = vmatpush.bf16.msra.mxu0 %v2254
        %2274 = vmatpush.bf16.msra.mxu0 %v2253
        %2275 = vmatpush.bf16.msra.mxu0 %v2252
        %2276 = vmatmul.bf16.gmra.mxu0 %v2257
        %v2277 = vpop.f32.mrf.mxu0
        %v2278 = vadd.f32 0.0, %v2277
        %v2279 = vpop.f32.mrf.mxu0
        %v2280 = vadd.f32 0.0, %v2279
        %2281 = vmatmul.bf16.gmra.mxu0 %v2260
        %v2282 = vpop.f32.mrf.mxu0
        %v2283 = vadd.f32 0.0, %v2282
        %v2284 = vpop.f32.mrf.mxu0
        %v2285 = vadd.f32 0.0, %v2284
        %2286 = vmatmul.bf16.gmra.mxu0 %v2263
        %v2287 = vpop.f32.mrf.mxu0
        %v2288 = vadd.f32 0.0, %v2287
        %v2289 = vpop.f32.mrf.mxu0
        %v2290 = vadd.f32 0.0, %v2289
        %2291 = vmatmul.bf16.gmra.mxu0 %v2266
        %v2292 = vpop.f32.mrf.mxu0
        %v2293 = vadd.f32 0.0, %v2292
        %v2294 = vpop.f32.mrf.mxu0
        %v2295 = vadd.f32 0.0, %v2294
        %2296 = vdwg.mxu0
        %v2297 = vpack.c.bf16 %v2280, %v2278
        %v2298 = vpack.c.bf16 %v2285, %v2283
        %v2299 = vpack.c.bf16 %v2290, %v2288
        %v2300 = vpack.c.bf16 %v2295, %v2293
        %s2301 = scalar_lea.vmem %s4, 24
        %v2302 = vld [vmem:[%s2301] sm:$0xf]
        %v2303 = vld [vmem:[%s2301 + $0x4] sm:$0xf]
        %v2306 = vunpack.c.l.b16 %v2302
        %v2307 = vunpack.c.l.b16 %v2303
        %v2308 = vpack.c.b16 %v2307, %v2306
        %v2311 = vsel %vm785, %v2297, 0
        %v2314 = vsel %vm785, %v2298, 0
        %v2317 = vsel %vm785, %v2299, 0
        %v2320 = vsel %vm785, %v2300, 0
        %2322 = vmatpush.bf16.msra.mxu0 0
        %2323 = vmatpush.bf16.msra.mxu0 0
        %2324 = vmatpush.bf16.msra.mxu0 0
        %2325 = vmatpush.bf16.msra.mxu0 0
        %2326 = vmatpush.bf16.msra.mxu0 0
        %2327 = vmatpush.bf16.msra.mxu0 0
        %2328 = vmatpush.bf16.msra.mxu0 0
        %2329 = vmatpush.bf16.msra.mxu0 %v2308
        %2330 = vmatmul.bf16.gmra.mxu0 %v2311
        %v2331 = vpop.f32.mrf.mxu0
        %v2332 = vadd.f32 0.0, %v2331
        %v2333 = vpop.f32.mrf.mxu0
        %v2334 = vadd.f32 0.0, %v2333
        %2335 = vmatmul.bf16.gmra.mxu0 %v2314
        %v2336 = vpop.f32.mrf.mxu0
        %v2337 = vadd.f32 0.0, %v2336
        %v2338 = vpop.f32.mrf.mxu0
        %v2339 = vadd.f32 0.0, %v2338
        %2340 = vmatmul.bf16.gmra.mxu0 %v2317
        %v2341 = vpop.f32.mrf.mxu0
        %v2342 = vadd.f32 0.0, %v2341
        %v2343 = vpop.f32.mrf.mxu0
        %v2344 = vadd.f32 0.0, %v2343
        %2345 = vmatmul.bf16.gmra.mxu0 %v2320
        %v2346 = vpop.f32.mrf.mxu0
        %v2347 = vadd.f32 0.0, %v2346
        %v2348 = vpop.f32.mrf.mxu0
        %v2349 = vadd.f32 0.0, %v2348
        %2350 = vdwg.mxu0
        %v2351 = vadd.f32 %v1905, %v2332
        %v2352 = vadd.f32 %v1906, %v2334
        %v2353 = vadd.f32 %v1907, %v2337
        %v2354 = vadd.f32 %v1908, %v2339
        %v2355 = vadd.f32 %v1909, %v2342
        %v2356 = vadd.f32 %v1910, %v2344
        %v2357 = vadd.f32 %v1911, %v2347
        %v2358 = vadd.f32 %v1912, %v2349
        %v2359 = vadd.f32 %v359, %v2351
        %v2360 = vadd.f32 %v360, %v2352
        %v2361 = vadd.f32 %v361, %v2353
        %v2362 = vadd.f32 %v362, %v2354
        %v2363 = vadd.f32 %v363, %v2355
        %v2364 = vadd.f32 %v364, %v2356
        %v2365 = vadd.f32 %v365, %v2357
        %v2366 = vadd.f32 %v366, %v2358
        %v2367 = vperm.slane %v371, 0
        %v2368 = vadd.f32 %v2359, %v2367
        %v2369 = vadd.f32 %v2360, %v2367
        %v2370 = vadd.f32 %v2361, %v2367
        %v2371 = vadd.f32 %v2362, %v2367
        %v2372 = vadd.f32 %v2363, %v2367
        %v2373 = vadd.f32 %v2364, %v2367
        %v2374 = vadd.f32 %v2365, %v2367
        %v2375 = vadd.f32 %v2366, %v2367
        %v2376 = vsel %vm376, %v2368, 0.0
        %2377 = vadd.xlane.f32.xlu0 %v2376
        %v2378 = vpop.xlane.xlu0 %2377
        %v2379 = vsel %vm376, %v2369, 0.0
        %2380 = vadd.xlane.f32.xlu0 %v2379
        %v2381 = vpop.xlane.xlu0 %2380
        %v2382 = vsel %vm376, %v2370, 0.0
        %2383 = vadd.xlane.f32.xlu0 %v2382
        %v2384 = vpop.xlane.xlu0 %2383
        %v2385 = vsel %vm376, %v2371, 0.0
        %2386 = vadd.xlane.f32.xlu0 %v2385
        %v2387 = vpop.xlane.xlu0 %2386
        %v2388 = vsel %vm376, %v2372, 0.0
        %2389 = vadd.xlane.f32.xlu0 %v2388
        %v2390 = vpop.xlane.xlu0 %2389
        %v2391 = vsel %vm376, %v2373, 0.0
        %2392 = vadd.xlane.f32.xlu0 %v2391
        %v2393 = vpop.xlane.xlu0 %2392
        %v2394 = vsel %vm376, %v2374, 0.0
        %2395 = vadd.xlane.f32.xlu0 %v2394
        %v2396 = vpop.xlane.xlu0 %2395
        %v2397 = vsel %vm376, %v2375, 0.0
        %2398 = vadd.xlane.f32.xlu0 %v2397
        %v2399 = vpop.xlane.xlu0 %2398
        %v2400 = vmul.f32 %v2378, %v407
        %v2401 = vmul.f32 %v2381, %v407
        %v2402 = vmul.f32 %v2384, %v407
        %v2403 = vmul.f32 %v2387, %v407
        %v2404 = vmul.f32 %v2390, %v407
        %v2405 = vmul.f32 %v2393, %v407
        %v2406 = vmul.f32 %v2396, %v407
        %v2407 = vmul.f32 %v2399, %v407
        %v2408 = vsub.f32 %v2368, %v2400
        %v2409 = vsub.f32 %v2369, %v2401
        %v2410 = vsub.f32 %v2370, %v2402
        %v2411 = vsub.f32 %v2371, %v2403
        %v2412 = vsub.f32 %v2372, %v2404
        %v2413 = vsub.f32 %v2373, %v2405
        %v2414 = vsub.f32 %v2374, %v2406
        %v2415 = vsub.f32 %v2375, %v2407
        %v2416 = vmul.f32 %v2408, %v2408
        %v2417 = vmul.f32 %v2409, %v2409
        %v2418 = vmul.f32 %v2410, %v2410
        %v2419 = vmul.f32 %v2411, %v2411
        %v2420 = vmul.f32 %v2412, %v2412
        %v2421 = vmul.f32 %v2413, %v2413
        %v2422 = vmul.f32 %v2414, %v2414
        %v2423 = vmul.f32 %v2415, %v2415
        %v2424 = vsel %vm376, %v2416, 0.0
        %2425 = vadd.xlane.f32.xlu0 %v2424
        %v2426 = vpop.xlane.xlu0 %2425
        %v2427 = vsel %vm376, %v2417, 0.0
        %2428 = vadd.xlane.f32.xlu0 %v2427
        %v2429 = vpop.xlane.xlu0 %2428
        %v2430 = vsel %vm376, %v2418, 0.0
        %2431 = vadd.xlane.f32.xlu0 %v2430
        %v2432 = vpop.xlane.xlu0 %2431
        %v2433 = vsel %vm376, %v2419, 0.0
        %2434 = vadd.xlane.f32.xlu0 %v2433
        %v2435 = vpop.xlane.xlu0 %2434
        %v2436 = vsel %vm376, %v2420, 0.0
        %2437 = vadd.xlane.f32.xlu0 %v2436
        %v2438 = vpop.xlane.xlu0 %2437
        %v2439 = vsel %vm376, %v2421, 0.0
        %2440 = vadd.xlane.f32.xlu0 %v2439
        %v2441 = vpop.xlane.xlu0 %2440
        %v2442 = vsel %vm376, %v2422, 0.0
        %2443 = vadd.xlane.f32.xlu0 %v2442
        %v2444 = vpop.xlane.xlu0 %2443
        %v2445 = vsel %vm376, %v2423, 0.0
        %2446 = vadd.xlane.f32.xlu0 %v2445
        %v2447 = vpop.xlane.xlu0 %2446
        %v2448 = vmul.f32 %v2426, %v407
        %v2449 = vmul.f32 %v2429, %v407
        %v2450 = vmul.f32 %v2432, %v407
        %v2451 = vmul.f32 %v2435, %v407
        %v2452 = vmul.f32 %v2438, %v407
        %v2453 = vmul.f32 %v2441, %v407
        %v2454 = vmul.f32 %v2444, %v407
        %v2455 = vmul.f32 %v2447, %v407
        %v2456 = vadd.f32 %v2448, 1e-05
        %v2457 = vadd.f32 %v2449, 1e-05
        %v2458 = vadd.f32 %v2450, 1e-05
        %v2459 = vadd.f32 %v2451, 1e-05
        %v2460 = vadd.f32 %v2452, 1e-05
        %v2461 = vadd.f32 %v2453, 1e-05
        %v2462 = vadd.f32 %v2454, 1e-05
        %v2463 = vadd.f32 %v2455, 1e-05
        %v2464 = vrsqrt.pop %v2456
        %v2465 = vmul.f32 %v2464, %v2456
        %v2466 = vmul.f32 %v2465, %v2464
        %v2467 = vmul.f32 0.5, %v2466
        %v2468 = vsub.f32 1.5, %v2467
        %v2469 = vmul.f32 %v2464, %v2468
        %vm2470 = vweird.f32 %v2456
        %vm2471 = vweird.f32 %v2464
        %vm2472 = vmor %vm2470, %vm2471
        %v2473 = vsel %vm2472, %v2464, %v2469
        %v2474 = vrsqrt.pop %v2457
        %v2475 = vmul.f32 %v2474, %v2457
        %v2476 = vmul.f32 %v2475, %v2474
        %v2477 = vmul.f32 0.5, %v2476
        %v2478 = vsub.f32 1.5, %v2477
        %v2479 = vmul.f32 %v2474, %v2478
        %vm2480 = vweird.f32 %v2457
        %vm2481 = vweird.f32 %v2474
        %vm2482 = vmor %vm2480, %vm2481
        %v2483 = vsel %vm2482, %v2474, %v2479
        %v2484 = vrsqrt.pop %v2458
        %v2485 = vmul.f32 %v2484, %v2458
        %v2486 = vmul.f32 %v2485, %v2484
        %v2487 = vmul.f32 0.5, %v2486
        %v2488 = vsub.f32 1.5, %v2487
        %v2489 = vmul.f32 %v2484, %v2488
        %vm2490 = vweird.f32 %v2458
        %vm2491 = vweird.f32 %v2484
        %vm2492 = vmor %vm2490, %vm2491
        %v2493 = vsel %vm2492, %v2484, %v2489
        %v2494 = vrsqrt.pop %v2459
        %v2495 = vmul.f32 %v2494, %v2459
        %v2496 = vmul.f32 %v2495, %v2494
        %v2497 = vmul.f32 0.5, %v2496
        %v2498 = vsub.f32 1.5, %v2497
        %v2499 = vmul.f32 %v2494, %v2498
        %vm2500 = vweird.f32 %v2459
        %vm2501 = vweird.f32 %v2494
        %vm2502 = vmor %vm2500, %vm2501
        %v2503 = vsel %vm2502, %v2494, %v2499
        %v2504 = vrsqrt.pop %v2460
        %v2505 = vmul.f32 %v2504, %v2460
        %v2506 = vmul.f32 %v2505, %v2504
        %v2507 = vmul.f32 0.5, %v2506
        %v2508 = vsub.f32 1.5, %v2507
        %v2509 = vmul.f32 %v2504, %v2508
        %vm2510 = vweird.f32 %v2460
        %vm2511 = vweird.f32 %v2504
        %vm2512 = vmor %vm2510, %vm2511
        %v2513 = vsel %vm2512, %v2504, %v2509
        %v2514 = vrsqrt.pop %v2461
        %v2515 = vmul.f32 %v2514, %v2461
        %v2516 = vmul.f32 %v2515, %v2514
        %v2517 = vmul.f32 0.5, %v2516
        %v2518 = vsub.f32 1.5, %v2517
        %v2519 = vmul.f32 %v2514, %v2518
        %vm2520 = vweird.f32 %v2461
        %vm2521 = vweird.f32 %v2514
        %vm2522 = vmor %vm2520, %vm2521
        %v2523 = vsel %vm2522, %v2514, %v2519
        %v2524 = vrsqrt.pop %v2462
        %v2525 = vmul.f32 %v2524, %v2462
        %v2526 = vmul.f32 %v2525, %v2524
        %v2527 = vmul.f32 0.5, %v2526
        %v2528 = vsub.f32 1.5, %v2527
        %v2529 = vmul.f32 %v2524, %v2528
        %vm2530 = vweird.f32 %v2462
        %vm2531 = vweird.f32 %v2524
        %vm2532 = vmor %vm2530, %vm2531
        %v2533 = vsel %vm2532, %v2524, %v2529
        %v2534 = vrsqrt.pop %v2463
        %v2535 = vmul.f32 %v2534, %v2463
        %v2536 = vmul.f32 %v2535, %v2534
        %v2537 = vmul.f32 0.5, %v2536
        %v2538 = vsub.f32 1.5, %v2537
        %v2539 = vmul.f32 %v2534, %v2538
        %vm2540 = vweird.f32 %v2463
        %vm2541 = vweird.f32 %v2534
        %vm2542 = vmor %vm2540, %vm2541
        %v2543 = vsel %vm2542, %v2534, %v2539
        %v2544 = vmul.f32 %v2408, %v2473
        %v2545 = vmul.f32 %v2409, %v2483
        %v2546 = vmul.f32 %v2410, %v2493
        %v2547 = vmul.f32 %v2411, %v2503
        %v2548 = vmul.f32 %v2412, %v2513
        %v2549 = vmul.f32 %v2413, %v2523
        %v2550 = vmul.f32 %v2414, %v2533
        %v2551 = vmul.f32 %v2415, %v2543
        %v2552 = vperm.slane %v369, 0
        %v2553 = vmul.f32 %v2544, %v2552
        %v2554 = vmul.f32 %v2545, %v2552
        %v2555 = vmul.f32 %v2546, %v2552
        %v2556 = vmul.f32 %v2547, %v2552
        %v2557 = vmul.f32 %v2548, %v2552
        %v2558 = vmul.f32 %v2549, %v2552
        %v2559 = vmul.f32 %v2550, %v2552
        %v2560 = vmul.f32 %v2551, %v2552
        %v2561 = vperm.slane %v370, 0
        %v2562 = vadd.f32 %v2553, %v2561
        %v2563 = vadd.f32 %v2554, %v2561
        %v2564 = vadd.f32 %v2555, %v2561
        %v2565 = vadd.f32 %v2556, %v2561
        %v2566 = vadd.f32 %v2557, %v2561
        %v2567 = vadd.f32 %v2558, %v2561
        %v2568 = vadd.f32 %v2559, %v2561
        %v2569 = vadd.f32 %v2560, %v2561
        %v2570 = vpack.c.bf16 %v2563, %v2562
        %v2571 = vpack.c.bf16 %v2565, %v2564
        %v2572 = vpack.c.bf16 %v2567, %v2566
        %v2573 = vpack.c.bf16 %v2569, %v2568
        %v2574 = vld [vmem:[%s5] sm:$0xff]
        %v2575 = vld [vmem:[%s5 + $0x8] sm:$0xff]
        %v2576 = vld [vmem:[%s5 + $0x10] sm:$0xff]
        %v2577 = vld [vmem:[%s5 + $0x18] sm:$0xff]
        %v2578 = vld [vmem:[%s5 + $0x20] sm:$0xff]
        %v2579 = vld [vmem:[%s5 + $0x28] sm:$0xff]
        %v2580 = vld [vmem:[%s5 + $0x30] sm:$0xff]
        %v2581 = vld [vmem:[%s5 + $0x38] sm:$0xff]
        %v2583 = vperm.slane %v373, 0
        %v2584 = vperm.slane %v373, 1
        %v2595 = vunpack.c.l.b16 %v2574
        %v2596 = vunpack.c.h.b16 %v2574
        %v2597 = vunpack.c.l.b16 %v2575
        %v2598 = vunpack.c.h.b16 %v2575
        %v2599 = vunpack.c.l.b16 %v2576
        %v2600 = vunpack.c.h.b16 %v2576
        %v2601 = vunpack.c.l.b16 %v2577
        %v2602 = vunpack.c.h.b16 %v2577
        %v2603 = vunpack.c.l.b16 %v2578
        %v2604 = vunpack.c.h.b16 %v2578
        %v2605 = vunpack.c.l.b16 %v2579
        %v2606 = vunpack.c.h.b16 %v2579
        %v2607 = vunpack.c.l.b16 %v2580
        %v2608 = vunpack.c.h.b16 %v2580
        %v2609 = vunpack.c.l.b16 %v2581
        %v2610 = vunpack.c.h.b16 %v2581
        %v2611 = vpack.c.b16 %v2597, %v2595
        %v2612 = vpack.c.b16 %v2598, %v2596
        %v2613 = vpack.c.b16 %v2601, %v2599
        %v2614 = vpack.c.b16 %v2602, %v2600
        %v2615 = vpack.c.b16 %v2605, %v2603
        %v2616 = vpack.c.b16 %v2606, %v2604
        %v2617 = vpack.c.b16 %v2609, %v2607
        %v2618 = vpack.c.b16 %v2610, %v2608
        %v2628 = vsel %vm376, %v2570, 0
        %v2631 = vsel %vm376, %v2571, 0
        %v2634 = vsel %vm376, %v2572, 0
        %v2637 = vsel %vm376, %v2573, 0
        %2639 = vmatpush.bf16.msra.mxu0 0
        %2640 = vmatpush.bf16.msra.mxu0 0
        %2641 = vmatpush.bf16.msra.mxu0 0
        %2642 = vmatpush.bf16.msra.mxu0 0
        %2643 = vmatpush.bf16.msra.mxu0 %v2617
        %2644 = vmatpush.bf16.msra.mxu0 %v2615
        %2645 = vmatpush.bf16.msra.mxu0 %v2613
        %2646 = vmatpush.bf16.msra.mxu0 %v2611
        %2647 = vmatmul.bf16.gmra.mxu0 %v2628
        %v2648 = vpop.f32.mrf.mxu0
        %v2649 = vadd.f32 %v2583, %v2648
        %v2650 = vpop.f32.mrf.mxu0
        %v2651 = vadd.f32 %v2583, %v2650
        %2652 = vmatmul.bf16.gmra.mxu0 %v2631
        %v2653 = vpop.f32.mrf.mxu0
        %v2654 = vadd.f32 %v2583, %v2653
        %v2655 = vpop.f32.mrf.mxu0
        %v2656 = vadd.f32 %v2583, %v2655
        %2657 = vmatmul.bf16.gmra.mxu0 %v2634
        %v2658 = vpop.f32.mrf.mxu0
        %v2659 = vadd.f32 %v2583, %v2658
        %v2660 = vpop.f32.mrf.mxu0
        %v2661 = vadd.f32 %v2583, %v2660
        %2662 = vmatmul.bf16.gmra.mxu0 %v2637
        %v2663 = vpop.f32.mrf.mxu0
        %v2664 = vadd.f32 %v2583, %v2663
        %v2665 = vpop.f32.mrf.mxu0
        %v2666 = vadd.f32 %v2583, %v2665
        %2667 = vdwg.mxu0
        %2668 = vmatpush.bf16.msra.mxu0 0
        %2669 = vmatpush.bf16.msra.mxu0 0
        %2670 = vmatpush.bf16.msra.mxu0 0
        %2671 = vmatpush.bf16.msra.mxu0 0
        %2672 = vmatpush.bf16.msra.mxu0 %v2618
        %2673 = vmatpush.bf16.msra.mxu0 %v2616
        %2674 = vmatpush.bf16.msra.mxu0 %v2614
        %2675 = vmatpush.bf16.msra.mxu0 %v2612
        %2676 = vmatmul.bf16.gmra.mxu0 %v2628
        %v2677 = vpop.f32.mrf.mxu0
        %v2678 = vadd.f32 %v2584, %v2677
        %v2679 = vpop.f32.mrf.mxu0
        %v2680 = vadd.f32 %v2584, %v2679
        %2681 = vmatmul.bf16.gmra.mxu0 %v2631
        %v2682 = vpop.f32.mrf.mxu0
        %v2683 = vadd.f32 %v2584, %v2682
        %v2684 = vpop.f32.mrf.mxu0
        %v2685 = vadd.f32 %v2584, %v2684
        %2686 = vmatmul.bf16.gmra.mxu0 %v2634
        %v2687 = vpop.f32.mrf.mxu0
        %v2688 = vadd.f32 %v2584, %v2687
        %v2689 = vpop.f32.mrf.mxu0
        %v2690 = vadd.f32 %v2584, %v2689
        %2691 = vmatmul.bf16.gmra.mxu0 %v2637
        %v2692 = vpop.f32.mrf.mxu0
        %v2693 = vadd.f32 %v2584, %v2692
        %v2694 = vpop.f32.mrf.mxu0
        %v2695 = vadd.f32 %v2584, %v2694
        %2696 = vdwg.mxu0
        %2697 = vst [vmem:[#allocation2] sm:$0xff] 0.0
        %2698 = vst [vmem:[#allocation2 + $0x8] sm:$0xff] 0.0
        %2699 = vst [vmem:[#allocation2 + $0x10] sm:$0xff] 0.0
        %2700 = vst [vmem:[#allocation2 + $0x18] sm:$0xff] 0.0
        %2701 = vst [vmem:[#allocation2 + $0xa0] sm:$0xff] 0.0
        %2702 = vst [vmem:[#allocation2 + $0xa8] sm:$0xff] 0.0
        %2703 = vst [vmem:[#allocation2 + $0xb0] sm:$0xff] 0.0
        %2704 = vst [vmem:[#allocation2 + $0xb8] sm:$0xff] 0.0
        %2705 = vst [vmem:[#allocation2 + $0x20] sm:$0xff] %v2649
        %2706 = vst [vmem:[#allocation2 + $0x28] sm:$0xff] %v2678
        %2707 = vst [vmem:[#allocation2 + $0x30] sm:$0xff] %v2651
        %2708 = vst [vmem:[#allocation2 + $0x38] sm:$0xff] %v2680
        %2709 = vst [vmem:[#allocation2 + $0x40] sm:$0xff] %v2654
        %2710 = vst [vmem:[#allocation2 + $0x48] sm:$0xff] %v2683
        %2711 = vst [vmem:[#allocation2 + $0x50] sm:$0xff] %v2656
        %2712 = vst [vmem:[#allocation2 + $0x58] sm:$0xff] %v2685
        %2713 = vst [vmem:[#allocation2 + $0x60] sm:$0xff] %v2659
        %2714 = vst [vmem:[#allocation2 + $0x68] sm:$0xff] %v2688
        %2715 = vst [vmem:[#allocation2 + $0x70] sm:$0xff] %v2661
        %2716 = vst [vmem:[#allocation2 + $0x78] sm:$0xff] %v2690
        %2717 = vst [vmem:[#allocation2 + $0x80] sm:$0xff] %v2664
        %2718 = vst [vmem:[#allocation2 + $0x88] sm:$0xff] %v2693
        %2719 = vst [vmem:[#allocation2 + $0x90] sm:$0xff] %v2666
        %2720 = vst [vmem:[#allocation2 + $0x98] sm:$0xff] %v2695
        %v2721 = vlaneseq
        %v2722 = vshrl.u32 %v2721, 7
        %v2723 = vadd.s32 %v2722, 8
        %v2724 = vadd.s32 %v2722, 16
        %v2725 = vadd.s32 %v2722, 24
        %v2726 = vadd.s32 %v2722, 32
        %v2727 = vadd.s32 %v2722, 40
        %v2728 = vadd.s32 %v2722, 48
        %v2729 = vadd.s32 %v2722, 56
        %vm2730 = vcmp.lt.s32.totalorder %v2722, 0
        %v2731 = vsub.s32 0, %v2722
        %v2732 = vsel %vm2730, %v2731, %v2722
        %v2733 = vshrl.u32 %v2732, 3
        %v2734 = vand.u32 %v2732, 7
        %v2735 = vsub.s32 0, %v2734
        %v2736 = vsel %vm2730, %v2735, %v2734
        %vm2737 = vcmp.lt.s32.totalorder %v2723, 0
        %v2738 = vsub.s32 0, %v2723
        %v2739 = vsel %vm2737, %v2738, %v2723
        %v2740 = vshrl.u32 %v2739, 3
        %v2741 = vand.u32 %v2739, 7
        %v2742 = vsub.s32 0, %v2741
        %v2743 = vsel %vm2737, %v2742, %v2741
        %vm2744 = vcmp.lt.s32.totalorder %v2724, 0
        %v2745 = vsub.s32 0, %v2724
        %v2746 = vsel %vm2744, %v2745, %v2724
        %v2747 = vshrl.u32 %v2746, 3
        %v2748 = vand.u32 %v2746, 7
        %v2749 = vsub.s32 0, %v2748
        %v2750 = vsel %vm2744, %v2749, %v2748
        %vm2751 = vcmp.lt.s32.totalorder %v2725, 0
        %v2752 = vsub.s32 0, %v2725
        %v2753 = vsel %vm2751, %v2752, %v2725
        %v2754 = vshrl.u32 %v2753, 3
        %v2755 = vand.u32 %v2753, 7
        %v2756 = vsub.s32 0, %v2755
        %v2757 = vsel %vm2751, %v2756, %v2755
        %vm2758 = vcmp.lt.s32.totalorder %v2726, 0
        %v2759 = vsub.s32 0, %v2726
        %v2760 = vsel %vm2758, %v2759, %v2726
        %v2761 = vshrl.u32 %v2760, 3
        %v2762 = vand.u32 %v2760, 7
        %v2763 = vsub.s32 0, %v2762
        %v2764 = vsel %vm2758, %v2763, %v2762
        %vm2765 = vcmp.lt.s32.totalorder %v2727, 0
        %v2766 = vsub.s32 0, %v2727
        %v2767 = vsel %vm2765, %v2766, %v2727
        %v2768 = vshrl.u32 %v2767, 3
        %v2769 = vand.u32 %v2767, 7
        %v2770 = vsub.s32 0, %v2769
        %v2771 = vsel %vm2765, %v2770, %v2769
        %vm2772 = vcmp.lt.s32.totalorder %v2728, 0
        %v2773 = vsub.s32 0, %v2728
        %v2774 = vsel %vm2772, %v2773, %v2728
        %v2775 = vshrl.u32 %v2774, 3
        %v2776 = vand.u32 %v2774, 7
        %v2777 = vsub.s32 0, %v2776
        %v2778 = vsel %vm2772, %v2777, %v2776
        %vm2779 = vcmp.lt.s32.totalorder %v2729, 0
        %v2780 = vsub.s32 0, %v2729
        %v2781 = vsel %vm2779, %v2780, %v2729
        %v2782 = vshrl.u32 %v2781, 3
        %v2783 = vand.u32 %v2781, 7
        %v2784 = vsub.s32 0, %v2783
        %v2785 = vsel %vm2779, %v2784, %v2783
        %vm2786 = vcmp.ne.s32.totalorder %v2736, 0
        %vm2787 = vcmp.ne.s32.totalorder %v2743, 0
        %vm2788 = vcmp.ne.s32.totalorder %v2750, 0
        %vm2789 = vcmp.ne.s32.totalorder %v2757, 0
        %vm2790 = vcmp.ne.s32.totalorder %v2764, 0
        %vm2791 = vcmp.ne.s32.totalorder %v2771, 0
        %vm2792 = vcmp.ne.s32.totalorder %v2778, 0
        %vm2793 = vcmp.ne.s32.totalorder %v2785, 0
        %vm2794 = vcmp.lt.s32.totalorder %v2736, 0
        %vm2795 = vcmp.lt.s32.totalorder %v2743, 0
        %vm2796 = vcmp.lt.s32.totalorder %v2750, 0
        %vm2797 = vcmp.lt.s32.totalorder %v2757, 0
        %vm2798 = vcmp.lt.s32.totalorder %v2764, 0
        %vm2799 = vcmp.lt.s32.totalorder %v2771, 0
        %vm2800 = vcmp.lt.s32.totalorder %v2778, 0
        %vm2801 = vcmp.lt.s32.totalorder %v2785, 0
        %vm2802 = vmand %vm2794, %vm2786
        %vm2803 = vmand %vm2795, %vm2787
        %vm2804 = vmand %vm2796, %vm2788
        %vm2805 = vmand %vm2797, %vm2789
        %vm2806 = vmand %vm2798, %vm2790
        %vm2807 = vmand %vm2799, %vm2791
        %vm2808 = vmand %vm2800, %vm2792
        %vm2809 = vmand %vm2801, %vm2793
        %v2810 = vadd.s32 %v2736, 8
        %v2811 = vadd.s32 %v2743, 8
        %v2812 = vadd.s32 %v2750, 8
        %v2813 = vadd.s32 %v2757, 8
        %v2814 = vadd.s32 %v2764, 8
        %v2815 = vadd.s32 %v2771, 8
        %v2816 = vadd.s32 %v2778, 8
        %v2817 = vadd.s32 %v2785, 8
        %v2818 = vsel %vm2802, %v2810, %v2736
        %v2819 = vsel %vm2803, %v2811, %v2743
        %v2820 = vsel %vm2804, %v2812, %v2750
        %v2821 = vsel %vm2805, %v2813, %v2757
        %v2822 = vsel %vm2806, %v2814, %v2764
        %v2823 = vsel %vm2807, %v2815, %v2771
        %v2824 = vsel %vm2808, %v2816, %v2778
        %v2825 = vsel %vm2809, %v2817, %v2785
        %vm2826 = vcmp.ge.s32.totalorder %v2818, 1
        %vm2827 = vcmp.ge.s32.totalorder %v2819, 1
        %vm2828 = vcmp.ge.s32.totalorder %v2820, 1
        %vm2829 = vcmp.ge.s32.totalorder %v2821, 1
        %vm2830 = vcmp.ge.s32.totalorder %v2822, 1
        %vm2831 = vcmp.ge.s32.totalorder %v2823, 1
        %vm2832 = vcmp.ge.s32.totalorder %v2824, 1
        %vm2833 = vcmp.ge.s32.totalorder %v2825, 1
        %v2834 = vsel %vm2826, 1, 0
        %v2835 = vsel %vm2827, 1, 0
        %v2836 = vsel %vm2828, 1, 0
        %v2837 = vsel %vm2829, 1, 0
        %v2838 = vsel %vm2830, 1, 0
        %v2839 = vsel %vm2831, 1, 0
        %v2840 = vsel %vm2832, 1, 0
        %v2841 = vsel %vm2833, 1, 0
        %v2842 = vcvt.s32.f32 %v2834
        %v2843 = vcvt.s32.f32 %v2835
        %v2844 = vcvt.s32.f32 %v2836
        %v2845 = vcvt.s32.f32 %v2837
        %v2846 = vcvt.s32.f32 %v2838
        %v2847 = vcvt.s32.f32 %v2839
        %v2848 = vcvt.s32.f32 %v2840
        %v2849 = vcvt.s32.f32 %v2841
        %vm2850 = vcmp.le.s32.totalorder %v2818, 6
        %vm2851 = vcmp.le.s32.totalorder %v2819, 6
        %vm2852 = vcmp.le.s32.totalorder %v2820, 6
        %vm2853 = vcmp.le.s32.totalorder %v2821, 6
        %vm2854 = vcmp.le.s32.totalorder %v2822, 6
        %vm2855 = vcmp.le.s32.totalorder %v2823, 6
        %vm2856 = vcmp.le.s32.totalorder %v2824, 6
        %vm2857 = vcmp.le.s32.totalorder %v2825, 6
        %v2858 = vsel %vm2850, 1, 0
        %v2859 = vsel %vm2851, 1, 0
        %v2860 = vsel %vm2852, 1, 0
        %v2861 = vsel %vm2853, 1, 0
        %v2862 = vsel %vm2854, 1, 0
        %v2863 = vsel %vm2855, 1, 0
        %v2864 = vsel %vm2856, 1, 0
        %v2865 = vsel %vm2857, 1, 0
        %v2866 = vcvt.s32.f32 %v2858
        %v2867 = vcvt.s32.f32 %v2859
        %v2868 = vcvt.s32.f32 %v2860
        %v2869 = vcvt.s32.f32 %v2861
        %v2870 = vcvt.s32.f32 %v2862
        %v2871 = vcvt.s32.f32 %v2863
        %v2872 = vcvt.s32.f32 %v2864
        %v2873 = vcvt.s32.f32 %v2865
        %v2874 = vld [vmem:[%s7] sm:$0xff]
        %v2875 = vld [vmem:[%s7 + $0x8] sm:$0xff]
        %v2876 = vld [vmem:[%s7 + $0x10] sm:$0x1]
        %v2877 = vld [vmem:[%s7 + $0x18] sm:$0x1]
        %v2878 = vld [vmem:[#allocation2] sm:$0x80]
        %v2879 = vld [vmem:[#allocation2 + $0x8] sm:$0x80]
        %v2880 = vld [vmem:[#allocation2 + $0x10] sm:$0xff]
        %v2881 = vld [vmem:[#allocation2 + $0x18] sm:$0xff]
        %v2882 = vld [vmem:[#allocation2 + $0x20] sm:$0xff]
        %v2883 = vld [vmem:[#allocation2 + $0x28] sm:$0xff]
        %v2884 = vld [vmem:[#allocation2 + $0x30] sm:$0xff]
        %v2885 = vld [vmem:[#allocation2 + $0x38] sm:$0xff]
        %v2886 = vld [vmem:[#allocation2 + $0x40] sm:$0xff]
        %v2887 = vld [vmem:[#allocation2 + $0x48] sm:$0xff]
        %v2888 = vld [vmem:[#allocation2 + $0x50] sm:$0xff]
        %v2889 = vld [vmem:[#allocation2 + $0x58] sm:$0xff]
        %v2890 = vld [vmem:[#allocation2 + $0x60] sm:$0xff]
        %v2891 = vld [vmem:[#allocation2 + $0x68] sm:$0xff]
        %v2892 = vld [vmem:[#allocation2 + $0x70] sm:$0xff]
        %v2893 = vld [vmem:[#allocation2 + $0x78] sm:$0xff]
        %v2894 = vld [vmem:[#allocation2 + $0x80] sm:$0x7f]
        %v2895 = vld [vmem:[#allocation2 + $0x88] sm:$0x7f]
        %v2896 = vperm.slane %v2874, 0
        %v2897 = vperm.slane %v2875, 0
        %v2898 = vmul.f32 %v2842, %v2896
        %v2899 = vmul.f32 %v2842, %v2897
        %v2900 = vmul.f32 %v2843, %v2896
        %v2901 = vmul.f32 %v2843, %v2897
        %v2902 = vmul.f32 %v2844, %v2896
        %v2903 = vmul.f32 %v2844, %v2897
        %v2904 = vmul.f32 %v2845, %v2896
        %v2905 = vmul.f32 %v2845, %v2897
        %v2906 = vmul.f32 %v2846, %v2896
        %v2907 = vmul.f32 %v2846, %v2897
        %v2908 = vmul.f32 %v2847, %v2896
        %v2909 = vmul.f32 %v2847, %v2897
        %v2910 = vmul.f32 %v2848, %v2896
        %v2911 = vmul.f32 %v2848, %v2897
        %v2912 = vmul.f32 %v2849, %v2896
        %v2913 = vmul.f32 %v2849, %v2897
        %vm2930 = vcmask 1046528
        %v2931 = vrot.slane %v2898, 1
        %v2932 = vrot.slane %v2899, 1
        %v2933 = vrot.slane %v2900, 1
        %v2934 = vsel %vm2930, %v2931, %v2933
        %v2935 = vrot.slane %v2901, 1
        %v2936 = vsel %vm2930, %v2932, %v2935
        %v2937 = vrot.slane %v2902, 1
        %v2938 = vsel %vm2930, %v2933, %v2937
        %v2939 = vrot.slane %v2903, 1
        %v2940 = vsel %vm2930, %v2935, %v2939
        %v2941 = vrot.slane %v2904, 1
        %v2942 = vsel %vm2930, %v2937, %v2941
        %v2943 = vrot.slane %v2905, 1
        %v2944 = vsel %vm2930, %v2939, %v2943
        %v2945 = vrot.slane %v2906, 1
        %v2946 = vsel %vm2930, %v2941, %v2945
        %v2947 = vrot.slane %v2907, 1
        %v2948 = vsel %vm2930, %v2943, %v2947
        %v2949 = vrot.slane %v2908, 1
        %v2950 = vsel %vm2930, %v2945, %v2949
        %v2951 = vrot.slane %v2909, 1
        %v2952 = vsel %vm2930, %v2947, %v2951
        %v2953 = vrot.slane %v2910, 1
        %v2954 = vsel %vm2930, %v2949, %v2953
        %v2955 = vrot.slane %v2911, 1
        %v2956 = vsel %vm2930, %v2951, %v2955
        %v2957 = vrot.slane %v2912, 1
        %v2958 = vsel %vm2930, %v2953, %v2957
        %v2959 = vrot.slane %v2913, 1
        %v2960 = vsel %vm2930, %v2955, %v2959
        %v2979 = vmul.f32 %v2878, %v2931
        %v2980 = vmul.f32 %v2879, %v2932
        %v2981 = vmul.f32 %v2880, %v2934
        %v2982 = vmul.f32 %v2881, %v2936
        %v2983 = vmul.f32 %v2882, %v2938
        %v2984 = vmul.f32 %v2883, %v2940
        %v2985 = vmul.f32 %v2884, %v2942
        %v2986 = vmul.f32 %v2885, %v2944
        %v2987 = vmul.f32 %v2886, %v2946
        %v2988 = vmul.f32 %v2887, %v2948
        %v2989 = vmul.f32 %v2888, %v2950
        %v2990 = vmul.f32 %v2889, %v2952
        %v2991 = vmul.f32 %v2890, %v2954
        %v2992 = vmul.f32 %v2891, %v2956
        %v2993 = vmul.f32 %v2892, %v2958
        %v2994 = vmul.f32 %v2893, %v2960
        %v2995 = vmul.f32 %v2894, %v2957
        %v2996 = vmul.f32 %v2895, %v2959
        %v2997 = vadd.f32 %v2979, 0.0
        %v2998 = vadd.f32 %v2980, 0.0
        %v2999 = vadd.f32 %v2981, 0.0
        %v3000 = vadd.f32 %v2982, 0.0
        %v3001 = vadd.f32 %v2983, 0.0
        %v3002 = vadd.f32 %v2984, 0.0
        %v3003 = vadd.f32 %v2985, 0.0
        %v3004 = vadd.f32 %v2986, 0.0
        %v3005 = vadd.f32 %v2987, 0.0
        %v3006 = vadd.f32 %v2988, 0.0
        %v3007 = vadd.f32 %v2989, 0.0
        %v3008 = vadd.f32 %v2990, 0.0
        %v3009 = vadd.f32 %v2991, 0.0
        %v3010 = vadd.f32 %v2992, 0.0
        %v3011 = vadd.f32 %v2993, 0.0
        %v3012 = vadd.f32 %v2994, 0.0
        %v3013 = vadd.f32 %v2995, 0.0
        %v3014 = vadd.f32 %v2996, 0.0
        %v3015 = vld [vmem:[#allocation2 + $0x80] sm:$0xff]
        %v3016 = vld [vmem:[#allocation2 + $0x88] sm:$0xff]
        %v3017 = vperm.slane %v2874, 1
        %v3018 = vperm.slane %v2875, 1
        %v3019 = vmul.f32 %v2880, %v3017
        %v3020 = vmul.f32 %v2881, %v3018
        %v3021 = vmul.f32 %v2882, %v3017
        %v3022 = vmul.f32 %v2883, %v3018
        %v3023 = vmul.f32 %v2884, %v3017
        %v3024 = vmul.f32 %v2885, %v3018
        %v3025 = vmul.f32 %v2886, %v3017
        %v3026 = vmul.f32 %v2887, %v3018
        %v3027 = vmul.f32 %v2888, %v3017
        %v3028 = vmul.f32 %v2889, %v3018
        %v3029 = vmul.f32 %v2890, %v3017
        %v3030 = vmul.f32 %v2891, %v3018
        %v3031 = vmul.f32 %v2892, %v3017
        %v3032 = vmul.f32 %v2893, %v3018
        %v3033 = vmul.f32 %v3015, %v3017
        %v3034 = vmul.f32 %v3016, %v3018
        %v3051 = vrot.slane %v3019, 1
        %v3052 = vrot.slane %v3020, 1
        %v3053 = vrot.slane %v3021, 1
        %v3054 = vsel %vm2930, %v3051, %v3053
        %v3055 = vrot.slane %v3022, 1
        %v3056 = vsel %vm2930, %v3052, %v3055
        %v3057 = vrot.slane %v3023, 1
        %v3058 = vsel %vm2930, %v3053, %v3057
        %v3059 = vrot.slane %v3024, 1
        %v3060 = vsel %vm2930, %v3055, %v3059
        %v3061 = vrot.slane %v3025, 1
        %v3062 = vsel %vm2930, %v3057, %v3061
        %v3063 = vrot.slane %v3026, 1
        %v3064 = vsel %vm2930, %v3059, %v3063
        %v3065 = vrot.slane %v3027, 1
        %v3066 = vsel %vm2930, %v3061, %v3065
        %v3067 = vrot.slane %v3028, 1
        %v3068 = vsel %vm2930, %v3063, %v3067
        %v3069 = vrot.slane %v3029, 1
        %v3070 = vsel %vm2930, %v3065, %v3069
        %v3071 = vrot.slane %v3030, 1
        %v3072 = vsel %vm2930, %v3067, %v3071
        %v3073 = vrot.slane %v3031, 1
        %v3074 = vsel %vm2930, %v3069, %v3073
        %v3075 = vrot.slane %v3032, 1
        %v3076 = vsel %vm2930, %v3071, %v3075
        %v3077 = vrot.slane %v3033, 1
        %v3078 = vsel %vm2930, %v3073, %v3077
        %v3079 = vrot.slane %v3034, 1
        %v3080 = vsel %vm2930, %v3075, %v3079
        %v3099 = vadd.f32 %v2997, %v3051
        %v3100 = vadd.f32 %v2998, %v3052
        %v3101 = vadd.f32 %v2999, %v3054
        %v3102 = vadd.f32 %v3000, %v3056
        %v3103 = vadd.f32 %v3001, %v3058
        %v3104 = vadd.f32 %v3002, %v3060
        %v3105 = vadd.f32 %v3003, %v3062
        %v3106 = vadd.f32 %v3004, %v3064
        %v3107 = vadd.f32 %v3005, %v3066
        %v3108 = vadd.f32 %v3006, %v3068
        %v3109 = vadd.f32 %v3007, %v3070
        %v3110 = vadd.f32 %v3008, %v3072
        %v3111 = vadd.f32 %v3009, %v3074
        %v3112 = vadd.f32 %v3010, %v3076
        %v3113 = vadd.f32 %v3011, %v3078
        %v3114 = vadd.f32 %v3012, %v3080
        %v3115 = vadd.f32 %v3013, %v3077
        %v3116 = vadd.f32 %v3014, %v3079
        %v3117 = vld [vmem:[#allocation2 + $0x10] sm:$0xfe]
        %v3118 = vld [vmem:[#allocation2 + $0x18] sm:$0xfe]
        %v3119 = vld [vmem:[#allocation2 + $0x90] sm:$0x1]
        %v3120 = vld [vmem:[#allocation2 + $0x98] sm:$0x1]
        %v3121 = vperm.slane %v2874, 2
        %v3122 = vperm.slane %v2875, 2
        %v3123 = vmul.f32 %v2866, %v3121
        %v3124 = vmul.f32 %v2866, %v3122
        %v3125 = vmul.f32 %v2867, %v3121
        %v3126 = vmul.f32 %v2867, %v3122
        %v3127 = vmul.f32 %v2868, %v3121
        %v3128 = vmul.f32 %v2868, %v3122
        %v3129 = vmul.f32 %v2869, %v3121
        %v3130 = vmul.f32 %v2869, %v3122
        %v3131 = vmul.f32 %v2870, %v3121
        %v3132 = vmul.f32 %v2870, %v3122
        %v3133 = vmul.f32 %v2871, %v3121
        %v3134 = vmul.f32 %v2871, %v3122
        %v3135 = vmul.f32 %v2872, %v3121
        %v3136 = vmul.f32 %v2872, %v3122
        %v3137 = vmul.f32 %v2873, %v3121
        %v3138 = vmul.f32 %v2873, %v3122
        %vm3155 = vcmask 1040384
        %v3156 = vrot.slane %v3123, 7
        %v3157 = vrot.slane %v3124, 7
        %v3158 = vrot.slane %v3125, 7
        %v3159 = vsel %vm3155, %v3156, %v3158
        %v3160 = vrot.slane %v3126, 7
        %v3161 = vsel %vm3155, %v3157, %v3160
        %v3162 = vrot.slane %v3127, 7
        %v3163 = vsel %vm3155, %v3158, %v3162
        %v3164 = vrot.slane %v3128, 7
        %v3165 = vsel %vm3155, %v3160, %v3164
        %v3166 = vrot.slane %v3129, 7
        %v3167 = vsel %vm3155, %v3162, %v3166
        %v3168 = vrot.slane %v3130, 7
        %v3169 = vsel %vm3155, %v3164, %v3168
        %v3170 = vrot.slane %v3131, 7
        %v3171 = vsel %vm3155, %v3166, %v3170
        %v3172 = vrot.slane %v3132, 7
        %v3173 = vsel %vm3155, %v3168, %v3172
        %v3174 = vrot.slane %v3133, 7
        %v3175 = vsel %vm3155, %v3170, %v3174
        %v3176 = vrot.slane %v3134, 7
        %v3177 = vsel %vm3155, %v3172, %v3176
        %v3178 = vrot.slane %v3135, 7
        %v3179 = vsel %vm3155, %v3174, %v3178
        %v3180 = vrot.slane %v3136, 7
        %v3181 = vsel %vm3155, %v3176, %v3180
        %v3182 = vrot.slane %v3137, 7
        %v3183 = vsel %vm3155, %v3178, %v3182
        %v3184 = vrot.slane %v3138, 7
        %v3185 = vsel %vm3155, %v3180, %v3184
        %v3204 = vmul.f32 %v3117, %v3156
        %v3205 = vmul.f32 %v3118, %v3157
        %v3206 = vmul.f32 %v2882, %v3159
        %v3207 = vmul.f32 %v2883, %v3161
        %v3208 = vmul.f32 %v2884, %v3163
        %v3209 = vmul.f32 %v2885, %v3165
        %v3210 = vmul.f32 %v2886, %v3167
        %v3211 = vmul.f32 %v2887, %v3169
        %v3212 = vmul.f32 %v2888, %v3171
        %v3213 = vmul.f32 %v2889, %v3173
        %v3214 = vmul.f32 %v2890, %v3175
        %v3215 = vmul.f32 %v2891, %v3177
        %v3216 = vmul.f32 %v2892, %v3179
        %v3217 = vmul.f32 %v2893, %v3181
        %v3218 = vmul.f32 %v3015, %v3183
        %v3219 = vmul.f32 %v3016, %v3185
        %v3220 = vmul.f32 %v3119, %v3182
        %v3221 = vmul.f32 %v3120, %v3184
        %vm3240 = vcmask 1045504
        %v3241 = vrot.slane %v3204, 2
        %v3242 = vrot.slane %v3205, 2
        %v3243 = vrot.slane %v3206, 2
        %v3244 = vsel %vm3240, %v3241, %v3243
        %v3245 = vrot.slane %v3207, 2
        %v3246 = vsel %vm3240, %v3242, %v3245
        %v3247 = vrot.slane %v3208, 2
        %v3248 = vsel %vm3240, %v3243, %v3247
        %v3249 = vrot.slane %v3209, 2
        %v3250 = vsel %vm3240, %v3245, %v3249
        %v3251 = vrot.slane %v3210, 2
        %v3252 = vsel %vm3240, %v3247, %v3251
        %v3253 = vrot.slane %v3211, 2
        %v3254 = vsel %vm3240, %v3249, %v3253
        %v3255 = vrot.slane %v3212, 2
        %v3256 = vsel %vm3240, %v3251, %v3255
        %v3257 = vrot.slane %v3213, 2
        %v3258 = vsel %vm3240, %v3253, %v3257
        %v3259 = vrot.slane %v3214, 2
        %v3260 = vsel %vm3240, %v3255, %v3259
        %v3261 = vrot.slane %v3215, 2
        %v3262 = vsel %vm3240, %v3257, %v3261
        %v3263 = vrot.slane %v3216, 2
        %v3264 = vsel %vm3240, %v3259, %v3263
        %v3265 = vrot.slane %v3217, 2
        %v3266 = vsel %vm3240, %v3261, %v3265
        %v3267 = vrot.slane %v3218, 2
        %v3268 = vsel %vm3240, %v3263, %v3267
        %v3269 = vrot.slane %v3219, 2
        %v3270 = vsel %vm3240, %v3265, %v3269
        %v3271 = vrot.slane %v3220, 2
        %v3272 = vsel %vm3240, %v3267, %v3271
        %v3273 = vrot.slane %v3221, 2
        %v3274 = vsel %vm3240, %v3269, %v3273
        %v3293 = vadd.f32 %v3099, %v3241
        %v3294 = vadd.f32 %v3100, %v3242
        %v3295 = vadd.f32 %v3101, %v3244
        %v3296 = vadd.f32 %v3102, %v3246
        %v3297 = vadd.f32 %v3103, %v3248
        %v3298 = vadd.f32 %v3104, %v3250
        %v3299 = vadd.f32 %v3105, %v3252
        %v3300 = vadd.f32 %v3106, %v3254
        %v3301 = vadd.f32 %v3107, %v3256
        %v3302 = vadd.f32 %v3108, %v3258
        %v3303 = vadd.f32 %v3109, %v3260
        %v3304 = vadd.f32 %v3110, %v3262
        %v3305 = vadd.f32 %v3111, %v3264
        %v3306 = vadd.f32 %v3112, %v3266
        %v3307 = vadd.f32 %v3113, %v3268
        %v3308 = vadd.f32 %v3114, %v3270
        %v3309 = vadd.f32 %v3115, %v3272
        %v3310 = vadd.f32 %v3116, %v3274
        %v3311 = vld [vmem:[#allocation2 + $0x10] sm:$0x80]
        %v3312 = vld [vmem:[#allocation2 + $0x18] sm:$0x80]
        %v3313 = vld [vmem:[#allocation2 + $0x90] sm:$0x7f]
        %v3314 = vld [vmem:[#allocation2 + $0x98] sm:$0x7f]
        %v3315 = vperm.slane %v2874, 3
        %v3316 = vperm.slane %v2875, 3
        %v3317 = vmul.f32 %v2842, %v3315
        %v3318 = vmul.f32 %v2842, %v3316
        %v3319 = vmul.f32 %v2843, %v3315
        %v3320 = vmul.f32 %v2843, %v3316
        %v3321 = vmul.f32 %v2844, %v3315
        %v3322 = vmul.f32 %v2844, %v3316
        %v3323 = vmul.f32 %v2845, %v3315
        %v3324 = vmul.f32 %v2845, %v3316
        %v3325 = vmul.f32 %v2846, %v3315
        %v3326 = vmul.f32 %v2846, %v3316
        %v3327 = vmul.f32 %v2847, %v3315
        %v3328 = vmul.f32 %v2847, %v3316
        %v3329 = vmul.f32 %v2848, %v3315
        %v3330 = vmul.f32 %v2848, %v3316
        %v3331 = vmul.f32 %v2849, %v3315
        %v3332 = vmul.f32 %v2849, %v3316
        %v3349 = vrot.slane %v3317, 1
        %v3350 = vrot.slane %v3318, 1
        %v3351 = vrot.slane %v3319, 1
        %v3352 = vsel %vm2930, %v3349, %v3351
        %v3353 = vrot.slane %v3320, 1
        %v3354 = vsel %vm2930, %v3350, %v3353
        %v3355 = vrot.slane %v3321, 1
        %v3356 = vsel %vm2930, %v3351, %v3355
        %v3357 = vrot.slane %v3322, 1
        %v3358 = vsel %vm2930, %v3353, %v3357
        %v3359 = vrot.slane %v3323, 1
        %v3360 = vsel %vm2930, %v3355, %v3359
        %v3361 = vrot.slane %v3324, 1
        %v3362 = vsel %vm2930, %v3357, %v3361
        %v3363 = vrot.slane %v3325, 1
        %v3364 = vsel %vm2930, %v3359, %v3363
        %v3365 = vrot.slane %v3326, 1
        %v3366 = vsel %vm2930, %v3361, %v3365
        %v3367 = vrot.slane %v3327, 1
        %v3368 = vsel %vm2930, %v3363, %v3367
        %v3369 = vrot.slane %v3328, 1
        %v3370 = vsel %vm2930, %v3365, %v3369
        %v3371 = vrot.slane %v3329, 1
        %v3372 = vsel %vm2930, %v3367, %v3371
        %v3373 = vrot.slane %v3330, 1
        %v3374 = vsel %vm2930, %v3369, %v3373
        %v3375 = vrot.slane %v3331, 1
        %v3376 = vsel %vm2930, %v3371, %v3375
        %v3377 = vrot.slane %v3332, 1
        %v3378 = vsel %vm2930, %v3373, %v3377
        %v3397 = vmul.f32 %v3311, %v3349
        %v3398 = vmul.f32 %v3312, %v3350
        %v3399 = vmul.f32 %v2882, %v3352
        %v3400 = vmul.f32 %v2883, %v3354
        %v3401 = vmul.f32 %v2884, %v3356
        %v3402 = vmul.f32 %v2885, %v3358
        %v3403 = vmul.f32 %v2886, %v3360
        %v3404 = vmul.f32 %v2887, %v3362
        %v3405 = vmul.f32 %v2888, %v3364
        %v3406 = vmul.f32 %v2889, %v3366
        %v3407 = vmul.f32 %v2890, %v3368
        %v3408 = vmul.f32 %v2891, %v3370
        %v3409 = vmul.f32 %v2892, %v3372
        %v3410 = vmul.f32 %v2893, %v3374
        %v3411 = vmul.f32 %v3015, %v3376
        %v3412 = vmul.f32 %v3016, %v3378
        %v3413 = vmul.f32 %v3313, %v3375
        %v3414 = vmul.f32 %v3314, %v3377
        %v3415 = vadd.f32 %v3293, %v3397
        %v3416 = vadd.f32 %v3294, %v3398
        %v3417 = vadd.f32 %v3295, %v3399
        %v3418 = vadd.f32 %v3296, %v3400
        %v3419 = vadd.f32 %v3297, %v3401
        %v3420 = vadd.f32 %v3298, %v3402
        %v3421 = vadd.f32 %v3299, %v3403
        %v3422 = vadd.f32 %v3300, %v3404
        %v3423 = vadd.f32 %v3301, %v3405
        %v3424 = vadd.f32 %v3302, %v3406
        %v3425 = vadd.f32 %v3303, %v3407
        %v3426 = vadd.f32 %v3304, %v3408
        %v3427 = vadd.f32 %v3305, %v3409
        %v3428 = vadd.f32 %v3306, %v3410
        %v3429 = vadd.f32 %v3307, %v3411
        %v3430 = vadd.f32 %v3308, %v3412
        %v3431 = vadd.f32 %v3309, %v3413
        %v3432 = vadd.f32 %v3310, %v3414
        %v3433 = vld [vmem:[#allocation2 + $0x90] sm:$0xff]
        %v3434 = vld [vmem:[#allocation2 + $0x98] sm:$0xff]
        %v3435 = vperm.slane %v2874, 4
        %v3436 = vperm.slane %v2875, 4
        %v3437 = vmul.f32 %v2882, %v3435
        %v3438 = vmul.f32 %v2883, %v3436
        %v3439 = vmul.f32 %v2884, %v3435
        %v3440 = vmul.f32 %v2885, %v3436
        %v3441 = vmul.f32 %v2886, %v3435
        %v3442 = vmul.f32 %v2887, %v3436
        %v3443 = vmul.f32 %v2888, %v3435
        %v3444 = vmul.f32 %v2889, %v3436
        %v3445 = vmul.f32 %v2890, %v3435
        %v3446 = vmul.f32 %v2891, %v3436
        %v3447 = vmul.f32 %v2892, %v3435
        %v3448 = vmul.f32 %v2893, %v3436
        %v3449 = vmul.f32 %v3015, %v3435
        %v3450 = vmul.f32 %v3016, %v3436
        %v3451 = vmul.f32 %v3433, %v3435
        %v3452 = vmul.f32 %v3434, %v3436
        %v3469 = vrot.slane %v3437, 1
        %v3470 = vrot.slane %v3438, 1
        %v3471 = vrot.slane %v3439, 1
        %v3472 = vsel %vm2930, %v3469, %v3471
        %v3473 = vrot.slane %v3440, 1
        %v3474 = vsel %vm2930, %v3470, %v3473
        %v3475 = vrot.slane %v3441, 1
        %v3476 = vsel %vm2930, %v3471, %v3475
        %v3477 = vrot.slane %v3442, 1
        %v3478 = vsel %vm2930, %v3473, %v3477
        %v3479 = vrot.slane %v3443, 1
        %v3480 = vsel %vm2930, %v3475, %v3479
        %v3481 = vrot.slane %v3444, 1
        %v3482 = vsel %vm2930, %v3477, %v3481
        %v3483 = vrot.slane %v3445, 1
        %v3484 = vsel %vm2930, %v3479, %v3483
        %v3485 = vrot.slane %v3446, 1
        %v3486 = vsel %vm2930, %v3481, %v3485
        %v3487 = vrot.slane %v3447, 1
        %v3488 = vsel %vm2930, %v3483, %v3487
        %v3489 = vrot.slane %v3448, 1
        %v3490 = vsel %vm2930, %v3485, %v3489
        %v3491 = vrot.slane %v3449, 1
        %v3492 = vsel %vm2930, %v3487, %v3491
        %v3493 = vrot.slane %v3450, 1
        %v3494 = vsel %vm2930, %v3489, %v3493
        %v3495 = vrot.slane %v3451, 1
        %v3496 = vsel %vm2930, %v3491, %v3495
        %v3497 = vrot.slane %v3452, 1
        %v3498 = vsel %vm2930, %v3493, %v3497
        %v3517 = vadd.f32 %v3415, %v3469
        %v3518 = vadd.f32 %v3416, %v3470
        %v3519 = vadd.f32 %v3417, %v3472
        %v3520 = vadd.f32 %v3418, %v3474
        %v3521 = vadd.f32 %v3419, %v3476
        %v3522 = vadd.f32 %v3420, %v3478
        %v3523 = vadd.f32 %v3421, %v3480
        %v3524 = vadd.f32 %v3422, %v3482
        %v3525 = vadd.f32 %v3423, %v3484
        %v3526 = vadd.f32 %v3424, %v3486
        %v3527 = vadd.f32 %v3425, %v3488
        %v3528 = vadd.f32 %v3426, %v3490
        %v3529 = vadd.f32 %v3427, %v3492
        %v3530 = vadd.f32 %v3428, %v3494
        %v3531 = vadd.f32 %v3429, %v3496
        %v3532 = vadd.f32 %v3430, %v3498
        %v3533 = vadd.f32 %v3431, %v3495
        %v3534 = vadd.f32 %v3432, %v3497
        %v3535 = vld [vmem:[#allocation2 + $0x20] sm:$0xfe]
        %v3536 = vld [vmem:[#allocation2 + $0x28] sm:$0xfe]
        %v3537 = vld [vmem:[#allocation2 + $0xa0] sm:$0x1]
        %v3538 = vld [vmem:[#allocation2 + $0xa8] sm:$0x1]
        %v3539 = vperm.slane %v2874, 5
        %v3540 = vperm.slane %v2875, 5
        %v3541 = vmul.f32 %v2866, %v3539
        %v3542 = vmul.f32 %v2866, %v3540
        %v3543 = vmul.f32 %v2867, %v3539
        %v3544 = vmul.f32 %v2867, %v3540
        %v3545 = vmul.f32 %v2868, %v3539
        %v3546 = vmul.f32 %v2868, %v3540
        %v3547 = vmul.f32 %v2869, %v3539
        %v3548 = vmul.f32 %v2869, %v3540
        %v3549 = vmul.f32 %v2870, %v3539
        %v3550 = vmul.f32 %v2870, %v3540
        %v3551 = vmul.f32 %v2871, %v3539
        %v3552 = vmul.f32 %v2871, %v3540
        %v3553 = vmul.f32 %v2872, %v3539
        %v3554 = vmul.f32 %v2872, %v3540
        %v3555 = vmul.f32 %v2873, %v3539
        %v3556 = vmul.f32 %v2873, %v3540
        %v3573 = vrot.slane %v3541, 7
        %v3574 = vrot.slane %v3542, 7
        %v3575 = vrot.slane %v3543, 7
        %v3576 = vsel %vm3155, %v3573, %v3575
        %v3577 = vrot.slane %v3544, 7
        %v3578 = vsel %vm3155, %v3574, %v3577
        %v3579 = vrot.slane %v3545, 7
        %v3580 = vsel %vm3155, %v3575, %v3579
        %v3581 = vrot.slane %v3546, 7
        %v3582 = vsel %vm3155, %v3577, %v3581
        %v3583 = vrot.slane %v3547, 7
        %v3584 = vsel %vm3155, %v3579, %v3583
        %v3585 = vrot.slane %v3548, 7
        %v3586 = vsel %vm3155, %v3581, %v3585
        %v3587 = vrot.slane %v3549, 7
        %v3588 = vsel %vm3155, %v3583, %v3587
        %v3589 = vrot.slane %v3550, 7
        %v3590 = vsel %vm3155, %v3585, %v3589
        %v3591 = vrot.slane %v3551, 7
        %v3592 = vsel %vm3155, %v3587, %v3591
        %v3593 = vrot.slane %v3552, 7
        %v3594 = vsel %vm3155, %v3589, %v3593
        %v3595 = vrot.slane %v3553, 7
        %v3596 = vsel %vm3155, %v3591, %v3595
        %v3597 = vrot.slane %v3554, 7
        %v3598 = vsel %vm3155, %v3593, %v3597
        %v3599 = vrot.slane %v3555, 7
        %v3600 = vsel %vm3155, %v3595, %v3599
        %v3601 = vrot.slane %v3556, 7
        %v3602 = vsel %vm3155, %v3597, %v3601
        %v3621 = vmul.f32 %v3535, %v3573
        %v3622 = vmul.f32 %v3536, %v3574
        %v3623 = vmul.f32 %v2884, %v3576
        %v3624 = vmul.f32 %v2885, %v3578
        %v3625 = vmul.f32 %v2886, %v3580
        %v3626 = vmul.f32 %v2887, %v3582
        %v3627 = vmul.f32 %v2888, %v3584
        %v3628 = vmul.f32 %v2889, %v3586
        %v3629 = vmul.f32 %v2890, %v3588
        %v3630 = vmul.f32 %v2891, %v3590
        %v3631 = vmul.f32 %v2892, %v3592
        %v3632 = vmul.f32 %v2893, %v3594
        %v3633 = vmul.f32 %v3015, %v3596
        %v3634 = vmul.f32 %v3016, %v3598
        %v3635 = vmul.f32 %v3433, %v3600
        %v3636 = vmul.f32 %v3434, %v3602
        %v3637 = vmul.f32 %v3537, %v3599
        %v3638 = vmul.f32 %v3538, %v3601
        %v3657 = vrot.slane %v3621, 2
        %v3658 = vrot.slane %v3622, 2
        %v3659 = vrot.slane %v3623, 2
        %v3660 = vsel %vm3240, %v3657, %v3659
        %v3661 = vrot.slane %v3624, 2
        %v3662 = vsel %vm3240, %v3658, %v3661
        %v3663 = vrot.slane %v3625, 2
        %v3664 = vsel %vm3240, %v3659, %v3663
        %v3665 = vrot.slane %v3626, 2
        %v3666 = vsel %vm3240, %v3661, %v3665
        %v3667 = vrot.slane %v3627, 2
        %v3668 = vsel %vm3240, %v3663, %v3667
        %v3669 = vrot.slane %v3628, 2
        %v3670 = vsel %vm3240, %v3665, %v3669
        %v3671 = vrot.slane %v3629, 2
        %v3672 = vsel %vm3240, %v3667, %v3671
        %v3673 = vrot.slane %v3630, 2
        %v3674 = vsel %vm3240, %v3669, %v3673
        %v3675 = vrot.slane %v3631, 2
        %v3676 = vsel %vm3240, %v3671, %v3675
        %v3677 = vrot.slane %v3632, 2
        %v3678 = vsel %vm3240, %v3673, %v3677
        %v3679 = vrot.slane %v3633, 2
        %v3680 = vsel %vm3240, %v3675, %v3679
        %v3681 = vrot.slane %v3634, 2
        %v3682 = vsel %vm3240, %v3677, %v3681
        %v3683 = vrot.slane %v3635, 2
        %v3684 = vsel %vm3240, %v3679, %v3683
        %v3685 = vrot.slane %v3636, 2
        %v3686 = vsel %vm3240, %v3681, %v3685
        %v3687 = vrot.slane %v3637, 2
        %v3688 = vsel %vm3240, %v3683, %v3687
        %v3689 = vrot.slane %v3638, 2
        %v3690 = vsel %vm3240, %v3685, %v3689
        %v3709 = vadd.f32 %v3517, %v3657
        %v3710 = vadd.f32 %v3518, %v3658
        %v3711 = vadd.f32 %v3519, %v3660
        %v3712 = vadd.f32 %v3520, %v3662
        %v3713 = vadd.f32 %v3521, %v3664
        %v3714 = vadd.f32 %v3522, %v3666
        %v3715 = vadd.f32 %v3523, %v3668
        %v3716 = vadd.f32 %v3524, %v3670
        %v3717 = vadd.f32 %v3525, %v3672
        %v3718 = vadd.f32 %v3526, %v3674
        %v3719 = vadd.f32 %v3527, %v3676
        %v3720 = vadd.f32 %v3528, %v3678
        %v3721 = vadd.f32 %v3529, %v3680
        %v3722 = vadd.f32 %v3530, %v3682
        %v3723 = vadd.f32 %v3531, %v3684
        %v3724 = vadd.f32 %v3532, %v3686
        %v3725 = vadd.f32 %v3533, %v3688
        %v3726 = vadd.f32 %v3534, %v3690
        %v3727 = vld [vmem:[#allocation2 + $0x20] sm:$0x80]
        %v3728 = vld [vmem:[#allocation2 + $0x28] sm:$0x80]
        %v3729 = vld [vmem:[#allocation2 + $0xa0] sm:$0x7f]
        %v3730 = vld [vmem:[#allocation2 + $0xa8] sm:$0x7f]
        %v3731 = vperm.slane %v2874, 6
        %v3732 = vperm.slane %v2875, 6
        %v3733 = vmul.f32 %v2842, %v3731
        %v3734 = vmul.f32 %v2842, %v3732
        %v3735 = vmul.f32 %v2843, %v3731
        %v3736 = vmul.f32 %v2843, %v3732
        %v3737 = vmul.f32 %v2844, %v3731
        %v3738 = vmul.f32 %v2844, %v3732
        %v3739 = vmul.f32 %v2845, %v3731
        %v3740 = vmul.f32 %v2845, %v3732
        %v3741 = vmul.f32 %v2846, %v3731
        %v3742 = vmul.f32 %v2846, %v3732
        %v3743 = vmul.f32 %v2847, %v3731
        %v3744 = vmul.f32 %v2847, %v3732
        %v3745 = vmul.f32 %v2848, %v3731
        %v3746 = vmul.f32 %v2848, %v3732
        %v3747 = vmul.f32 %v2849, %v3731
        %v3748 = vmul.f32 %v2849, %v3732
        %v3765 = vrot.slane %v3733, 1
        %v3766 = vrot.slane %v3734, 1
        %v3767 = vrot.slane %v3735, 1
        %v3768 = vsel %vm2930, %v3765, %v3767
        %v3769 = vrot.slane %v3736, 1
        %v3770 = vsel %vm2930, %v3766, %v3769
        %v3771 = vrot.slane %v3737, 1
        %v3772 = vsel %vm2930, %v3767, %v3771
        %v3773 = vrot.slane %v3738, 1
        %v3774 = vsel %vm2930, %v3769, %v3773
        %v3775 = vrot.slane %v3739, 1
        %v3776 = vsel %vm2930, %v3771, %v3775
        %v3777 = vrot.slane %v3740, 1
        %v3778 = vsel %vm2930, %v3773, %v3777
        %v3779 = vrot.slane %v3741, 1
        %v3780 = vsel %vm2930, %v3775, %v3779
        %v3781 = vrot.slane %v3742, 1
        %v3782 = vsel %vm2930, %v3777, %v3781
        %v3783 = vrot.slane %v3743, 1
        %v3784 = vsel %vm2930, %v3779, %v3783
        %v3785 = vrot.slane %v3744, 1
        %v3786 = vsel %vm2930, %v3781, %v3785
        %v3787 = vrot.slane %v3745, 1
        %v3788 = vsel %vm2930, %v3783, %v3787
        %v3789 = vrot.slane %v3746, 1
        %v3790 = vsel %vm2930, %v3785, %v3789
        %v3791 = vrot.slane %v3747, 1
        %v3792 = vsel %vm2930, %v3787, %v3791
        %v3793 = vrot.slane %v3748, 1
        %v3794 = vsel %vm2930, %v3789, %v3793
        %v3813 = vmul.f32 %v3727, %v3765
        %v3814 = vmul.f32 %v3728, %v3766
        %v3815 = vmul.f32 %v2884, %v3768
        %v3816 = vmul.f32 %v2885, %v3770
        %v3817 = vmul.f32 %v2886, %v3772
        %v3818 = vmul.f32 %v2887, %v3774
        %v3819 = vmul.f32 %v2888, %v3776
        %v3820 = vmul.f32 %v2889, %v3778
        %v3821 = vmul.f32 %v2890, %v3780
        %v3822 = vmul.f32 %v2891, %v3782
        %v3823 = vmul.f32 %v2892, %v3784
        %v3824 = vmul.f32 %v2893, %v3786
        %v3825 = vmul.f32 %v3015, %v3788
        %v3826 = vmul.f32 %v3016, %v3790
        %v3827 = vmul.f32 %v3433, %v3792
        %v3828 = vmul.f32 %v3434, %v3794
        %v3829 = vmul.f32 %v3729, %v3791
        %v3830 = vmul.f32 %v3730, %v3793
        %v3831 = vadd.f32 %v3709, %v3813
        %v3832 = vadd.f32 %v3710, %v3814
        %v3833 = vadd.f32 %v3711, %v3815
        %v3834 = vadd.f32 %v3712, %v3816
        %v3835 = vadd.f32 %v3713, %v3817
        %v3836 = vadd.f32 %v3714, %v3818
        %v3837 = vadd.f32 %v3715, %v3819
        %v3838 = vadd.f32 %v3716, %v3820
        %v3839 = vadd.f32 %v3717, %v3821
        %v3840 = vadd.f32 %v3718, %v3822
        %v3841 = vadd.f32 %v3719, %v3823
        %v3842 = vadd.f32 %v3720, %v3824
        %v3843 = vadd.f32 %v3721, %v3825
        %v3844 = vadd.f32 %v3722, %v3826
        %v3845 = vadd.f32 %v3723, %v3827
        %v3846 = vadd.f32 %v3724, %v3828
        %v3847 = vadd.f32 %v3725, %v3829
        %v3848 = vadd.f32 %v3726, %v3830
        %v3849 = vld [vmem:[#allocation2 + $0xa0] sm:$0xff]
        %v3850 = vld [vmem:[#allocation2 + $0xa8] sm:$0xff]
        %v3851 = vperm.slane %v2874, 7
        %v3852 = vperm.slane %v2875, 7
        %v3853 = vmul.f32 %v2884, %v3851
        %v3854 = vmul.f32 %v2885, %v3852
        %v3855 = vmul.f32 %v2886, %v3851
        %v3856 = vmul.f32 %v2887, %v3852
        %v3857 = vmul.f32 %v2888, %v3851
        %v3858 = vmul.f32 %v2889, %v3852
        %v3859 = vmul.f32 %v2890, %v3851
        %v3860 = vmul.f32 %v2891, %v3852
        %v3861 = vmul.f32 %v2892, %v3851
        %v3862 = vmul.f32 %v2893, %v3852
        %v3863 = vmul.f32 %v3015, %v3851
        %v3864 = vmul.f32 %v3016, %v3852
        %v3865 = vmul.f32 %v3433, %v3851
        %v3866 = vmul.f32 %v3434, %v3852
        %v3867 = vmul.f32 %v3849, %v3851
        %v3868 = vmul.f32 %v3850, %v3852
        %v3885 = vrot.slane %v3853, 1
        %v3886 = vrot.slane %v3854, 1
        %v3887 = vrot.slane %v3855, 1
        %v3888 = vsel %vm2930, %v3885, %v3887
        %v3889 = vrot.slane %v3856, 1
        %v3890 = vsel %vm2930, %v3886, %v3889
        %v3891 = vrot.slane %v3857, 1
        %v3892 = vsel %vm2930, %v3887, %v3891
        %v3893 = vrot.slane %v3858, 1
        %v3894 = vsel %vm2930, %v3889, %v3893
        %v3895 = vrot.slane %v3859, 1
        %v3896 = vsel %vm2930, %v3891, %v3895
        %v3897 = vrot.slane %v3860, 1
        %v3898 = vsel %vm2930, %v3893, %v3897
        %v3899 = vrot.slane %v3861, 1
        %v3900 = vsel %vm2930, %v3895, %v3899
        %v3901 = vrot.slane %v3862, 1
        %v3902 = vsel %vm2930, %v3897, %v3901
        %v3903 = vrot.slane %v3863, 1
        %v3904 = vsel %vm2930, %v3899, %v3903
        %v3905 = vrot.slane %v3864, 1
        %v3906 = vsel %vm2930, %v3901, %v3905
        %v3907 = vrot.slane %v3865, 1
        %v3908 = vsel %vm2930, %v3903, %v3907
        %v3909 = vrot.slane %v3866, 1
        %v3910 = vsel %vm2930, %v3905, %v3909
        %v3911 = vrot.slane %v3867, 1
        %v3912 = vsel %vm2930, %v3907, %v3911
        %v3913 = vrot.slane %v3868, 1
        %v3914 = vsel %vm2930, %v3909, %v3913
        %v3933 = vadd.f32 %v3831, %v3885
        %v3934 = vadd.f32 %v3832, %v3886
        %v3935 = vadd.f32 %v3833, %v3888
        %v3936 = vadd.f32 %v3834, %v3890
        %v3937 = vadd.f32 %v3835, %v3892
        %v3938 = vadd.f32 %v3836, %v3894
        %v3939 = vadd.f32 %v3837, %v3896
        %v3940 = vadd.f32 %v3838, %v3898
        %v3941 = vadd.f32 %v3839, %v3900
        %v3942 = vadd.f32 %v3840, %v3902
        %v3943 = vadd.f32 %v3841, %v3904
        %v3944 = vadd.f32 %v3842, %v3906
        %v3945 = vadd.f32 %v3843, %v3908
        %v3946 = vadd.f32 %v3844, %v3910
        %v3947 = vadd.f32 %v3845, %v3912
        %v3948 = vadd.f32 %v3846, %v3914
        %v3949 = vadd.f32 %v3847, %v3911
        %v3950 = vadd.f32 %v3848, %v3913
        %v3951 = vld [vmem:[#allocation2 + $0x30] sm:$0xfe]
        %v3952 = vld [vmem:[#allocation2 + $0x38] sm:$0xfe]
        %v3953 = vld [vmem:[#allocation2 + $0x40] sm:$0xff]
        %v3954 = vld [vmem:[#allocation2 + $0x48] sm:$0xff]
        %v3955 = vld [vmem:[#allocation2 + $0x50] sm:$0xff]
        %v3956 = vld [vmem:[#allocation2 + $0x58] sm:$0xff]
        %v3957 = vld [vmem:[#allocation2 + $0x60] sm:$0xff]
        %v3958 = vld [vmem:[#allocation2 + $0x68] sm:$0xff]
        %v3959 = vld [vmem:[#allocation2 + $0x70] sm:$0xff]
        %v3960 = vld [vmem:[#allocation2 + $0x78] sm:$0xff]
        %v3961 = vld [vmem:[#allocation2 + $0x80] sm:$0xff]
        %v3962 = vld [vmem:[#allocation2 + $0x88] sm:$0xff]
        %v3963 = vld [vmem:[#allocation2 + $0x90] sm:$0xff]
        %v3964 = vld [vmem:[#allocation2 + $0x98] sm:$0xff]
        %v3965 = vld [vmem:[#allocation2 + $0xa0] sm:$0xff]
        %v3966 = vld [vmem:[#allocation2 + $0xa8] sm:$0xff]
        %v3967 = vld [vmem:[#allocation2 + $0xb0] sm:$0x1]
        %v3968 = vld [vmem:[#allocation2 + $0xb8] sm:$0x1]
        %v3969 = vperm.slane %v2876, 0
        %v3970 = vperm.slane %v2877, 0
        %v3971 = vmul.f32 %v2866, %v3969
        %v3972 = vmul.f32 %v2866, %v3970
        %v3973 = vmul.f32 %v2867, %v3969
        %v3974 = vmul.f32 %v2867, %v3970
        %v3975 = vmul.f32 %v2868, %v3969
        %v3976 = vmul.f32 %v2868, %v3970
        %v3977 = vmul.f32 %v2869, %v3969
        %v3978 = vmul.f32 %v2869, %v3970
        %v3979 = vmul.f32 %v2870, %v3969
        %v3980 = vmul.f32 %v2870, %v3970
        %v3981 = vmul.f32 %v2871, %v3969
        %v3982 = vmul.f32 %v2871, %v3970
        %v3983 = vmul.f32 %v2872, %v3969
        %v3984 = vmul.f32 %v2872, %v3970
        %v3985 = vmul.f32 %v2873, %v3969
        %v3986 = vmul.f32 %v2873, %v3970
        %v4003 = vrot.slane %v3971, 7
        %v4004 = vrot.slane %v3972, 7
        %v4005 = vrot.slane %v3973, 7
        %v4006 = vsel %vm3155, %v4003, %v4005
        %v4007 = vrot.slane %v3974, 7
        %v4008 = vsel %vm3155, %v4004, %v4007
        %v4009 = vrot.slane %v3975, 7
        %v4010 = vsel %vm3155, %v4005, %v4009
        %v4011 = vrot.slane %v3976, 7
        %v4012 = vsel %vm3155, %v4007, %v4011
        %v4013 = vrot.slane %v3977, 7
        %v4014 = vsel %vm3155, %v4009, %v4013
        %v4015 = vrot.slane %v3978, 7
        %v4016 = vsel %vm3155, %v4011, %v4015
        %v4017 = vrot.slane %v3979, 7
        %v4018 = vsel %vm3155, %v4013, %v4017
        %v4019 = vrot.slane %v3980, 7
        %v4020 = vsel %vm3155, %v4015, %v4019
        %v4021 = vrot.slane %v3981, 7
        %v4022 = vsel %vm3155, %v4017, %v4021
        %v4023 = vrot.slane %v3982, 7
        %v4024 = vsel %vm3155, %v4019, %v4023
        %v4025 = vrot.slane %v3983, 7
        %v4026 = vsel %vm3155, %v4021, %v4025
        %v4027 = vrot.slane %v3984, 7
        %v4028 = vsel %vm3155, %v4023, %v4027
        %v4029 = vrot.slane %v3985, 7
        %v4030 = vsel %vm3155, %v4025, %v4029
        %v4031 = vrot.slane %v3986, 7
        %v4032 = vsel %vm3155, %v4027, %v4031
        %v4051 = vmul.f32 %v3951, %v4003
        %v4052 = vmul.f32 %v3952, %v4004
        %v4053 = vmul.f32 %v3953, %v4006
        %v4054 = vmul.f32 %v3954, %v4008
        %v4055 = vmul.f32 %v3955, %v4010
        %v4056 = vmul.f32 %v3956, %v4012
        %v4057 = vmul.f32 %v3957, %v4014
        %v4058 = vmul.f32 %v3958, %v4016
        %v4059 = vmul.f32 %v3959, %v4018
        %v4060 = vmul.f32 %v3960, %v4020
        %v4061 = vmul.f32 %v3961, %v4022
        %v4062 = vmul.f32 %v3962, %v4024
        %v4063 = vmul.f32 %v3963, %v4026
        %v4064 = vmul.f32 %v3964, %v4028
        %v4065 = vmul.f32 %v3965, %v4030
        %v4066 = vmul.f32 %v3966, %v4032
        %v4067 = vmul.f32 %v3967, %v4029
        %v4068 = vmul.f32 %v3968, %v4031
        %v4087 = vrot.slane %v4051, 2
        %v4088 = vrot.slane %v4052, 2
        %v4089 = vrot.slane %v4053, 2
        %v4090 = vsel %vm3240, %v4087, %v4089
        %v4091 = vrot.slane %v4054, 2
        %v4092 = vsel %vm3240, %v4088, %v4091
        %v4093 = vrot.slane %v4055, 2
        %v4094 = vsel %vm3240, %v4089, %v4093
        %v4095 = vrot.slane %v4056, 2
        %v4096 = vsel %vm3240, %v4091, %v4095
        %v4097 = vrot.slane %v4057, 2
        %v4098 = vsel %vm3240, %v4093, %v4097
        %v4099 = vrot.slane %v4058, 2
        %v4100 = vsel %vm3240, %v4095, %v4099
        %v4101 = vrot.slane %v4059, 2
        %v4102 = vsel %vm3240, %v4097, %v4101
        %v4103 = vrot.slane %v4060, 2
        %v4104 = vsel %vm3240, %v4099, %v4103
        %v4105 = vrot.slane %v4061, 2
        %v4106 = vsel %vm3240, %v4101, %v4105
        %v4107 = vrot.slane %v4062, 2
        %v4108 = vsel %vm3240, %v4103, %v4107
        %v4109 = vrot.slane %v4063, 2
        %v4110 = vsel %vm3240, %v4105, %v4109
        %v4111 = vrot.slane %v4064, 2
        %v4112 = vsel %vm3240, %v4107, %v4111
        %v4113 = vrot.slane %v4065, 2
        %v4114 = vsel %vm3240, %v4109, %v4113
        %v4115 = vrot.slane %v4066, 2
        %v4116 = vsel %vm3240, %v4111, %v4115
        %v4117 = vrot.slane %v4067, 2
        %v4118 = vsel %vm3240, %v4113, %v4117
        %v4119 = vrot.slane %v4068, 2
        %v4120 = vsel %vm3240, %v4115, %v4119
        %v4139 = vadd.f32 %v3933, %v4087
        %v4140 = vadd.f32 %v3934, %v4088
        %v4141 = vadd.f32 %v3935, %v4090
        %v4142 = vadd.f32 %v3936, %v4092
        %v4143 = vadd.f32 %v3937, %v4094
        %v4144 = vadd.f32 %v3938, %v4096
        %v4145 = vadd.f32 %v3939, %v4098
        %v4146 = vadd.f32 %v3940, %v4100
        %v4147 = vadd.f32 %v3941, %v4102
        %v4148 = vadd.f32 %v3942, %v4104
        %v4149 = vadd.f32 %v3943, %v4106
        %v4150 = vadd.f32 %v3944, %v4108
        %v4151 = vadd.f32 %v3945, %v4110
        %v4152 = vadd.f32 %v3946, %v4112
        %v4153 = vadd.f32 %v3947, %v4114
        %v4154 = vadd.f32 %v3948, %v4116
        %v4155 = vadd.f32 %v3949, %v4118
        %v4156 = vadd.f32 %v3950, %v4120
        %v4158 = vperm.slane %v375, 0
        %v4159 = vperm.slane %v375, 1
        %v4162 = vadd.f32 %v4139, %v4158
        %v4163 = vadd.f32 %v4140, %v4159
        %v4164 = vadd.f32 %v4141, %v4158
        %v4165 = vadd.f32 %v4142, %v4159
        %v4166 = vadd.f32 %v4143, %v4158
        %v4167 = vadd.f32 %v4144, %v4159
        %v4168 = vadd.f32 %v4145, %v4158
        %v4169 = vadd.f32 %v4146, %v4159
        %v4170 = vadd.f32 %v4147, %v4158
        %v4171 = vadd.f32 %v4148, %v4159
        %v4172 = vadd.f32 %v4149, %v4158
        %v4173 = vadd.f32 %v4150, %v4159
        %v4174 = vadd.f32 %v4151, %v4158
        %v4175 = vadd.f32 %v4152, %v4159
        %v4176 = vadd.f32 %v4153, %v4158
        %v4177 = vadd.f32 %v4154, %v4159
        %v4178 = vadd.f32 %v4155, %v4158
        %v4179 = vadd.f32 %v4156, %v4159
        %v4180 = vmul.f32 %v4162, 0.5
        %v4181 = vmul.f32 %v4163, 0.5
        %v4182 = vmul.f32 %v4164, 0.5
        %v4183 = vmul.f32 %v4165, 0.5
        %v4184 = vmul.f32 %v4166, 0.5
        %v4185 = vmul.f32 %v4167, 0.5
        %v4186 = vmul.f32 %v4168, 0.5
        %v4187 = vmul.f32 %v4169, 0.5
        %v4188 = vmul.f32 %v4170, 0.5
        %v4189 = vmul.f32 %v4171, 0.5
        %v4190 = vmul.f32 %v4172, 0.5
        %v4191 = vmul.f32 %v4173, 0.5
        %v4192 = vmul.f32 %v4174, 0.5
        %v4193 = vmul.f32 %v4175, 0.5
        %v4194 = vmul.f32 %v4176, 0.5
        %v4195 = vmul.f32 %v4177, 0.5
        %v4196 = vmul.f32 %v4178, 0.5
        %v4197 = vmul.f32 %v4179, 0.5
        %v4198 = vmul.f32 %v4162, 0.70710677
        %v4199 = vmul.f32 %v4163, 0.70710677
        %v4200 = vmul.f32 %v4164, 0.70710677
        %v4201 = vmul.f32 %v4165, 0.70710677
        %v4202 = vmul.f32 %v4166, 0.70710677
        %v4203 = vmul.f32 %v4167, 0.70710677
        %v4204 = vmul.f32 %v4168, 0.70710677
        %v4205 = vmul.f32 %v4169, 0.70710677
        %v4206 = vmul.f32 %v4170, 0.70710677
        %v4207 = vmul.f32 %v4171, 0.70710677
        %v4208 = vmul.f32 %v4172, 0.70710677
        %v4209 = vmul.f32 %v4173, 0.70710677
        %v4210 = vmul.f32 %v4174, 0.70710677
        %v4211 = vmul.f32 %v4175, 0.70710677
        %v4212 = vmul.f32 %v4176, 0.70710677
        %v4213 = vmul.f32 %v4177, 0.70710677
        %v4214 = vmul.f32 %v4178, 0.70710677
        %v4215 = vmul.f32 %v4179, 0.70710677
        %vm4216 = vcmp.ge.f32.partialorder %v4198, 0.0
        %vm4217 = vcmp.ge.f32.partialorder %v4199, 0.0
        %vm4218 = vcmp.ge.f32.partialorder %v4200, 0.0
        %vm4219 = vcmp.ge.f32.partialorder %v4201, 0.0
        %vm4220 = vcmp.ge.f32.partialorder %v4202, 0.0
        %vm4221 = vcmp.ge.f32.partialorder %v4203, 0.0
        %vm4222 = vcmp.ge.f32.partialorder %v4204, 0.0
        %vm4223 = vcmp.ge.f32.partialorder %v4205, 0.0
        %vm4224 = vcmp.ge.f32.partialorder %v4206, 0.0
        %vm4225 = vcmp.ge.f32.partialorder %v4207, 0.0
        %vm4226 = vcmp.ge.f32.partialorder %v4208, 0.0
        %vm4227 = vcmp.ge.f32.partialorder %v4209, 0.0
        %vm4228 = vcmp.ge.f32.partialorder %v4210, 0.0
        %vm4229 = vcmp.ge.f32.partialorder %v4211, 0.0
        %vm4230 = vcmp.ge.f32.partialorder %v4212, 0.0
        %vm4231 = vcmp.ge.f32.partialorder %v4213, 0.0
        %vm4232 = vcmp.ge.f32.partialorder %v4214, 0.0
        %vm4233 = vcmp.ge.f32.partialorder %v4215, 0.0
        %v4234 = vsel %vm4216, 1.0, -1.0
        %v4235 = vsel %vm4217, 1.0, -1.0
        %v4236 = vsel %vm4218, 1.0, -1.0
        %v4237 = vsel %vm4219, 1.0, -1.0
        %v4238 = vsel %vm4220, 1.0, -1.0
        %v4239 = vsel %vm4221, 1.0, -1.0
        %v4240 = vsel %vm4222, 1.0, -1.0
        %v4241 = vsel %vm4223, 1.0, -1.0
        %v4242 = vsel %vm4224, 1.0, -1.0
        %v4243 = vsel %vm4225, 1.0, -1.0
        %v4244 = vsel %vm4226, 1.0, -1.0
        %v4245 = vsel %vm4227, 1.0, -1.0
        %v4246 = vsel %vm4228, 1.0, -1.0
        %v4247 = vsel %vm4229, 1.0, -1.0
        %v4248 = vsel %vm4230, 1.0, -1.0
        %v4249 = vsel %vm4231, 1.0, -1.0
        %v4250 = vsel %vm4232, 1.0, -1.0
        %v4251 = vsel %vm4233, 1.0, -1.0
        %v4252 = vand.u32 2147483647, %v4198
        %v4253 = vand.u32 2147483647, %v4199
        %v4254 = vand.u32 2147483647, %v4200
        %v4255 = vand.u32 2147483647, %v4201
        %v4256 = vand.u32 2147483647, %v4202
        %v4257 = vand.u32 2147483647, %v4203
        %v4258 = vand.u32 2147483647, %v4204
        %v4259 = vand.u32 2147483647, %v4205
        %v4260 = vand.u32 2147483647, %v4206
        %v4261 = vand.u32 2147483647, %v4207
        %v4262 = vand.u32 2147483647, %v4208
        %v4263 = vand.u32 2147483647, %v4209
        %v4264 = vand.u32 2147483647, %v4210
        %v4265 = vand.u32 2147483647, %v4211
        %v4266 = vand.u32 2147483647, %v4212
        %v4267 = vand.u32 2147483647, %v4213
        %v4268 = vand.u32 2147483647, %v4214
        %v4269 = vand.u32 2147483647, %v4215
        %v4270 = vmul.f32 %v4252, 0.3275911
        %v4271 = vmul.f32 %v4253, 0.3275911
        %v4272 = vmul.f32 %v4254, 0.3275911
        %v4273 = vmul.f32 %v4255, 0.3275911
        %v4274 = vmul.f32 %v4256, 0.3275911
        %v4275 = vmul.f32 %v4257, 0.3275911
        %v4276 = vmul.f32 %v4258, 0.3275911
        %v4277 = vmul.f32 %v4259, 0.3275911
        %v4278 = vmul.f32 %v4260, 0.3275911
        %v4279 = vmul.f32 %v4261, 0.3275911
        %v4280 = vmul.f32 %v4262, 0.3275911
        %v4281 = vmul.f32 %v4263, 0.3275911
        %v4282 = vmul.f32 %v4264, 0.3275911
        %v4283 = vmul.f32 %v4265, 0.3275911
        %v4284 = vmul.f32 %v4266, 0.3275911
        %v4285 = vmul.f32 %v4267, 0.3275911
        %v4286 = vmul.f32 %v4268, 0.3275911
        %v4287 = vmul.f32 %v4269, 0.3275911
        %v4288 = vadd.f32 %v4270, 1.0
        %v4289 = vadd.f32 %v4271, 1.0
        %v4290 = vadd.f32 %v4272, 1.0
        %v4291 = vadd.f32 %v4273, 1.0
        %v4292 = vadd.f32 %v4274, 1.0
        %v4293 = vadd.f32 %v4275, 1.0
        %v4294 = vadd.f32 %v4276, 1.0
        %v4295 = vadd.f32 %v4277, 1.0
        %v4296 = vadd.f32 %v4278, 1.0
        %v4297 = vadd.f32 %v4279, 1.0
        %v4298 = vadd.f32 %v4280, 1.0
        %v4299 = vadd.f32 %v4281, 1.0
        %v4300 = vadd.f32 %v4282, 1.0
        %v4301 = vadd.f32 %v4283, 1.0
        %v4302 = vadd.f32 %v4284, 1.0
        %v4303 = vadd.f32 %v4285, 1.0
        %v4304 = vadd.f32 %v4286, 1.0
        %v4305 = vadd.f32 %v4287, 1.0
        %v4306 = vrcp.pop %v4288
        %v4307 = vmul.f32 %v4288, %v4306
        %v4308 = vsub.f32 1.0, %v4307
        %v4309 = vmul.f32 %v4306, %v4308
        %v4310 = vadd.f32 %v4306, %v4309
        %vm4311 = vweird.f32 %v4288
        %vm4312 = vweird.f32 %v4306
        %vm4313 = vmor %vm4311, %vm4312
        %v4314 = vsel %vm4313, %v4306, %v4310
        %v4315 = vand.u32 2147483647, %v4288
        %vm4316 = vcmp.eq.f32.partialorder %v4315, 8.507059e+37
        %v4317 = vand.u32 %v4288, 2147483648
        %v4318 = vor.u32 1.1754944e-38, %v4317
        %v4319 = vsel %vm4316, %v4318, %v4314
        %v4320 = vmul.f32 1.0, %v4319
        %v4321 = vrcp.pop %v4289
        %v4322 = vmul.f32 %v4289, %v4321
        %v4323 = vsub.f32 1.0, %v4322
        %v4324 = vmul.f32 %v4321, %v4323
        %v4325 = vadd.f32 %v4321, %v4324
        %vm4326 = vweird.f32 %v4289
        %vm4327 = vweird.f32 %v4321
        %vm4328 = vmor %vm4326, %vm4327
        %v4329 = vsel %vm4328, %v4321, %v4325
        %v4330 = vand.u32 2147483647, %v4289
        %vm4331 = vcmp.eq.f32.partialorder %v4330, 8.507059e+37
        %v4332 = vand.u32 %v4289, 2147483648
        %v4333 = vor.u32 1.1754944e-38, %v4332
        %v4334 = vsel %vm4331, %v4333, %v4329
        %v4335 = vmul.f32 1.0, %v4334
        %v4336 = vrcp.pop %v4290
        %v4337 = vmul.f32 %v4290, %v4336
        %v4338 = vsub.f32 1.0, %v4337
        %v4339 = vmul.f32 %v4336, %v4338
        %v4340 = vadd.f32 %v4336, %v4339
        %vm4341 = vweird.f32 %v4290
        %vm4342 = vweird.f32 %v4336
        %vm4343 = vmor %vm4341, %vm4342
        %v4344 = vsel %vm4343, %v4336, %v4340
        %v4345 = vand.u32 2147483647, %v4290
        %vm4346 = vcmp.eq.f32.partialorder %v4345, 8.507059e+37
        %v4347 = vand.u32 %v4290, 2147483648
        %v4348 = vor.u32 1.1754944e-38, %v4347
        %v4349 = vsel %vm4346, %v4348, %v4344
        %v4350 = vmul.f32 1.0, %v4349
        %v4351 = vrcp.pop %v4291
        %v4352 = vmul.f32 %v4291, %v4351
        %v4353 = vsub.f32 1.0, %v4352
        %v4354 = vmul.f32 %v4351, %v4353
        %v4355 = vadd.f32 %v4351, %v4354
        %vm4356 = vweird.f32 %v4291
        %vm4357 = vweird.f32 %v4351
        %vm4358 = vmor %vm4356, %vm4357
        %v4359 = vsel %vm4358, %v4351, %v4355
        %v4360 = vand.u32 2147483647, %v4291
        %vm4361 = vcmp.eq.f32.partialorder %v4360, 8.507059e+37
        %v4362 = vand.u32 %v4291, 2147483648
        %v4363 = vor.u32 1.1754944e-38, %v4362
        %v4364 = vsel %vm4361, %v4363, %v4359
        %v4365 = vmul.f32 1.0, %v4364
        %v4366 = vrcp.pop %v4292
        %v4367 = vmul.f32 %v4292, %v4366
        %v4368 = vsub.f32 1.0, %v4367
        %v4369 = vmul.f32 %v4366, %v4368
        %v4370 = vadd.f32 %v4366, %v4369
        %vm4371 = vweird.f32 %v4292
        %vm4372 = vweird.f32 %v4366
        %vm4373 = vmor %vm4371, %vm4372
        %v4374 = vsel %vm4373, %v4366, %v4370
        %v4375 = vand.u32 2147483647, %v4292
        %vm4376 = vcmp.eq.f32.partialorder %v4375, 8.507059e+37
        %v4377 = vand.u32 %v4292, 2147483648
        %v4378 = vor.u32 1.1754944e-38, %v4377
        %v4379 = vsel %vm4376, %v4378, %v4374
        %v4380 = vmul.f32 1.0, %v4379
        %v4381 = vrcp.pop %v4293
        %v4382 = vmul.f32 %v4293, %v4381
        %v4383 = vsub.f32 1.0, %v4382
        %v4384 = vmul.f32 %v4381, %v4383
        %v4385 = vadd.f32 %v4381, %v4384
        %vm4386 = vweird.f32 %v4293
        %vm4387 = vweird.f32 %v4381
        %vm4388 = vmor %vm4386, %vm4387
        %v4389 = vsel %vm4388, %v4381, %v4385
        %v4390 = vand.u32 2147483647, %v4293
        %vm4391 = vcmp.eq.f32.partialorder %v4390, 8.507059e+37
        %v4392 = vand.u32 %v4293, 2147483648
        %v4393 = vor.u32 1.1754944e-38, %v4392
        %v4394 = vsel %vm4391, %v4393, %v4389
        %v4395 = vmul.f32 1.0, %v4394
        %v4396 = vrcp.pop %v4294
        %v4397 = vmul.f32 %v4294, %v4396
        %v4398 = vsub.f32 1.0, %v4397
        %v4399 = vmul.f32 %v4396, %v4398
        %v4400 = vadd.f32 %v4396, %v4399
        %vm4401 = vweird.f32 %v4294
        %vm4402 = vweird.f32 %v4396
        %vm4403 = vmor %vm4401, %vm4402
        %v4404 = vsel %vm4403, %v4396, %v4400
        %v4405 = vand.u32 2147483647, %v4294
        %vm4406 = vcmp.eq.f32.partialorder %v4405, 8.507059e+37
        %v4407 = vand.u32 %v4294, 2147483648
        %v4408 = vor.u32 1.1754944e-38, %v4407
        %v4409 = vsel %vm4406, %v4408, %v4404
        %v4410 = vmul.f32 1.0, %v4409
        %v4411 = vrcp.pop %v4295
        %v4412 = vmul.f32 %v4295, %v4411
        %v4413 = vsub.f32 1.0, %v4412
        %v4414 = vmul.f32 %v4411, %v4413
        %v4415 = vadd.f32 %v4411, %v4414
        %vm4416 = vweird.f32 %v4295
        %vm4417 = vweird.f32 %v4411
        %vm4418 = vmor %vm4416, %vm4417
        %v4419 = vsel %vm4418, %v4411, %v4415
        %v4420 = vand.u32 2147483647, %v4295
        %vm4421 = vcmp.eq.f32.partialorder %v4420, 8.507059e+37
        %v4422 = vand.u32 %v4295, 2147483648
        %v4423 = vor.u32 1.1754944e-38, %v4422
        %v4424 = vsel %vm4421, %v4423, %v4419
        %v4425 = vmul.f32 1.0, %v4424
        %v4426 = vrcp.pop %v4296
        %v4427 = vmul.f32 %v4296, %v4426
        %v4428 = vsub.f32 1.0, %v4427
        %v4429 = vmul.f32 %v4426, %v4428
        %v4430 = vadd.f32 %v4426, %v4429
        %vm4431 = vweird.f32 %v4296
        %vm4432 = vweird.f32 %v4426
        %vm4433 = vmor %vm4431, %vm4432
        %v4434 = vsel %vm4433, %v4426, %v4430
        %v4435 = vand.u32 2147483647, %v4296
        %vm4436 = vcmp.eq.f32.partialorder %v4435, 8.507059e+37
        %v4437 = vand.u32 %v4296, 2147483648
        %v4438 = vor.u32 1.1754944e-38, %v4437
        %v4439 = vsel %vm4436, %v4438, %v4434
        %v4440 = vmul.f32 1.0, %v4439
        %v4441 = vrcp.pop %v4297
        %v4442 = vmul.f32 %v4297, %v4441
        %v4443 = vsub.f32 1.0, %v4442
        %v4444 = vmul.f32 %v4441, %v4443
        %v4445 = vadd.f32 %v4441, %v4444
        %vm4446 = vweird.f32 %v4297
        %vm4447 = vweird.f32 %v4441
        %vm4448 = vmor %vm4446, %vm4447
        %v4449 = vsel %vm4448, %v4441, %v4445
        %v4450 = vand.u32 2147483647, %v4297
        %vm4451 = vcmp.eq.f32.partialorder %v4450, 8.507059e+37
        %v4452 = vand.u32 %v4297, 2147483648
        %v4453 = vor.u32 1.1754944e-38, %v4452
        %v4454 = vsel %vm4451, %v4453, %v4449
        %v4455 = vmul.f32 1.0, %v4454
        %v4456 = vrcp.pop %v4298
        %v4457 = vmul.f32 %v4298, %v4456
        %v4458 = vsub.f32 1.0, %v4457
        %v4459 = vmul.f32 %v4456, %v4458
        %v4460 = vadd.f32 %v4456, %v4459
        %vm4461 = vweird.f32 %v4298
        %vm4462 = vweird.f32 %v4456
        %vm4463 = vmor %vm4461, %vm4462
        %v4464 = vsel %vm4463, %v4456, %v4460
        %v4465 = vand.u32 2147483647, %v4298
        %vm4466 = vcmp.eq.f32.partialorder %v4465, 8.507059e+37
        %v4467 = vand.u32 %v4298, 2147483648
        %v4468 = vor.u32 1.1754944e-38, %v4467
        %v4469 = vsel %vm4466, %v4468, %v4464
        %v4470 = vmul.f32 1.0, %v4469
        %v4471 = vrcp.pop %v4299
        %v4472 = vmul.f32 %v4299, %v4471
        %v4473 = vsub.f32 1.0, %v4472
        %v4474 = vmul.f32 %v4471, %v4473
        %v4475 = vadd.f32 %v4471, %v4474
        %vm4476 = vweird.f32 %v4299
        %vm4477 = vweird.f32 %v4471
        %vm4478 = vmor %vm4476, %vm4477
        %v4479 = vsel %vm4478, %v4471, %v4475
        %v4480 = vand.u32 2147483647, %v4299
        %vm4481 = vcmp.eq.f32.partialorder %v4480, 8.507059e+37
        %v4482 = vand.u32 %v4299, 2147483648
        %v4483 = vor.u32 1.1754944e-38, %v4482
        %v4484 = vsel %vm4481, %v4483, %v4479
        %v4485 = vmul.f32 1.0, %v4484
        %v4486 = vrcp.pop %v4300
        %v4487 = vmul.f32 %v4300, %v4486
        %v4488 = vsub.f32 1.0, %v4487
        %v4489 = vmul.f32 %v4486, %v4488
        %v4490 = vadd.f32 %v4486, %v4489
        %vm4491 = vweird.f32 %v4300
        %vm4492 = vweird.f32 %v4486
        %vm4493 = vmor %vm4491, %vm4492
        %v4494 = vsel %vm4493, %v4486, %v4490
        %v4495 = vand.u32 2147483647, %v4300
        %vm4496 = vcmp.eq.f32.partialorder %v4495, 8.507059e+37
        %v4497 = vand.u32 %v4300, 2147483648
        %v4498 = vor.u32 1.1754944e-38, %v4497
        %v4499 = vsel %vm4496, %v4498, %v4494
        %v4500 = vmul.f32 1.0, %v4499
        %v4501 = vrcp.pop %v4301
        %v4502 = vmul.f32 %v4301, %v4501
        %v4503 = vsub.f32 1.0, %v4502
        %v4504 = vmul.f32 %v4501, %v4503
        %v4505 = vadd.f32 %v4501, %v4504
        %vm4506 = vweird.f32 %v4301
        %vm4507 = vweird.f32 %v4501
        %vm4508 = vmor %vm4506, %vm4507
        %v4509 = vsel %vm4508, %v4501, %v4505
        %v4510 = vand.u32 2147483647, %v4301
        %vm4511 = vcmp.eq.f32.partialorder %v4510, 8.507059e+37
        %v4512 = vand.u32 %v4301, 2147483648
        %v4513 = vor.u32 1.1754944e-38, %v4512
        %v4514 = vsel %vm4511, %v4513, %v4509
        %v4515 = vmul.f32 1.0, %v4514
        %v4516 = vrcp.pop %v4302
        %v4517 = vmul.f32 %v4302, %v4516
        %v4518 = vsub.f32 1.0, %v4517
        %v4519 = vmul.f32 %v4516, %v4518
        %v4520 = vadd.f32 %v4516, %v4519
        %vm4521 = vweird.f32 %v4302
        %vm4522 = vweird.f32 %v4516
        %vm4523 = vmor %vm4521, %vm4522
        %v4524 = vsel %vm4523, %v4516, %v4520
        %v4525 = vand.u32 2147483647, %v4302
        %vm4526 = vcmp.eq.f32.partialorder %v4525, 8.507059e+37
        %v4527 = vand.u32 %v4302, 2147483648
        %v4528 = vor.u32 1.1754944e-38, %v4527
        %v4529 = vsel %vm4526, %v4528, %v4524
        %v4530 = vmul.f32 1.0, %v4529
        %v4531 = vrcp.pop %v4303
        %v4532 = vmul.f32 %v4303, %v4531
        %v4533 = vsub.f32 1.0, %v4532
        %v4534 = vmul.f32 %v4531, %v4533
        %v4535 = vadd.f32 %v4531, %v4534
        %vm4536 = vweird.f32 %v4303
        %vm4537 = vweird.f32 %v4531
        %vm4538 = vmor %vm4536, %vm4537
        %v4539 = vsel %vm4538, %v4531, %v4535
        %v4540 = vand.u32 2147483647, %v4303
        %vm4541 = vcmp.eq.f32.partialorder %v4540, 8.507059e+37
        %v4542 = vand.u32 %v4303, 2147483648
        %v4543 = vor.u32 1.1754944e-38, %v4542
        %v4544 = vsel %vm4541, %v4543, %v4539
        %v4545 = vmul.f32 1.0, %v4544
        %v4546 = vrcp.pop %v4304
        %v4547 = vmul.f32 %v4304, %v4546
        %v4548 = vsub.f32 1.0, %v4547
        %v4549 = vmul.f32 %v4546, %v4548
        %v4550 = vadd.f32 %v4546, %v4549
        %vm4551 = vweird.f32 %v4304
        %vm4552 = vweird.f32 %v4546
        %vm4553 = vmor %vm4551, %vm4552
        %v4554 = vsel %vm4553, %v4546, %v4550
        %v4555 = vand.u32 2147483647, %v4304
        %vm4556 = vcmp.eq.f32.partialorder %v4555, 8.507059e+37
        %v4557 = vand.u32 %v4304, 2147483648
        %v4558 = vor.u32 1.1754944e-38, %v4557
        %v4559 = vsel %vm4556, %v4558, %v4554
        %v4560 = vmul.f32 1.0, %v4559
        %v4561 = vrcp.pop %v4305
        %v4562 = vmul.f32 %v4305, %v4561
        %v4563 = vsub.f32 1.0, %v4562
        %v4564 = vmul.f32 %v4561, %v4563
        %v4565 = vadd.f32 %v4561, %v4564
        %vm4566 = vweird.f32 %v4305
        %vm4567 = vweird.f32 %v4561
        %vm4568 = vmor %vm4566, %vm4567
        %v4569 = vsel %vm4568, %v4561, %v4565
        %v4570 = vand.u32 2147483647, %v4305
        %vm4571 = vcmp.eq.f32.partialorder %v4570, 8.507059e+37
        %v4572 = vand.u32 %v4305, 2147483648
        %v4573 = vor.u32 1.1754944e-38, %v4572
        %v4574 = vsel %vm4571, %v4573, %v4569
        %v4575 = vmul.f32 1.0, %v4574
        %v4576 = vmul.f32 %v4320, 1.0614054
        %v4577 = vmul.f32 %v4335, 1.0614054
        %v4578 = vmul.f32 %v4350, 1.0614054
        %v4579 = vmul.f32 %v4365, 1.0614054
        %v4580 = vmul.f32 %v4380, 1.0614054
        %v4581 = vmul.f32 %v4395, 1.0614054
        %v4582 = vmul.f32 %v4410, 1.0614054
        %v4583 = vmul.f32 %v4425, 1.0614054
        %v4584 = vmul.f32 %v4440, 1.0614054
        %v4585 = vmul.f32 %v4455, 1.0614054
        %v4586 = vmul.f32 %v4470, 1.0614054
        %v4587 = vmul.f32 %v4485, 1.0614054
        %v4588 = vmul.f32 %v4500, 1.0614054
        %v4589 = vmul.f32 %v4515, 1.0614054
        %v4590 = vmul.f32 %v4530, 1.0614054
        %v4591 = vmul.f32 %v4545, 1.0614054
        %v4592 = vmul.f32 %v4560, 1.0614054
        %v4593 = vmul.f32 %v4575, 1.0614054
        %v4594 = vadd.f32 %v4576, -1.4531521
        %v4595 = vadd.f32 %v4577, -1.4531521
        %v4596 = vadd.f32 %v4578, -1.4531521
        %v4597 = vadd.f32 %v4579, -1.4531521
        %v4598 = vadd.f32 %v4580, -1.4531521
        %v4599 = vadd.f32 %v4581, -1.4531521
        %v4600 = vadd.f32 %v4582, -1.4531521
        %v4601 = vadd.f32 %v4583, -1.4531521
        %v4602 = vadd.f32 %v4584, -1.4531521
        %v4603 = vadd.f32 %v4585, -1.4531521
        %v4604 = vadd.f32 %v4586, -1.4531521
        %v4605 = vadd.f32 %v4587, -1.4531521
        %v4606 = vadd.f32 %v4588, -1.4531521
        %v4607 = vadd.f32 %v4589, -1.4531521
        %v4608 = vadd.f32 %v4590, -1.4531521
        %v4609 = vadd.f32 %v4591, -1.4531521
        %v4610 = vadd.f32 %v4592, -1.4531521
        %v4611 = vadd.f32 %v4593, -1.4531521
        %v4612 = vmul.f32 %v4594, %v4320
        %v4613 = vmul.f32 %v4595, %v4335
        %v4614 = vmul.f32 %v4596, %v4350
        %v4615 = vmul.f32 %v4597, %v4365
        %v4616 = vmul.f32 %v4598, %v4380
        %v4617 = vmul.f32 %v4599, %v4395
        %v4618 = vmul.f32 %v4600, %v4410
        %v4619 = vmul.f32 %v4601, %v4425
        %v4620 = vmul.f32 %v4602, %v4440
        %v4621 = vmul.f32 %v4603, %v4455
        %v4622 = vmul.f32 %v4604, %v4470
        %v4623 = vmul.f32 %v4605, %v4485
        %v4624 = vmul.f32 %v4606, %v4500
        %v4625 = vmul.f32 %v4607, %v4515
        %v4626 = vmul.f32 %v4608, %v4530
        %v4627 = vmul.f32 %v4609, %v4545
        %v4628 = vmul.f32 %v4610, %v4560
        %v4629 = vmul.f32 %v4611, %v4575
        %v4630 = vadd.f32 %v4612, 1.4214138
        %v4631 = vadd.f32 %v4613, 1.4214138
        %v4632 = vadd.f32 %v4614, 1.4214138
        %v4633 = vadd.f32 %v4615, 1.4214138
        %v4634 = vadd.f32 %v4616, 1.4214138
        %v4635 = vadd.f32 %v4617, 1.4214138
        %v4636 = vadd.f32 %v4618, 1.4214138
        %v4637 = vadd.f32 %v4619, 1.4214138
        %v4638 = vadd.f32 %v4620, 1.4214138
        %v4639 = vadd.f32 %v4621, 1.4214138
        %v4640 = vadd.f32 %v4622, 1.4214138
        %v4641 = vadd.f32 %v4623, 1.4214138
        %v4642 = vadd.f32 %v4624, 1.4214138
        %v4643 = vadd.f32 %v4625, 1.4214138
        %v4644 = vadd.f32 %v4626, 1.4214138
        %v4645 = vadd.f32 %v4627, 1.4214138
        %v4646 = vadd.f32 %v4628, 1.4214138
        %v4647 = vadd.f32 %v4629, 1.4214138
        %v4648 = vmul.f32 %v4630, %v4320
        %v4649 = vmul.f32 %v4631, %v4335
        %v4650 = vmul.f32 %v4632, %v4350
        %v4651 = vmul.f32 %v4633, %v4365
        %v4652 = vmul.f32 %v4634, %v4380
        %v4653 = vmul.f32 %v4635, %v4395
        %v4654 = vmul.f32 %v4636, %v4410
        %v4655 = vmul.f32 %v4637, %v4425
        %v4656 = vmul.f32 %v4638, %v4440
        %v4657 = vmul.f32 %v4639, %v4455
        %v4658 = vmul.f32 %v4640, %v4470
        %v4659 = vmul.f32 %v4641, %v4485
        %v4660 = vmul.f32 %v4642, %v4500
        %v4661 = vmul.f32 %v4643, %v4515
        %v4662 = vmul.f32 %v4644, %v4530
        %v4663 = vmul.f32 %v4645, %v4545
        %v4664 = vmul.f32 %v4646, %v4560
        %v4665 = vmul.f32 %v4647, %v4575
        %v4666 = vadd.f32 %v4648, -0.28449672
        %v4667 = vadd.f32 %v4649, -0.28449672
        %v4668 = vadd.f32 %v4650, -0.28449672
        %v4669 = vadd.f32 %v4651, -0.28449672
        %v4670 = vadd.f32 %v4652, -0.28449672
        %v4671 = vadd.f32 %v4653, -0.28449672
        %v4672 = vadd.f32 %v4654, -0.28449672
        %v4673 = vadd.f32 %v4655, -0.28449672
        %v4674 = vadd.f32 %v4656, -0.28449672
        %v4675 = vadd.f32 %v4657, -0.28449672
        %v4676 = vadd.f32 %v4658, -0.28449672
        %v4677 = vadd.f32 %v4659, -0.28449672
        %v4678 = vadd.f32 %v4660, -0.28449672
        %v4679 = vadd.f32 %v4661, -0.28449672
        %v4680 = vadd.f32 %v4662, -0.28449672
        %v4681 = vadd.f32 %v4663, -0.28449672
        %v4682 = vadd.f32 %v4664, -0.28449672
        %v4683 = vadd.f32 %v4665, -0.28449672
        %v4684 = vmul.f32 %v4666, %v4320
        %v4685 = vmul.f32 %v4667, %v4335
        %v4686 = vmul.f32 %v4668, %v4350
        %v4687 = vmul.f32 %v4669, %v4365
        %v4688 = vmul.f32 %v4670, %v4380
        %v4689 = vmul.f32 %v4671, %v4395
        %v4690 = vmul.f32 %v4672, %v4410
        %v4691 = vmul.f32 %v4673, %v4425
        %v4692 = vmul.f32 %v4674, %v4440
        %v4693 = vmul.f32 %v4675, %v4455
        %v4694 = vmul.f32 %v4676, %v4470
        %v4695 = vmul.f32 %v4677, %v4485
        %v4696 = vmul.f32 %v4678, %v4500
        %v4697 = vmul.f32 %v4679, %v4515
        %v4698 = vmul.f32 %v4680, %v4530
        %v4699 = vmul.f32 %v4681, %v4545
        %v4700 = vmul.f32 %v4682, %v4560
        %v4701 = vmul.f32 %v4683, %v4575
        %v4702 = vadd.f32 %v4684, 0.2548296
        %v4703 = vadd.f32 %v4685, 0.2548296
        %v4704 = vadd.f32 %v4686, 0.2548296
        %v4705 = vadd.f32 %v4687, 0.2548296
        %v4706 = vadd.f32 %v4688, 0.2548296
        %v4707 = vadd.f32 %v4689, 0.2548296
        %v4708 = vadd.f32 %v4690, 0.2548296
        %v4709 = vadd.f32 %v4691, 0.2548296
        %v4710 = vadd.f32 %v4692, 0.2548296
        %v4711 = vadd.f32 %v4693, 0.2548296
        %v4712 = vadd.f32 %v4694, 0.2548296
        %v4713 = vadd.f32 %v4695, 0.2548296
        %v4714 = vadd.f32 %v4696, 0.2548296
        %v4715 = vadd.f32 %v4697, 0.2548296
        %v4716 = vadd.f32 %v4698, 0.2548296
        %v4717 = vadd.f32 %v4699, 0.2548296
        %v4718 = vadd.f32 %v4700, 0.2548296
        %v4719 = vadd.f32 %v4701, 0.2548296
        %v4720 = vmul.f32 %v4702, %v4320
        %v4721 = vmul.f32 %v4703, %v4335
        %v4722 = vmul.f32 %v4704, %v4350
        %v4723 = vmul.f32 %v4705, %v4365
        %v4724 = vmul.f32 %v4706, %v4380
        %v4725 = vmul.f32 %v4707, %v4395
        %v4726 = vmul.f32 %v4708, %v4410
        %v4727 = vmul.f32 %v4709, %v4425
        %v4728 = vmul.f32 %v4710, %v4440
        %v4729 = vmul.f32 %v4711, %v4455
        %v4730 = vmul.f32 %v4712, %v4470
        %v4731 = vmul.f32 %v4713, %v4485
        %v4732 = vmul.f32 %v4714, %v4500
        %v4733 = vmul.f32 %v4715, %v4515
        %v4734 = vmul.f32 %v4716, %v4530
        %v4735 = vmul.f32 %v4717, %v4545
        %v4736 = vmul.f32 %v4718, %v4560
        %v4737 = vmul.f32 %v4719, %v4575
        %v4738 = vsub.f32 0.0, %v4252
        %v4739 = vsub.f32 0.0, %v4253
        %v4740 = vsub.f32 0.0, %v4254
        %v4741 = vsub.f32 0.0, %v4255
        %v4742 = vsub.f32 0.0, %v4256
        %v4743 = vsub.f32 0.0, %v4257
        %v4744 = vsub.f32 0.0, %v4258
        %v4745 = vsub.f32 0.0, %v4259
        %v4746 = vsub.f32 0.0, %v4260
        %v4747 = vsub.f32 0.0, %v4261
        %v4748 = vsub.f32 0.0, %v4262
        %v4749 = vsub.f32 0.0, %v4263
        %v4750 = vsub.f32 0.0, %v4264
        %v4751 = vsub.f32 0.0, %v4265
        %v4752 = vsub.f32 0.0, %v4266
        %v4753 = vsub.f32 0.0, %v4267
        %v4754 = vsub.f32 0.0, %v4268
        %v4755 = vsub.f32 0.0, %v4269
        %v4756 = vmul.f32 %v4738, %v4252
        %v4757 = vmul.f32 %v4739, %v4253
        %v4758 = vmul.f32 %v4740, %v4254
        %v4759 = vmul.f32 %v4741, %v4255
        %v4760 = vmul.f32 %v4742, %v4256
        %v4761 = vmul.f32 %v4743, %v4257
        %v4762 = vmul.f32 %v4744, %v4258
        %v4763 = vmul.f32 %v4745, %v4259
        %v4764 = vmul.f32 %v4746, %v4260
        %v4765 = vmul.f32 %v4747, %v4261
        %v4766 = vmul.f32 %v4748, %v4262
        %v4767 = vmul.f32 %v4749, %v4263
        %v4768 = vmul.f32 %v4750, %v4264
        %v4769 = vmul.f32 %v4751, %v4265
        %v4770 = vmul.f32 %v4752, %v4266
        %v4771 = vmul.f32 %v4753, %v4267
        %v4772 = vmul.f32 %v4754, %v4268
        %v4773 = vmul.f32 %v4755, %v4269
        %v4774 = vmul.f32 %v4756, 1.442695
        %v4775 = vpow.pop %v4774
        %v4776 = vmul.f32 %v4757, 1.442695
        %v4777 = vpow.pop %v4776
        %v4778 = vmul.f32 %v4758, 1.442695
        %v4779 = vpow.pop %v4778
        %v4780 = vmul.f32 %v4759, 1.442695
        %v4781 = vpow.pop %v4780
        %v4782 = vmul.f32 %v4760, 1.442695
        %v4783 = vpow.pop %v4782
        %v4784 = vmul.f32 %v4761, 1.442695
        %v4785 = vpow.pop %v4784
        %v4786 = vmul.f32 %v4762, 1.442695
        %v4787 = vpow.pop %v4786
        %v4788 = vmul.f32 %v4763, 1.442695
        %v4789 = vpow.pop %v4788
        %v4790 = vmul.f32 %v4764, 1.442695
        %v4791 = vpow.pop %v4790
        %v4792 = vmul.f32 %v4765, 1.442695
        %v4793 = vpow.pop %v4792
        %v4794 = vmul.f32 %v4766, 1.442695
        %v4795 = vpow.pop %v4794
        %v4796 = vmul.f32 %v4767, 1.442695
        %v4797 = vpow.pop %v4796
        %v4798 = vmul.f32 %v4768, 1.442695
        %v4799 = vpow.pop %v4798
        %v4800 = vmul.f32 %v4769, 1.442695
        %v4801 = vpow.pop %v4800
        %v4802 = vmul.f32 %v4770, 1.442695
        %v4803 = vpow.pop %v4802
        %v4804 = vmul.f32 %v4771, 1.442695
        %v4805 = vpow.pop %v4804
        %v4806 = vmul.f32 %v4772, 1.442695
        %v4807 = vpow.pop %v4806
        %v4808 = vmul.f32 %v4773, 1.442695
        %v4809 = vpow.pop %v4808
        %v4810 = vmul.f32 %v4720, %v4775
        %v4811 = vmul.f32 %v4721, %v4777
        %v4812 = vmul.f32 %v4722, %v4779
        %v4813 = vmul.f32 %v4723, %v4781
        %v4814 = vmul.f32 %v4724, %v4783
        %v4815 = vmul.f32 %v4725, %v4785
        %v4816 = vmul.f32 %v4726, %v4787
        %v4817 = vmul.f32 %v4727, %v4789
        %v4818 = vmul.f32 %v4728, %v4791
        %v4819 = vmul.f32 %v4729, %v4793
        %v4820 = vmul.f32 %v4730, %v4795
        %v4821 = vmul.f32 %v4731, %v4797
        %v4822 = vmul.f32 %v4732, %v4799
        %v4823 = vmul.f32 %v4733, %v4801
        %v4824 = vmul.f32 %v4734, %v4803
        %v4825 = vmul.f32 %v4735, %v4805
        %v4826 = vmul.f32 %v4736, %v4807
        %v4827 = vmul.f32 %v4737, %v4809
        %v4828 = vsub.f32 1.0, %v4810
        %v4829 = vsub.f32 1.0, %v4811
        %v4830 = vsub.f32 1.0, %v4812
        %v4831 = vsub.f32 1.0, %v4813
        %v4832 = vsub.f32 1.0, %v4814
        %v4833 = vsub.f32 1.0, %v4815
        %v4834 = vsub.f32 1.0, %v4816
        %v4835 = vsub.f32 1.0, %v4817
        %v4836 = vsub.f32 1.0, %v4818
        %v4837 = vsub.f32 1.0, %v4819
        %v4838 = vsub.f32 1.0, %v4820
        %v4839 = vsub.f32 1.0, %v4821
        %v4840 = vsub.f32 1.0, %v4822
        %v4841 = vsub.f32 1.0, %v4823
        %v4842 = vsub.f32 1.0, %v4824
        %v4843 = vsub.f32 1.0, %v4825
        %v4844 = vsub.f32 1.0, %v4826
        %v4845 = vsub.f32 1.0, %v4827
        %v4846 = vmul.f32 %v4234, %v4828
        %v4847 = vmul.f32 %v4235, %v4829
        %v4848 = vmul.f32 %v4236, %v4830
        %v4849 = vmul.f32 %v4237, %v4831
        %v4850 = vmul.f32 %v4238, %v4832
        %v4851 = vmul.f32 %v4239, %v4833
        %v4852 = vmul.f32 %v4240, %v4834
        %v4853 = vmul.f32 %v4241, %v4835
        %v4854 = vmul.f32 %v4242, %v4836
        %v4855 = vmul.f32 %v4243, %v4837
        %v4856 = vmul.f32 %v4244, %v4838
        %v4857 = vmul.f32 %v4245, %v4839
        %v4858 = vmul.f32 %v4246, %v4840
        %v4859 = vmul.f32 %v4247, %v4841
        %v4860 = vmul.f32 %v4248, %v4842
        %v4861 = vmul.f32 %v4249, %v4843
        %v4862 = vmul.f32 %v4250, %v4844
        %v4863 = vmul.f32 %v4251, %v4845
        %v4864 = vadd.f32 %v4846, 1.0
        %v4865 = vadd.f32 %v4847, 1.0
        %v4866 = vadd.f32 %v4848, 1.0
        %v4867 = vadd.f32 %v4849, 1.0
        %v4868 = vadd.f32 %v4850, 1.0
        %v4869 = vadd.f32 %v4851, 1.0
        %v4870 = vadd.f32 %v4852, 1.0
        %v4871 = vadd.f32 %v4853, 1.0
        %v4872 = vadd.f32 %v4854, 1.0
        %v4873 = vadd.f32 %v4855, 1.0
        %v4874 = vadd.f32 %v4856, 1.0
        %v4875 = vadd.f32 %v4857, 1.0
        %v4876 = vadd.f32 %v4858, 1.0
        %v4877 = vadd.f32 %v4859, 1.0
        %v4878 = vadd.f32 %v4860, 1.0
        %v4879 = vadd.f32 %v4861, 1.0
        %v4880 = vadd.f32 %v4862, 1.0
        %v4881 = vadd.f32 %v4863, 1.0
        %v4882 = vmul.f32 %v4180, %v4864
        %v4883 = vmul.f32 %v4181, %v4865
        %v4884 = vmul.f32 %v4182, %v4866
        %v4885 = vmul.f32 %v4183, %v4867
        %v4886 = vmul.f32 %v4184, %v4868
        %v4887 = vmul.f32 %v4185, %v4869
        %v4888 = vmul.f32 %v4186, %v4870
        %v4889 = vmul.f32 %v4187, %v4871
        %v4890 = vmul.f32 %v4188, %v4872
        %v4891 = vmul.f32 %v4189, %v4873
        %v4892 = vmul.f32 %v4190, %v4874
        %v4893 = vmul.f32 %v4191, %v4875
        %v4894 = vmul.f32 %v4192, %v4876
        %v4895 = vmul.f32 %v4193, %v4877
        %v4896 = vmul.f32 %v4194, %v4878
        %v4897 = vmul.f32 %v4195, %v4879
        %v4898 = vmul.f32 %v4196, %v4880
        %v4899 = vmul.f32 %v4197, %v4881
        %v4900 = vpack.c.bf16 %v4884, %v4882
        %v4901 = vpack.c.bf16 %v4885, %v4883
        %v4902 = vpack.c.bf16 %v4888, %v4886
        %v4903 = vpack.c.bf16 %v4889, %v4887
        %v4904 = vpack.c.bf16 %v4892, %v4890
        %v4905 = vpack.c.bf16 %v4893, %v4891
        %v4906 = vpack.c.bf16 %v4896, %v4894
        %v4907 = vpack.c.bf16 %v4897, %v4895
        %v4908 = vpack.c.bf16 %v4898, %v4898
        %v4909 = vpack.c.bf16 %v4899, %v4899
        %v4910 = vld [vmem:[%s6] sm:$0xf]
        %v4911 = vld [vmem:[%s6 + $0x4] sm:$0xf]
        %v4912 = vld [vmem:[%s6 + $0x8] sm:$0xf]
        %v4913 = vld [vmem:[%s6 + $0xc] sm:$0xf]
        %v4914 = vld [vmem:[%s6 + $0x10] sm:$0xf]
        %v4915 = vld [vmem:[%s6 + $0x14] sm:$0xf]
        %v4916 = vld [vmem:[%s6 + $0x18] sm:$0xf]
        %v4917 = vld [vmem:[%s6 + $0x1c] sm:$0xf]
        %v4918 = vld [vmem:[%s6 + $0x20] sm:$0xf]
        %v4919 = vld [vmem:[%s6 + $0x24] sm:$0xf]
        %v4920 = vld [vmem:[%s6 + $0x28] sm:$0xf]
        %v4921 = vld [vmem:[%s6 + $0x2c] sm:$0xf]
        %v4922 = vld [vmem:[%s6 + $0x30] sm:$0xf]
        %v4923 = vld [vmem:[%s6 + $0x34] sm:$0xf]
        %v4924 = vld [vmem:[%s6 + $0x38] sm:$0xf]
        %v4925 = vld [vmem:[%s6 + $0x3c] sm:$0xf]
        %v4926 = vld [vmem:[%s6 + $0x40] sm:$0xf]
        %v4927 = vld [vmem:[%s6 + $0x44] sm:$0xf]
        %v4928 = vld [vmem:[%s6 + $0x48] sm:$0xf]
        %v4929 = vld [vmem:[%s6 + $0x4c] sm:$0xf]
        %v4930 = vld [vmem:[%s6 + $0x50] sm:$0xf]
        %v4931 = vld [vmem:[%s6 + $0x54] sm:$0xf]
        %v4932 = vld [vmem:[%s6 + $0x58] sm:$0xf]
        %v4933 = vld [vmem:[%s6 + $0x5c] sm:$0xf]
        %v4934 = vld [vmem:[%s6 + $0x60] sm:$0xf]
        %v4935 = vld [vmem:[%s6 + $0x64] sm:$0xf]
        %v4936 = vld [vmem:[%s6 + $0x68] sm:$0xf]
        %v4937 = vld [vmem:[%s6 + $0x6c] sm:$0xf]
        %v4938 = vld [vmem:[%s6 + $0x70] sm:$0xf]
        %v4939 = vld [vmem:[%s6 + $0x74] sm:$0xf]
        %v4940 = vld [vmem:[%s6 + $0x78] sm:$0xf]
        %v4941 = vld [vmem:[%s6 + $0x7c] sm:$0xf]
        %v4942 = vperm.slane %v372, 0
        %vm4943 = vsmask.f32 4352
        %v4945 = vshrl.u32 %v4900, 16
        %v4947 = vrot.slane %v4945, 3
        %v4948 = vshll.u32 %v4900, 16
        %v4950 = vrot.slane %v4948, 4
        %v4951 = vor.u32 %v4947, %v4950
        %v4953 = vshrl.u32 %v4902, 16
        %v4955 = vrot.slane %v4953, 3
        %v4956 = vshll.u32 %v4902, 16
        %v4958 = vrot.slane %v4956, 4
        %v4959 = vor.u32 %v4955, %v4958
        %v4960 = vsel %vm4943, %v4951, %v4959
        %v4962 = vshrl.u32 %v4901, 16
        %v4964 = vrot.slane %v4962, 3
        %v4965 = vshll.u32 %v4901, 16
        %v4967 = vrot.slane %v4965, 4
        %v4968 = vor.u32 %v4964, %v4967
        %v4970 = vshrl.u32 %v4903, 16
        %v4972 = vrot.slane %v4970, 3
        %v4973 = vshll.u32 %v4903, 16
        %v4975 = vrot.slane %v4973, 4
        %v4976 = vor.u32 %v4972, %v4975
        %v4977 = vsel %vm4943, %v4968, %v4976
        %v4979 = vshrl.u32 %v4904, 16
        %v4981 = vrot.slane %v4979, 3
        %v4982 = vshll.u32 %v4904, 16
        %v4984 = vrot.slane %v4982, 4
        %v4985 = vor.u32 %v4981, %v4984
        %v4986 = vsel %vm4943, %v4959, %v4985
        %v4988 = vshrl.u32 %v4905, 16
        %v4990 = vrot.slane %v4988, 3
        %v4991 = vshll.u32 %v4905, 16
        %v4993 = vrot.slane %v4991, 4
        %v4994 = vor.u32 %v4990, %v4993
        %v4995 = vsel %vm4943, %v4976, %v4994
        %v4997 = vshrl.u32 %v4906, 16
        %v4999 = vrot.slane %v4997, 3
        %v5000 = vshll.u32 %v4906, 16
        %v5002 = vrot.slane %v5000, 4
        %v5003 = vor.u32 %v4999, %v5002
        %v5004 = vsel %vm4943, %v4985, %v5003
        %v5006 = vshrl.u32 %v4907, 16
        %v5008 = vrot.slane %v5006, 3
        %v5009 = vshll.u32 %v4907, 16
        %v5011 = vrot.slane %v5009, 4
        %v5012 = vor.u32 %v5008, %v5011
        %v5013 = vsel %vm4943, %v4994, %v5012
        %v5015 = vshrl.u32 %v4908, 16
        %v5017 = vrot.slane %v5015, 3
        %v5018 = vshll.u32 %v4908, 16
        %v5020 = vrot.slane %v5018, 4
        %v5021 = vor.u32 %v5017, %v5020
        %v5022 = vsel %vm4943, %v5003, %v5021
        %v5024 = vshrl.u32 %v4909, 16
        %v5026 = vrot.slane %v5024, 3
        %v5027 = vshll.u32 %v4909, 16
        %v5029 = vrot.slane %v5027, 4
        %v5030 = vor.u32 %v5026, %v5029
        %v5031 = vsel %vm4943, %v5012, %v5030
        %v5072 = vunpack.c.l.b16 %v4910
        %v5073 = vunpack.c.l.b16 %v4911
        %v5074 = vunpack.c.l.b16 %v4912
        %v5075 = vunpack.c.l.b16 %v4913
        %v5076 = vunpack.c.l.b16 %v4914
        %v5077 = vunpack.c.l.b16 %v4915
        %v5078 = vunpack.c.l.b16 %v4916
        %v5079 = vunpack.c.l.b16 %v4917
        %v5080 = vunpack.c.l.b16 %v4918
        %v5081 = vunpack.c.l.b16 %v4919
        %v5082 = vunpack.c.l.b16 %v4920
        %v5083 = vunpack.c.l.b16 %v4921
        %v5084 = vunpack.c.l.b16 %v4922
        %v5085 = vunpack.c.l.b16 %v4923
        %v5086 = vunpack.c.l.b16 %v4924
        %v5087 = vunpack.c.l.b16 %v4925
        %v5088 = vunpack.c.l.b16 %v4926
        %v5089 = vunpack.c.l.b16 %v4927
        %v5090 = vunpack.c.l.b16 %v4928
        %v5091 = vunpack.c.l.b16 %v4929
        %v5092 = vunpack.c.l.b16 %v4930
        %v5093 = vunpack.c.l.b16 %v4931
        %v5094 = vunpack.c.l.b16 %v4932
        %v5095 = vunpack.c.l.b16 %v4933
        %v5096 = vunpack.c.l.b16 %v4934
        %v5097 = vunpack.c.l.b16 %v4935
        %v5098 = vunpack.c.l.b16 %v4936
        %v5099 = vunpack.c.l.b16 %v4937
        %v5100 = vunpack.c.l.b16 %v4938
        %v5101 = vunpack.c.l.b16 %v4939
        %v5102 = vunpack.c.l.b16 %v4940
        %v5103 = vunpack.c.l.b16 %v4941
        %v5104 = vpack.c.b16 %v5073, %v5072
        %v5105 = vpack.c.b16 %v5075, %v5074
        %v5106 = vpack.c.b16 %v5077, %v5076
        %v5107 = vpack.c.b16 %v5079, %v5078
        %v5108 = vpack.c.b16 %v5081, %v5080
        %v5109 = vpack.c.b16 %v5083, %v5082
        %v5110 = vpack.c.b16 %v5085, %v5084
        %v5111 = vpack.c.b16 %v5087, %v5086
        %v5112 = vpack.c.b16 %v5089, %v5088
        %v5113 = vpack.c.b16 %v5091, %v5090
        %v5114 = vpack.c.b16 %v5093, %v5092
        %v5115 = vpack.c.b16 %v5095, %v5094
        %v5116 = vpack.c.b16 %v5097, %v5096
        %v5117 = vpack.c.b16 %v5099, %v5098
        %v5118 = vpack.c.b16 %v5101, %v5100
        %v5119 = vpack.c.b16 %v5103, %v5102
        %5136 = vmatpush.bf16.msra.mxu0 %v5111
        %5137 = vmatpush.bf16.msra.mxu0 %v5110
        %5138 = vmatpush.bf16.msra.mxu0 %v5109
        %5139 = vmatpush.bf16.msra.mxu0 %v5108
        %5140 = vmatpush.bf16.msra.mxu0 %v5107
        %5141 = vmatpush.bf16.msra.mxu0 %v5106
        %5142 = vmatpush.bf16.msra.mxu0 %v5105
        %5143 = vmatpush.bf16.msra.mxu0 %v5104
        %5144 = vmatmul.bf16.gmra.mxu0 %v4960
        %v5145 = vpop.f32.mrf.mxu0
        %v5146 = vadd.f32 %v4942, %v5145
        %v5147 = vpop.f32.mrf.mxu0
        %v5148 = vadd.f32 %v4942, %v5147
        %5149 = vmatmul.bf16.gmra.mxu0 %v4986
        %v5150 = vpop.f32.mrf.mxu0
        %v5151 = vadd.f32 %v4942, %v5150
        %v5152 = vpop.f32.mrf.mxu0
        %v5153 = vadd.f32 %v4942, %v5152
        %5154 = vmatmul.bf16.gmra.mxu0 %v5004
        %v5155 = vpop.f32.mrf.mxu0
        %v5156 = vadd.f32 %v4942, %v5155
        %v5157 = vpop.f32.mrf.mxu0
        %v5158 = vadd.f32 %v4942, %v5157
        %5159 = vmatmul.bf16.gmra.mxu0 %v5022
        %v5160 = vpop.f32.mrf.mxu0
        %v5161 = vadd.f32 %v4942, %v5160
        %v5162 = vpop.f32.mrf.mxu0
        %v5163 = vadd.f32 %v4942, %v5162
        %5164 = vdwg.mxu0
        %5165 = vmatpush.bf16.msra.mxu0 %v5119
        %5166 = vmatpush.bf16.msra.mxu0 %v5118
        %5167 = vmatpush.bf16.msra.mxu0 %v5117
        %5168 = vmatpush.bf16.msra.mxu0 %v5116
        %5169 = vmatpush.bf16.msra.mxu0 %v5115
        %5170 = vmatpush.bf16.msra.mxu0 %v5114
        %5171 = vmatpush.bf16.msra.mxu0 %v5113
        %5172 = vmatpush.bf16.msra.mxu0 %v5112
        %5173 = vmatmul.bf16.gmra.mxu0 %v4977
        %v5174 = vpop.f32.mrf.mxu0
        %v5175 = vadd.f32 %v5146, %v5174
        %v5176 = vpop.f32.mrf.mxu0
        %v5177 = vadd.f32 %v5148, %v5176
        %5178 = vmatmul.bf16.gmra.mxu0 %v4995
        %v5179 = vpop.f32.mrf.mxu0
        %v5180 = vadd.f32 %v5151, %v5179
        %v5181 = vpop.f32.mrf.mxu0
        %v5182 = vadd.f32 %v5153, %v5181
        %5183 = vmatmul.bf16.gmra.mxu0 %v5013
        %v5184 = vpop.f32.mrf.mxu0
        %v5185 = vadd.f32 %v5156, %v5184
        %v5186 = vpop.f32.mrf.mxu0
        %v5187 = vadd.f32 %v5158, %v5186
        %5188 = vmatmul.bf16.gmra.mxu0 %v5031
        %v5189 = vpop.f32.mrf.mxu0
        %v5190 = vadd.f32 %v5161, %v5189
        %v5191 = vpop.f32.mrf.mxu0
        %v5192 = vadd.f32 %v5163, %v5191
        %5193 = vdwg.mxu0
        %v5194 = vadd.f32 %v2368, %v5175
        %v5195 = vadd.f32 %v2369, %v5177
        %v5196 = vadd.f32 %v2370, %v5180
        %v5197 = vadd.f32 %v2371, %v5182
        %v5198 = vadd.f32 %v2372, %v5185
        %v5199 = vadd.f32 %v2373, %v5187
        %v5200 = vadd.f32 %v2374, %v5190
        %v5201 = vadd.f32 %v2375, %v5192
        %5202 = vst.msk [vmem:[%s352] sm:$0xff] %vm376, %v5194
        %5203 = vst.msk [vmem:[%s352 + $0x8] sm:$0xff] %vm376, %v5195
        %5204 = vst.msk [vmem:[%s352 + $0x10] sm:$0xff] %vm376, %v5196
        %5205 = vst.msk [vmem:[%s352 + $0x18] sm:$0xff] %vm376, %v5197
        %5206 = vst.msk [vmem:[%s352 + $0x20] sm:$0xff] %vm376, %v5198
        %5207 = vst.msk [vmem:[%s352 + $0x28] sm:$0xff] %vm376, %v5199
        %5208 = vst.msk [vmem:[%s352 + $0x30] sm:$0xff] %vm376, %v5200
        %5209 = vst.msk [vmem:[%s352 + $0x38] sm:$0xff] %vm376, %v5201
        %s5210 = sand.u32 %s247, 1
        %s5211 = scalar_lea.sflag [#allocation4], %s5210
        %s5212 = sand.u32 %s247, 1
        %s5213 = smul.addr %s5212, 64
        %s5214 = scalar_lea.vmem [#allocation3], %s5213
        // Predicated region
        $region61: #{block_forward.1} parent=59 // pred_check
          %p5215 = pneg %p257
        $region62: #{block_forward.1} parent=59 // pred_check_branch
          %5217 = sbr.rel (%p5215) target = $region64
        $region63: #{block_forward.1} parent=59 // pred_region
          %5219 = vsyncadd %s5211, 0
          %s5220 = smul.addr %s24, 8
          %s5221 = smul.addr %s5220, 8
          %s5222 = scalar_lea.hbm %s10, %s5221
          %s5223 = sshll.u32 %s5214, 4
          %s5224 = int_to_ptr.vmem [resolvable:$true] %s5223
          %s5225 = sshll.u32 %s5222, 4
          %s5226 = int_to_ptr.hbm [resolvable:$true] %s5225
          %5231 = dma.vmem_to_hbm [thread:$0]  %s5224, 1024, %s5226, %s5211, 128, 128, 8
        $region64: #{block_forward.1} parent=59 // pred_fallthru
          _
      $region60: #{block_forward.1} parent=5 // pred_fallthru
        _
      %p5232 = scmp.le.s32.totalorder 2, %s19
      // Predicated region
      $region65: #{block_forward.1} parent=5 // pred_check
        %p5233 = pneg %p5232
      $region66: #{block_forward.1} parent=5 // pred_check_branch
        %5235 = sbr.rel (%p5233) target = $region68
      $region67: #{block_forward.1} parent=5 // pred_region
        %s5236 = ssub.s32 %s19, 2
        // Predicated region
        $region69: #{block_forward.1} parent=67 // pred_check
          %p5237 = pneg %p263
        $region70: #{block_forward.1} parent=67 // pred_check_branch
          %5239 = sbr.rel (%p5237) target = $region72
        $region71: #{block_forward.1} parent=67 // pred_region
          %s5240 = sand.u32 %s248, 1
          %s5241 = scalar_lea.sflag [#allocation4], %s5240
          %s5242 = sand.u32 %s248, 1
          %s5243 = smul.addr %s5242, 64
          %s5244 = scalar_lea.vmem [#allocation3], %s5243
          %5246 = dma.done %s5241, 1024
        $region72: #{block_forward.1} parent=67 // pred_fallthru
          _
      $region68: #{block_forward.1} parent=5 // pred_fallthru
        _
    $region6: #{block_forward.1} parent=1 // loop_footer
      %s23 = sadd.s32 1, %s19
    $region7: #{block_forward.1} parent=1 // loop_footer_branch
      %18 = sbr.rel target = $region3
    $region8: #{block_forward.1} parent=1 // loop_exit
      _
    %5247 = vsyncpa [#allocation4], 1
    %s5248 = scalar_lea.sflag [#allocation4], 1
    %5249 = vsyncpa %s5248, 1

</llo_original>
